<compile_context>
chip_gen: v5e
topology: v5e:2x2
jax: 0.10.0
libtpu: 0.0.40
codegen_flags: <defaults>
</compile_context>

<pallas_src>
import numpy as np
import jax
import jax.numpy as jnp
from jax import lax
from jax.experimental import pallas as pl
from jax.experimental.pallas import tpu as pltpu

# ----------------------------- tiny T5 config ------------------------------
VOCAB = 64
D_MODEL = 32
N_HEADS = 4
D_KV = 8                      # head dim
INNER = N_HEADS * D_KV        # 32
D_FF = 64
N_LAYERS = 2
REL_BUCKETS = 32
REL_MAX_DIST = 128
PAD_ID = 0                    # decoder_start_token_id == pad_token_id == 0
NEG = -1e9
EPS = 1e-6
_BF = jnp.bfloat16


def _round_up(x, m):
    return ((x + m - 1) // m) * m


# --------------------- operand slab packing (plain JAX) --------------------
def _pack_weight_slab(params):
    """All matmul weights -> one bf16 (rows, 128) slab + static row offsets."""
    entries = []
    for l in range(N_LAYERS):
        entries += [
            (f"enc_qkv{l}", params['enc_qkv'][l]),
            (f"enc_o{l}", params['enc_o'][l]),
            (f"enc_wi{l}", params['enc_wi'][l]),
            (f"enc_wo{l}", params['enc_wo'][l]),
            (f"dec_qkv{l}", params['dec_qkv'][l]),
            (f"dec_sa_o{l}", params['dec_sa_o'][l]),
            (f"dec_ca_q{l}", params['dec_ca_q'][l]),
            (f"dec_ca_o{l}", params['dec_ca_o'][l]),
            (f"dec_wi{l}", params['dec_wi'][l]),
            (f"dec_wo{l}", params['dec_wo'][l]),
        ]
    # cross-attn K|V projections of every layer fused -> one 128-lane matmul
    entries.append(("dec_ca_kv_all",
                    jnp.concatenate([params['dec_ca_kv'][l]
                                     for l in range(N_LAYERS)], axis=1)))
    entries.append(("lm_head", params['shared'].T))       # tied embeddings (D, V)

    offs, blocks, r = {}, [], 0
    for name, m in entries:
        h, w = m.shape
        ph = _round_up(h, 16)                 # bf16 sublane tile = 16 rows
        blocks.append(jnp.pad(m.astype(jnp.float32), ((0, ph - h), (0, 128 - w))))
        offs[name] = (r, h, w)
        r += ph
    slab = jnp.concatenate(blocks, axis=0).astype(_BF)
    return slab, offs


def _pack_ln_slab(params):
    """All RMSNorm weights -> one small f32 (5L+2, D_MODEL) slab + row indices."""
    L = N_LAYERS
    slab = jnp.concatenate([
        params['enc_ln1'], params['enc_ln2'], params['enc_final_ln'][None, :],
        params['dec_ln1'], params['dec_ln2'], params['dec_ln3'],
        params['dec_final_ln'][None, :],
    ], axis=0).astype(jnp.float32)
    idx = {'enc_ln1': 0, 'enc_ln2': L, 'enc_fln': 2 * L,
           'dec_ln1': 2 * L + 1, 'dec_ln2': 3 * L + 1, 'dec_ln3': 4 * L + 1,
           'dec_fln': 5 * L + 1}
    return slab, idx


# ------------------------- the single fused kernel -------------------------
def _make_t5_kernel(B, Ts, Tt, woffs, lnidx, enc_pad_rows):
    BTs, BTt = B * Ts, B * Tt

    def kernel(w_ref, ln_ref, x_ref, eb_ref, db_ref, cb_ref, lab_ref, loss_ref):
        bf = lambda a: a.astype(_BF)

        def W(name):                                   # bf16 slab slice (static)
            r, h, w = woffs[name]
            return w_ref[r:r + h, :w]

        ln = ln_ref[...]                               # (5L+2, D) f32

        def rms(x, idx):
            # T5LayerNorm: no mean subtraction, f32 rms, scaled by weight row.
            var = jnp.mean(x * x, axis=-1, keepdims=True)
            return x * lax.rsqrt(var + EPS) * ln[idx:idx + 1, :]

        def attention(q2d, k2d, v2d, wo, bias):
            # q2d: (B*Tq, INNER) f32; k2d/v2d: (B*Tk, INNER) f32; wo: bf16 (INNER, D)
            # bias: (H*B*Tq, B*Tk) f32 with block-diag batch mask folded in.
            R = q2d.shape[0]                           # B*Tq (batch-merged rows)
            qb, kb, vb = bf(q2d), bf(k2d), bf(v2d)
            s = jnp.concatenate(
                [lax.dot_general(qb[:, h * D_KV:(h + 1) * D_KV],
                                 kb[:, h * D_KV:(h + 1) * D_KV],
                                 (((1,), (1,)), ((), ())),
                                 preferred_element_type=jnp.float32)
                 for h in range(N_HEADS)], axis=0) + bias          # (H*R, B*Tk)
            m = jnp.max(s, axis=-1, keepdims=True)
            e = jnp.exp(s - m)
            p = bf(e * pl.reciprocal(jnp.sum(e, axis=-1, keepdims=True), approx=True))
            ctx = jnp.concatenate(
                [jnp.dot(p[h * R:(h + 1) * R, :],
                         vb[:, h * D_KV:(h + 1) * D_KV],
                         preferred_element_type=jnp.float32)
                 for h in range(N_HEADS)], axis=1)                 # (R, INNER)
            return jnp.dot(bf(ctx), wo, preferred_element_type=jnp.float32)

        enc_bias = eb_ref[...]
        dec_bias = db_ref[...]
        cross_bias = cb_ref[...]

        # ------------------------------ encoder ----------------------------
        x = x_ref[0:BTs, :]                                        # (B*Ts, D) f32
        for l in range(N_LAYERS):
            z = rms(x, lnidx['enc_ln1'] + l)
            qkv = jnp.dot(bf(z), W(f"enc_qkv{l}"), preferred_element_type=jnp.float32)
            x = x + attention(qkv[:, :INNER], qkv[:, INNER:2 * INNER],
                              qkv[:, 2 * INNER:3 * INNER], W(f"enc_o{l}"), enc_bias)
            z = rms(x, lnidx['enc_ln2'] + l)
            h1 = jnp.maximum(jnp.dot(bf(z), W(f"enc_wi{l}"),
                                     preferred_element_type=jnp.float32), 0.0)
            x = x + jnp.dot(bf(h1), W(f"enc_wo{l}"), preferred_element_type=jnp.float32)
        enc_out = rms(x, lnidx['enc_fln'])

        # cross-attn K/V for all layers: one 128-lane matmul (loop-invariant hoist)
        kv_all = jnp.dot(bf(enc_out), W("dec_ca_kv_all"),
                         preferred_element_type=jnp.float32)       # (B*Ts, 2*INNER*L)

        # ------------------------------ decoder ----------------------------
        y = x_ref[enc_pad_rows:enc_pad_rows + BTt, :]              # (B*Tt, D) f32
        for l in range(N_LAYERS):
            z = rms(y, lnidx['dec_ln1'] + l)
            qkv = jnp.dot(bf(z), W(f"dec_qkv{l}"), preferred_element_type=jnp.float32)
            y = y + attention(qkv[:, :INNER], qkv[:, INNER:2 * INNER],
                              qkv[:, 2 * INNER:3 * INNER], W(f"dec_sa_o{l}"), dec_bias)
            z = rms(y, lnidx['dec_ln2'] + l)
            q = jnp.dot(bf(z), W(f"dec_ca_q{l}"), preferred_element_type=jnp.float32)
            k2d = kv_all[:, 2 * INNER * l:2 * INNER * l + INNER]
            v2d = kv_all[:, 2 * INNER * l + INNER:2 * INNER * (l + 1)]
            y = y + attention(q, k2d, v2d, W(f"dec_ca_o{l}"), cross_bias)
            z = rms(y, lnidx['dec_ln3'] + l)
            h1 = jnp.maximum(jnp.dot(bf(z), W(f"dec_wi{l}"),
                                     preferred_element_type=jnp.float32), 0.0)
            y = y + jnp.dot(bf(h1), W(f"dec_wo{l}"), preferred_element_type=jnp.float32)
        dec_out = rms(y, lnidx['dec_fln'])

        # ------------------ tied LM head + cross-entropy -------------------
        logits = jnp.dot(bf(dec_out * (D_MODEL ** -0.5)), W("lm_head"),
                         preferred_element_type=jnp.float32)       # (B*Tt, V)
        labels = lab_ref[...]                                      # (B*Tt, 1) int32
        m = jnp.max(logits, axis=-1, keepdims=True)
        lse = jnp.log(jnp.sum(jnp.exp(logits - m), axis=-1, keepdims=True)) + m
        col = lax.broadcasted_iota(jnp.int32, logits.shape, 1)
        onehot = (col == labels).astype(jnp.float32)               # all-zero for -100
        tgt = jnp.sum(onehot * logits, axis=-1, keepdims=True)
        valid = (labels != -100).astype(jnp.float32)
        nll_sum = jnp.sum((lse - tgt) * valid, axis=0, keepdims=True)   # (1,1)
        cnt = jnp.sum(valid, axis=0, keepdims=True)                     # (1,1)
        loss_ref[...] = nll_sum / jnp.maximum(cnt, 1.0)

    return kernel


# ------------------------------ JAX glue -----------------------------------
def _rel_pos_bucket(rel_pos, bidirectional,
                    num_buckets=REL_BUCKETS, max_distance=REL_MAX_DIST):
    rel_pos = np.asarray(rel_pos, dtype=np.int64)
    ret = np.zeros_like(rel_pos)
    n = num_buckets
    if bidirectional:
        n //= 2
        ret += (rel_pos > 0).astype(np.int64) * n
        rel_pos = np.abs(rel_pos)
    else:
        rel_pos = -np.minimum(rel_pos, 0)
    max_exact = n // 2
    is_small = rel_pos < max_exact
    rp = np.maximum(rel_pos, 1).astype(np.float64)
    val_large = max_exact + (np.log(rp / max_exact) /
                             np.log(max_distance / max_exact) *
                             (n - max_exact)).astype(np.int64)
    val_large = np.minimum(val_large, n - 1)
    ret += np.where(is_small, rel_pos, val_large)
    return ret.astype(np.int32)


def _position_bias(rel_emb, q_len, k_len, bidirectional):
    ctx = np.arange(q_len)[:, None]
    mem = np.arange(k_len)[None, :]
    buckets = _rel_pos_bucket(mem - ctx, bidirectional)       # static numpy
    bias = jnp.take(rel_emb, jnp.asarray(buckets), axis=0)    # (q, k, H)
    return jnp.transpose(bias, (2, 0, 1))                     # (H, q, k)


def _block_diag_add(B, Tq, Tk):
    keep = np.kron(np.eye(B, dtype=np.float32), np.ones((Tq, Tk), np.float32))
    return ((1.0 - keep) * NEG).astype(np.float32)            # (B*Tq, B*Tk)


def t5_generation_loss(params, input_ids_gen, gen_labels, gen_attention_mask):
    """Mirrors T5_generation.forward: returns scalar cross-entropy loss."""
    B, Ts = input_ids_gen.shape
    Tt = gen_labels.shape[1]

    # shift_right(labels) -> decoder_input_ids (T5: -100 replaced by pad)
    dec_in = jnp.concatenate(
        [jnp.full((B, 1), PAD_ID, gen_labels.dtype), gen_labels[:, :-1]], axis=1)
    dec_in = jnp.where(dec_in == -100, PAD_ID, dec_in)

    shared = params['shared']
    x_enc = jnp.take(shared, input_ids_gen, axis=0).reshape(B * Ts, D_MODEL)
    x_dec = jnp.take(shared, dec_in, axis=0).reshape(B * Tt, D_MODEL)

    # pack encoder + decoder embeddings into one slab (decoder rows 8-aligned)
    enc_pad_rows = _round_up(B * Ts, 8)
    x_slab = jnp.concatenate(
        [jnp.pad(x_enc, ((0, enc_pad_rows - B * Ts), (0, 0))), x_dec],
        axis=0).astype(jnp.float32)

    # additive key-padding mask over flattened (b, key) columns
    key_mask = ((1.0 - gen_attention_mask.astype(jnp.float32)) * NEG
                ).reshape(1, 1, B * Ts)

    # batch-merged biases (H*B*Tq, B*Tk): relpos + padding + causal + block-diag mask
    enc_bias = (jnp.tile(_position_bias(params['enc_rel_bias'], Ts, Ts, True),
                         (1, B, B))
                + key_mask
                + jnp.asarray(_block_diag_add(B, Ts, Ts))[None]
                ).astype(jnp.float32).reshape(N_HEADS * B * Ts, B * Ts)
    causal = np.where(np.tril(np.ones((Tt, Tt), np.float32)) > 0, 0.0, NEG
                      ).astype(np.float32)
    dec_bias = (jnp.tile(_position_bias(params['dec_rel_bias'], Tt, Tt, False),
                         (1, B, B))
                + jnp.asarray(np.tile(causal, (B, B))
                              + _block_diag_add(B, Tt, Tt))[None]
                ).astype(jnp.float32).reshape(N_HEADS * B * Tt, B * Tt)
    cross_bias = jnp.broadcast_to(
        key_mask + jnp.asarray(_block_diag_add(B, Tt, Ts))[None],
        (N_HEADS, B * Tt, B * Ts)
    ).astype(jnp.float32).reshape(N_HEADS * B * Tt, B * Ts)

    labels2 = gen_labels.reshape(B * Tt, 1).astype(jnp.int32)

    w_slab, woffs = _pack_weight_slab(params)
    ln_slab, lnidx = _pack_ln_slab(params)

    kernel = _make_t5_kernel(B, Ts, Tt, woffs, lnidx, enc_pad_rows)
    operands = (w_slab, ln_slab, x_slab, enc_bias, dec_bias, cross_bias, labels2)
    loss = pl.pallas_call(
        kernel,
        out_shape=jax.ShapeDtypeStruct((1, 1), jnp.float32),
        in_specs=[pl.BlockSpec(memory_space=pltpu.MemorySpace.VMEM)
                  for _ in operands],
        out_specs=pl.BlockSpec(memory_space=pltpu.MemorySpace.VMEM),
    )(*operands)
    return loss[0, 0]


# --------------------------- parameter init --------------------------------
def init_params(key):
    keys = iter(jax.random.split(key, 64))

    def nrm(shape, scale=0.05):
        return jax.random.normal(next(keys), shape, jnp.float32) * scale

    L = N_LAYERS
    return {
        'shared': nrm((VOCAB, D_MODEL), 1.0),
        'enc_rel_bias': nrm((REL_BUCKETS, N_HEADS), 0.1),
        'dec_rel_bias': nrm((REL_BUCKETS, N_HEADS), 0.1),
        # encoder layers (q|k|v fused into one matrix per layer)
        'enc_qkv': nrm((L, D_MODEL, 3 * INNER)),
        'enc_o': nrm((L, INNER, D_MODEL)),
        'enc_ln1': jnp.ones((L, D_MODEL), jnp.float32),
        'enc_wi': nrm((L, D_MODEL, D_FF)),
        'enc_wo': nrm((L, D_FF, D_MODEL)),
        'enc_ln2': jnp.ones((L, D_MODEL), jnp.float32),
        # decoder layers
        'dec_qkv': nrm((L, D_MODEL, 3 * INNER)),
        'dec_sa_o': nrm((L, INNER, D_MODEL)),
        'dec_ln1': jnp.ones((L, D_MODEL), jnp.float32),
        'dec_ca_q': nrm((L, D_MODEL, INNER)),
        'dec_ca_kv': nrm((L, D_MODEL, 2 * INNER)),
        'dec_ca_o': nrm((L, INNER, D_MODEL)),
        'dec_ln2': jnp.ones((L, D_MODEL), jnp.float32),
        'dec_wi': nrm((L, D_MODEL, D_FF)),
        'dec_wo': nrm((L, D_FF, D_MODEL)),
        'dec_ln3': jnp.ones((L, D_MODEL), jnp.float32),
        'enc_final_ln': jnp.ones((D_MODEL,), jnp.float32),
        'dec_final_ln': jnp.ones((D_MODEL,), jnp.float32),
    }


# --------------------------------- main -------------------------------------
if __name__ == "__main__":
    key = jax.random.PRNGKey(0)
    kp, ki, kl = jax.random.split(key, 3)
    params = init_params(kp)

    B, Ts, Tt = 2, 8, 8
    input_ids_gen = jax.random.randint(ki, (B, Ts), 1, VOCAB, dtype=jnp.int32)
    gen_attention_mask = jnp.array([[1] * Ts, [1] * 6 + [0] * 2], dtype=jnp.int32)
    gen_labels = jax.random.randint(kl, (B, Tt), 1, VOCAB, dtype=jnp.int32)
    gen_labels = gen_labels.at[1, 6:].set(-100)   # ignore_index positions

    loss_fn = jax.jit(t5_generation_loss)
    loss = loss_fn(params, input_ids_gen, gen_labels, gen_attention_mask)
    jax.block_until_ready(loss)
    assert bool(jnp.isfinite(loss)), "loss is not finite"
    print("KERNEL_OK")
</pallas_src>

<mosaic_0001>
module attributes {stable_mosaic.version = 11 : i64} {
  func.func @kernel(%arg0: memref<832x128xbf16, #tpu.memory_space<vmem>>, %arg1: memref<12x32xf32, #tpu.memory_space<vmem>>, %arg2: memref<32x32xf32, #tpu.memory_space<vmem>>, %arg3: memref<64x16xf32, #tpu.memory_space<vmem>>, %arg4: memref<64x16xf32, #tpu.memory_space<vmem>>, %arg5: memref<64x16xf32, #tpu.memory_space<vmem>>, %arg6: memref<16x1xi32, #tpu.memory_space<vmem>>, %arg7: memref<1x1xf32, #tpu.memory_space<vmem>>) attributes {dimension_semantics = [], scalar_prefetch = 0 : i64, scratch_operands = 0 : i64, tpu.core_type = #tpu.core_type<tc>} {
    %c0 = arith.constant 0 : index
    %c0_0 = arith.constant 0 : index
    %0 = vector.load %arg1[%c0, %c0_0] : memref<12x32xf32, #tpu.memory_space<vmem>>, vector<12x32xf32>
    %c0_1 = arith.constant 0 : index
    %c0_2 = arith.constant 0 : index
    %1 = vector.load %arg3[%c0_1, %c0_2] : memref<64x16xf32, #tpu.memory_space<vmem>>, vector<64x16xf32>
    %c0_3 = arith.constant 0 : index
    %c0_4 = arith.constant 0 : index
    %2 = vector.load %arg4[%c0_3, %c0_4] : memref<64x16xf32, #tpu.memory_space<vmem>>, vector<64x16xf32>
    %c0_5 = arith.constant 0 : index
    %c0_6 = arith.constant 0 : index
    %3 = vector.load %arg5[%c0_5, %c0_6] : memref<64x16xf32, #tpu.memory_space<vmem>>, vector<64x16xf32>
    %c0_7 = arith.constant 0 : index
    %c0_8 = arith.constant 0 : index
    %4 = vector.load %arg2[%c0_7, %c0_8] : memref<32x32xf32, #tpu.memory_space<vmem>>, vector<16x32xf32>
    %5 = arith.mulf %4, %4 : vector<16x32xf32>
    %cst = arith.constant dense<0.000000e+00> : vector<16xf32>
    %6 = vector.multi_reduction <add>, %5, %cst [1] : vector<16x32xf32> to vector<16xf32>
    %7 = vector.shape_cast %6 : vector<16xf32> to vector<16x1xf32>
    %cst_9 = arith.constant 3.200000e+01 : f32
    %8 = vector.broadcast %cst_9 : f32 to vector<16x1xf32>
    %9 = arith.divf %7, %8 : vector<16x1xf32>
    %cst_10 = arith.constant 9.99999997E-7 : f32
    %10 = vector.broadcast %cst_10 : f32 to vector<16x1xf32>
    %11 = arith.addf %9, %10 : vector<16x1xf32>
    %12 = math.rsqrt %11 : vector<16x1xf32>
    %13 = vector.broadcast %12 : vector<16x1xf32> to vector<16x32xf32>
    %14 = arith.mulf %4, %13 : vector<16x32xf32>
    %15 = vector.extract_strided_slice %0 {offsets = [0, 0], sizes = [1, 32], strides = [1, 1]} : vector<12x32xf32> to vector<1x32xf32>
    %16 = vector.broadcast %15 : vector<1x32xf32> to vector<16x32xf32>
    %17 = arith.mulf %14, %16 : vector<16x32xf32>
    %18 = arith.truncf %17 : vector<16x32xf32> to vector<16x32xbf16>
    %c0_11 = arith.constant 0 : index
    %c0_12 = arith.constant 0 : index
    %19 = vector.load %arg0[%c0_11, %c0_12] : memref<832x128xbf16, #tpu.memory_space<vmem>>, vector<32x96xbf16>
    %cst_13 = arith.constant dense<0.000000e+00> : vector<16x96xf32>
    %20 = tpu.matmul %18, %19, %cst_13 {dimension_numbers = #tpu.dot_dimension_numbers<[1], [0], [0], [1], [0, 0, 1, 1], [], []>} : vector<16x32xbf16>, vector<32x96xbf16>, vector<16x96xf32> -> vector<16x96xf32>
    %21 = vector.extract_strided_slice %20 {offsets = [0, 0], sizes = [16, 32], strides = [1, 1]} : vector<16x96xf32> to vector<16x32xf32>
    %22 = vector.extract_strided_slice %20 {offsets = [0, 32], sizes = [16, 32], strides = [1, 1]} : vector<16x96xf32> to vector<16x32xf32>
    %23 = vector.extract_strided_slice %20 {offsets = [0, 64], sizes = [16, 32], strides = [1, 1]} : vector<16x96xf32> to vector<16x32xf32>
    %c32 = arith.constant 32 : index
    %c0_14 = arith.constant 0 : index
    %24 = vector.load %arg0[%c32, %c0_14] : memref<832x128xbf16, #tpu.memory_space<vmem>>, vector<32x32xbf16>
    %25 = arith.truncf %21 : vector<16x32xf32> to vector<16x32xbf16>
    %26 = arith.truncf %22 : vector<16x32xf32> to vector<16x32xbf16>
    %27 = arith.truncf %23 : vector<16x32xf32> to vector<16x32xbf16>
    %28 = vector.extract_strided_slice %25 {offsets = [0, 0], sizes = [16, 8], strides = [1, 1]} : vector<16x32xbf16> to vector<16x8xbf16>
    %29 = vector.extract_strided_slice %26 {offsets = [0, 0], sizes = [16, 8], strides = [1, 1]} : vector<16x32xbf16> to vector<16x8xbf16>
    %cst_15 = arith.constant dense<0.000000e+00> : vector<16x16xf32>
    %30 = tpu.matmul %28, %29, %cst_15 {dimension_numbers = #tpu.dot_dimension_numbers<[1], [1], [0], [0], [0, 0, 1, 0], [], []>} : vector<16x8xbf16>, vector<16x8xbf16>, vector<16x16xf32> -> vector<16x16xf32>
    %31 = vector.extract_strided_slice %25 {offsets = [0, 8], sizes = [16, 8], strides = [1, 1]} : vector<16x32xbf16> to vector<16x8xbf16>
    %32 = vector.extract_strided_slice %26 {offsets = [0, 8], sizes = [16, 8], strides = [1, 1]} : vector<16x32xbf16> to vector<16x8xbf16>
    %cst_16 = arith.constant dense<0.000000e+00> : vector<16x16xf32>
    %33 = tpu.matmul %31, %32, %cst_16 {dimension_numbers = #tpu.dot_dimension_numbers<[1], [1], [0], [0], [0, 0, 1, 0], [], []>} : vector<16x8xbf16>, vector<16x8xbf16>, vector<16x16xf32> -> vector<16x16xf32>
    %34 = vector.extract_strided_slice %25 {offsets = [0, 16], sizes = [16, 8], strides = [1, 1]} : vector<16x32xbf16> to vector<16x8xbf16>
    %35 = vector.extract_strided_slice %26 {offsets = [0, 16], sizes = [16, 8], strides = [1, 1]} : vector<16x32xbf16> to vector<16x8xbf16>
    %cst_17 = arith.constant dense<0.000000e+00> : vector<16x16xf32>
    %36 = tpu.matmul %34, %35, %cst_17 {dimension_numbers = #tpu.dot_dimension_numbers<[1], [1], [0], [0], [0, 0, 1, 0], [], []>} : vector<16x8xbf16>, vector<16x8xbf16>, vector<16x16xf32> -> vector<16x16xf32>
    %37 = vector.extract_strided_slice %25 {offsets = [0, 24], sizes = [16, 8], strides = [1, 1]} : vector<16x32xbf16> to vector<16x8xbf16>
    %38 = vector.extract_strided_slice %26 {offsets = [0, 24], sizes = [16, 8], strides = [1, 1]} : vector<16x32xbf16> to vector<16x8xbf16>
    %cst_18 = arith.constant dense<0.000000e+00> : vector<16x16xf32>
    %39 = tpu.matmul %37, %38, %cst_18 {dimension_numbers = #tpu.dot_dimension_numbers<[1], [1], [0], [0], [0, 0, 1, 0], [], []>} : vector<16x8xbf16>, vector<16x8xbf16>, vector<16x16xf32> -> vector<16x16xf32>
    %40 = tpu.concatenate %30, %33, %36, %39 in 0 : vector<16x16xf32>, vector<16x16xf32>, vector<16x16xf32>, vector<16x16xf32> -> vector<64x16xf32>
    %41 = arith.addf %40, %1 : vector<64x16xf32>
    %cst_19 = arith.constant dense<0xFF800000> : vector<64xf32>
    %42 = vector.multi_reduction <maximumf>, %41, %cst_19 [1] : vector<64x16xf32> to vector<64xf32>
    %43 = vector.shape_cast %42 : vector<64xf32> to vector<64x1xf32>
    %44 = vector.broadcast %43 : vector<64x1xf32> to vector<64x16xf32>
    %45 = arith.subf %41, %44 : vector<64x16xf32>
    %46 = math.exp %45 : vector<64x16xf32>
    %cst_20 = arith.constant dense<0.000000e+00> : vector<64xf32>
    %47 = vector.multi_reduction <add>, %46, %cst_20 [1] : vector<64x16xf32> to vector<64xf32>
    %48 = vector.shape_cast %47 : vector<64xf32> to vector<64x1xf32>
    %49 = tpu.reciprocal %48 {approx = true} : vector<64x1xf32> -> vector<64x1xf32>
    %50 = vector.broadcast %49 : vector<64x1xf32> to vector<64x16xf32>
    %51 = arith.mulf %46, %50 : vector<64x16xf32>
    %52 = arith.truncf %51 : vector<64x16xf32> to vector<64x16xbf16>
    %53 = vector.extract_strided_slice %52 {offsets = [0, 0], sizes = [16, 16], strides = [1, 1]} : vector<64x16xbf16> to vector<16x16xbf16>
    %54 = vector.extract_strided_slice %27 {offsets = [0, 0], sizes = [16, 8], strides = [1, 1]} : vector<16x32xbf16> to vector<16x8xbf16>
    %cst_21 = arith.constant dense<0.000000e+00> : vector<16x8xf32>
    %55 = tpu.matmul %53, %54, %cst_21 {dimension_numbers = #tpu.dot_dimension_numbers<[1], [0], [0], [1], [0, 0, 1, 1], [], []>} : vector<16x16xbf16>, vector<16x8xbf16>, vector<16x8xf32> -> vector<16x8xf32>
    %56 = vector.extract_strided_slice %52 {offsets = [16, 0], sizes = [16, 16], strides = [1, 1]} : vector<64x16xbf16> to vector<16x16xbf16>
    %57 = vector.extract_strided_slice %27 {offsets = [0, 8], sizes = [16, 8], strides = [1, 1]} : vector<16x32xbf16> to vector<16x8xbf16>
    %cst_22 = arith.constant dense<0.000000e+00> : vector<16x8xf32>
    %58 = tpu.matmul %56, %57, %cst_22 {dimension_numbers = #tpu.dot_dimension_numbers<[1], [0], [0], [1], [0, 0, 1, 1], [], []>} : vector<16x16xbf16>, vector<16x8xbf16>, vector<16x8xf32> -> vector<16x8xf32>
    %59 = vector.extract_strided_slice %52 {offsets = [32, 0], sizes = [16, 16], strides = [1, 1]} : vector<64x16xbf16> to vector<16x16xbf16>
    %60 = vector.extract_strided_slice %27 {offsets = [0, 16], sizes = [16, 8], strides = [1, 1]} : vector<16x32xbf16> to vector<16x8xbf16>
    %cst_23 = arith.constant dense<0.000000e+00> : vector<16x8xf32>
    %61 = tpu.matmul %59, %60, %cst_23 {dimension_numbers = #tpu.dot_dimension_numbers<[1], [0], [0], [1], [0, 0, 1, 1], [], []>} : vector<16x16xbf16>, vector<16x8xbf16>, vector<16x8xf32> -> vector<16x8xf32>
    %62 = vector.extract_strided_slice %52 {offsets = [48, 0], sizes = [16, 16], strides = [1, 1]} : vector<64x16xbf16> to vector<16x16xbf16>
    %63 = vector.extract_strided_slice %27 {offsets = [0, 24], sizes = [16, 8], strides = [1, 1]} : vector<16x32xbf16> to vector<16x8xbf16>
    %cst_24 = arith.constant dense<0.000000e+00> : vector<16x8xf32>
    %64 = tpu.matmul %62, %63, %cst_24 {dimension_numbers = #tpu.dot_dimension_numbers<[1], [0], [0], [1], [0, 0, 1, 1], [], []>} : vector<16x16xbf16>, vector<16x8xbf16>, vector<16x8xf32> -> vector<16x8xf32>
    %65 = tpu.concatenate %55, %58, %61, %64 in 1 : vector<16x8xf32>, vector<16x8xf32>, vector<16x8xf32>, vector<16x8xf32> -> vector<16x32xf32>
    %66 = arith.truncf %65 : vector<16x32xf32> to vector<16x32xbf16>
    %cst_25 = arith.constant dense<0.000000e+00> : vector<16x32xf32>
    %67 = tpu.matmul %66, %24, %cst_25 {dimension_numbers = #tpu.dot_dimension_numbers<[1], [0], [0], [1], [0, 0, 1, 1], [], []>} : vector<16x32xbf16>, vector<32x32xbf16>, vector<16x32xf32> -> vector<16x32xf32>
    %68 = arith.addf %4, %67 : vector<16x32xf32>
    %69 = arith.mulf %68, %68 : vector<16x32xf32>
    %cst_26 = arith.constant dense<0.000000e+00> : vector<16xf32>
    %70 = vector.multi_reduction <add>, %69, %cst_26 [1] : vector<16x32xf32> to vector<16xf32>
    %71 = vector.shape_cast %70 : vector<16xf32> to vector<16x1xf32>
    %cst_27 = arith.constant 3.200000e+01 : f32
    %72 = vector.broadcast %cst_27 : f32 to vector<16x1xf32>
    %73 = arith.divf %71, %72 : vector<16x1xf32>
    %cst_28 = arith.constant 9.99999997E-7 : f32
    %74 = vector.broadcast %cst_28 : f32 to vector<16x1xf32>
    %75 = arith.addf %73, %74 : vector<16x1xf32>
    %76 = math.rsqrt %75 : vector<16x1xf32>
    %77 = vector.broadcast %76 : vector<16x1xf32> to vector<16x32xf32>
    %78 = arith.mulf %68, %77 : vector<16x32xf32>
    %79 = vector.extract_strided_slice %0 {offsets = [2, 0], sizes = [1, 32], strides = [1, 1]} : vector<12x32xf32> to vector<1x32xf32>
    %80 = vector.broadcast %79 : vector<1x32xf32> to vector<16x32xf32>
    %81 = arith.mulf %78, %80 : vector<16x32xf32>
    %82 = arith.truncf %81 : vector<16x32xf32> to vector<16x32xbf16>
    %c64 = arith.constant 64 : index
    %c0_29 = arith.constant 0 : index
    %83 = vector.load %arg0[%c64, %c0_29] : memref<832x128xbf16, #tpu.memory_space<vmem>>, vector<32x64xbf16>
    %cst_30 = arith.constant dense<0.000000e+00> : vector<16x64xf32>
    %84 = tpu.matmul %82, %83, %cst_30 {dimension_numbers = #tpu.dot_dimension_numbers<[1], [0], [0], [1], [0, 0, 1, 1], [], []>} : vector<16x32xbf16>, vector<32x64xbf16>, vector<16x64xf32> -> vector<16x64xf32>
    %cst_31 = arith.constant 0.000000e+00 : f32
    %85 = vector.broadcast %cst_31 : f32 to vector<16x64xf32>
    %86 = arith.maximumf %84, %85 : vector<16x64xf32>
    %87 = arith.truncf %86 : vector<16x64xf32> to vector<16x64xbf16>
    %c96 = arith.constant 96 : index
    %c0_32 = arith.constant 0 : index
    %88 = vector.load %arg0[%c96, %c0_32] : memref<832x128xbf16, #tpu.memory_space<vmem>>, vector<64x32xbf16>
    %cst_33 = arith.constant dense<0.000000e+00> : vector<16x32xf32>
    %89 = tpu.matmul %87, %88, %cst_33 {dimension_numbers = #tpu.dot_dimension_numbers<[1], [0], [0], [1], [0, 0, 1, 1], [], []>} : vector<16x64xbf16>, vector<64x32xbf16>, vector<16x32xf32> -> vector<16x32xf32>
    %90 = arith.addf %68, %89 : vector<16x32xf32>
    %91 = arith.mulf %90, %90 : vector<16x32xf32>
    %cst_34 = arith.constant dense<0.000000e+00> : vector<16xf32>
    %92 = vector.multi_reduction <add>, %91, %cst_34 [1] : vector<16x32xf32> to vector<16xf32>
    %93 = vector.shape_cast %92 : vector<16xf32> to vector<16x1xf32>
    %cst_35 = arith.constant 3.200000e+01 : f32
    %94 = vector.broadcast %cst_35 : f32 to vector<16x1xf32>
    %95 = arith.divf %93, %94 : vector<16x1xf32>
    %cst_36 = arith.constant 9.99999997E-7 : f32
    %96 = vector.broadcast %cst_36 : f32 to vector<16x1xf32>
    %97 = arith.addf %95, %96 : vector<16x1xf32>
    %98 = math.rsqrt %97 : vector<16x1xf32>
    %99 = vector.broadcast %98 : vector<16x1xf32> to vector<16x32xf32>
    %100 = arith.mulf %90, %99 : vector<16x32xf32>
    %101 = vector.extract_strided_slice %0 {offsets = [1, 0], sizes = [1, 32], strides = [1, 1]} : vector<12x32xf32> to vector<1x32xf32>
    %102 = vector.broadcast %101 : vector<1x32xf32> to vector<16x32xf32>
    %103 = arith.mulf %100, %102 : vector<16x32xf32>
    %104 = arith.truncf %103 : vector<16x32xf32> to vector<16x32xbf16>
    %c384 = arith.constant 384 : index
    %c0_37 = arith.constant 0 : index
    %105 = vector.load %arg0[%c384, %c0_37] : memref<832x128xbf16, #tpu.memory_space<vmem>>, vector<32x96xbf16>
    %cst_38 = arith.constant dense<0.000000e+00> : vector<16x96xf32>
    %106 = tpu.matmul %104, %105, %cst_38 {dimension_numbers = #tpu.dot_dimension_numbers<[1], [0], [0], [1], [0, 0, 1, 1], [], []>} : vector<16x32xbf16>, vector<32x96xbf16>, vector<16x96xf32> -> vector<16x96xf32>
    %107 = vector.extract_strided_slice %106 {offsets = [0, 0], sizes = [16, 32], strides = [1, 1]} : vector<16x96xf32> to vector<16x32xf32>
    %108 = vector.extract_strided_slice %106 {offsets = [0, 32], sizes = [16, 32], strides = [1, 1]} : vector<16x96xf32> to vector<16x32xf32>
    %109 = vector.extract_strided_slice %106 {offsets = [0, 64], sizes = [16, 32], strides = [1, 1]} : vector<16x96xf32> to vector<16x32xf32>
    %c416 = arith.constant 416 : index
    %c0_39 = arith.constant 0 : index
    %110 = vector.load %arg0[%c416, %c0_39] : memref<832x128xbf16, #tpu.memory_space<vmem>>, vector<32x32xbf16>
    %111 = arith.truncf %107 : vector<16x32xf32> to vector<16x32xbf16>
    %112 = arith.truncf %108 : vector<16x32xf32> to vector<16x32xbf16>
    %113 = arith.truncf %109 : vector<16x32xf32> to vector<16x32xbf16>
    %114 = vector.extract_strided_slice %111 {offsets = [0, 0], sizes = [16, 8], strides = [1, 1]} : vector<16x32xbf16> to vector<16x8xbf16>
    %115 = vector.extract_strided_slice %112 {offsets = [0, 0], sizes = [16, 8], strides = [1, 1]} : vector<16x32xbf16> to vector<16x8xbf16>
    %cst_40 = arith.constant dense<0.000000e+00> : vector<16x16xf32>
    %116 = tpu.matmul %114, %115, %cst_40 {dimension_numbers = #tpu.dot_dimension_numbers<[1], [1], [0], [0], [0, 0, 1, 0], [], []>} : vector<16x8xbf16>, vector<16x8xbf16>, vector<16x16xf32> -> vector<16x16xf32>
    %117 = vector.extract_strided_slice %111 {offsets = [0, 8], sizes = [16, 8], strides = [1, 1]} : vector<16x32xbf16> to vector<16x8xbf16>
    %118 = vector.extract_strided_slice %112 {offsets = [0, 8], sizes = [16, 8], strides = [1, 1]} : vector<16x32xbf16> to vector<16x8xbf16>
    %cst_41 = arith.constant dense<0.000000e+00> : vector<16x16xf32>
    %119 = tpu.matmul %117, %118, %cst_41 {dimension_numbers = #tpu.dot_dimension_numbers<[1], [1], [0], [0], [0, 0, 1, 0], [], []>} : vector<16x8xbf16>, vector<16x8xbf16>, vector<16x16xf32> -> vector<16x16xf32>
    %120 = vector.extract_strided_slice %111 {offsets = [0, 16], sizes = [16, 8], strides = [1, 1]} : vector<16x32xbf16> to vector<16x8xbf16>
    %121 = vector.extract_strided_slice %112 {offsets = [0, 16], sizes = [16, 8], strides = [1, 1]} : vector<16x32xbf16> to vector<16x8xbf16>
    %cst_42 = arith.constant dense<0.000000e+00> : vector<16x16xf32>
    %122 = tpu.matmul %120, %121, %cst_42 {dimension_numbers = #tpu.dot_dimension_numbers<[1], [1], [0], [0], [0, 0, 1, 0], [], []>} : vector<16x8xbf16>, vector<16x8xbf16>, vector<16x16xf32> -> vector<16x16xf32>
    %123 = vector.extract_strided_slice %111 {offsets = [0, 24], sizes = [16, 8], strides = [1, 1]} : vector<16x32xbf16> to vector<16x8xbf16>
    %124 = vector.extract_strided_slice %112 {offsets = [0, 24], sizes = [16, 8], strides = [1, 1]} : vector<16x32xbf16> to vector<16x8xbf16>
    %cst_43 = arith.constant dense<0.000000e+00> : vector<16x16xf32>
    %125 = tpu.matmul %123, %124, %cst_43 {dimension_numbers = #tpu.dot_dimension_numbers<[1], [1], [0], [0], [0, 0, 1, 0], [], []>} : vector<16x8xbf16>, vector<16x8xbf16>, vector<16x16xf32> -> vector<16x16xf32>
    %126 = tpu.concatenate %116, %119, %122, %125 in 0 : vector<16x16xf32>, vector<16x16xf32>, vector<16x16xf32>, vector<16x16xf32> -> vector<64x16xf32>
    %127 = arith.addf %126, %1 : vector<64x16xf32>
    %cst_44 = arith.constant dense<0xFF800000> : vector<64xf32>
    %128 = vector.multi_reduction <maximumf>, %127, %cst_44 [1] : vector<64x16xf32> to vector<64xf32>
    %129 = vector.shape_cast %128 : vector<64xf32> to vector<64x1xf32>
    %130 = vector.broadcast %129 : vector<64x1xf32> to vector<64x16xf32>
    %131 = arith.subf %127, %130 : vector<64x16xf32>
    %132 = math.exp %131 : vector<64x16xf32>
    %cst_45 = arith.constant dense<0.000000e+00> : vector<64xf32>
    %133 = vector.multi_reduction <add>, %132, %cst_45 [1] : vector<64x16xf32> to vector<64xf32>
    %134 = vector.shape_cast %133 : vector<64xf32> to vector<64x1xf32>
    %135 = tpu.reciprocal %134 {approx = true} : vector<64x1xf32> -> vector<64x1xf32>
    %136 = vector.broadcast %135 : vector<64x1xf32> to vector<64x16xf32>
    %137 = arith.mulf %132, %136 : vector<64x16xf32>
    %138 = arith.truncf %137 : vector<64x16xf32> to vector<64x16xbf16>
    %139 = vector.extract_strided_slice %138 {offsets = [0, 0], sizes = [16, 16], strides = [1, 1]} : vector<64x16xbf16> to vector<16x16xbf16>
    %140 = vector.extract_strided_slice %113 {offsets = [0, 0], sizes = [16, 8], strides = [1, 1]} : vector<16x32xbf16> to vector<16x8xbf16>
    %cst_46 = arith.constant dense<0.000000e+00> : vector<16x8xf32>
    %141 = tpu.matmul %139, %140, %cst_46 {dimension_numbers = #tpu.dot_dimension_numbers<[1], [0], [0], [1], [0, 0, 1, 1], [], []>} : vector<16x16xbf16>, vector<16x8xbf16>, vector<16x8xf32> -> vector<16x8xf32>
    %142 = vector.extract_strided_slice %138 {offsets = [16, 0], sizes = [16, 16], strides = [1, 1]} : vector<64x16xbf16> to vector<16x16xbf16>
    %143 = vector.extract_strided_slice %113 {offsets = [0, 8], sizes = [16, 8], strides = [1, 1]} : vector<16x32xbf16> to vector<16x8xbf16>
    %cst_47 = arith.constant dense<0.000000e+00> : vector<16x8xf32>
    %144 = tpu.matmul %142, %143, %cst_47 {dimension_numbers = #tpu.dot_dimension_numbers<[1], [0], [0], [1], [0, 0, 1, 1], [], []>} : vector<16x16xbf16>, vector<16x8xbf16>, vector<16x8xf32> -> vector<16x8xf32>
    %145 = vector.extract_strided_slice %138 {offsets = [32, 0], sizes = [16, 16], strides = [1, 1]} : vector<64x16xbf16> to vector<16x16xbf16>
    %146 = vector.extract_strided_slice %113 {offsets = [0, 16], sizes = [16, 8], strides = [1, 1]} : vector<16x32xbf16> to vector<16x8xbf16>
    %cst_48 = arith.constant dense<0.000000e+00> : vector<16x8xf32>
    %147 = tpu.matmul %145, %146, %cst_48 {dimension_numbers = #tpu.dot_dimension_numbers<[1], [0], [0], [1], [0, 0, 1, 1], [], []>} : vector<16x16xbf16>, vector<16x8xbf16>, vector<16x8xf32> -> vector<16x8xf32>
    %148 = vector.extract_strided_slice %138 {offsets = [48, 0], sizes = [16, 16], strides = [1, 1]} : vector<64x16xbf16> to vector<16x16xbf16>
    %149 = vector.extract_strided_slice %113 {offsets = [0, 24], sizes = [16, 8], strides = [1, 1]} : vector<16x32xbf16> to vector<16x8xbf16>
    %cst_49 = arith.constant dense<0.000000e+00> : vector<16x8xf32>
    %150 = tpu.matmul %148, %149, %cst_49 {dimension_numbers = #tpu.dot_dimension_numbers<[1], [0], [0], [1], [0, 0, 1, 1], [], []>} : vector<16x16xbf16>, vector<16x8xbf16>, vector<16x8xf32> -> vector<16x8xf32>
    %151 = tpu.concatenate %141, %144, %147, %150 in 1 : vector<16x8xf32>, vector<16x8xf32>, vector<16x8xf32>, vector<16x8xf32> -> vector<16x32xf32>
    %152 = arith.truncf %151 : vector<16x32xf32> to vector<16x32xbf16>
    %cst_50 = arith.constant dense<0.000000e+00> : vector<16x32xf32>
    %153 = tpu.matmul %152, %110, %cst_50 {dimension_numbers = #tpu.dot_dimension_numbers<[1], [0], [0], [1], [0, 0, 1, 1], [], []>} : vector<16x32xbf16>, vector<32x32xbf16>, vector<16x32xf32> -> vector<16x32xf32>
    %154 = arith.addf %90, %153 : vector<16x32xf32>
    %155 = arith.mulf %154, %154 : vector<16x32xf32>
    %cst_51 = arith.constant dense<0.000000e+00> : vector<16xf32>
    %156 = vector.multi_reduction <add>, %155, %cst_51 [1] : vector<16x32xf32> to vector<16xf32>
    %157 = vector.shape_cast %156 : vector<16xf32> to vector<16x1xf32>
    %cst_52 = arith.constant 3.200000e+01 : f32
    %158 = vector.broadcast %cst_52 : f32 to vector<16x1xf32>
    %159 = arith.divf %157, %158 : vector<16x1xf32>
    %cst_53 = arith.constant 9.99999997E-7 : f32
    %160 = vector.broadcast %cst_53 : f32 to vector<16x1xf32>
    %161 = arith.addf %159, %160 : vector<16x1xf32>
    %162 = math.rsqrt %161 : vector<16x1xf32>
    %163 = vector.broadcast %162 : vector<16x1xf32> to vector<16x32xf32>
    %164 = arith.mulf %154, %163 : vector<16x32xf32>
    %165 = vector.extract_strided_slice %0 {offsets = [3, 0], sizes = [1, 32], strides = [1, 1]} : vector<12x32xf32> to vector<1x32xf32>
    %166 = vector.broadcast %165 : vector<1x32xf32> to vector<16x32xf32>
    %167 = arith.mulf %164, %166 : vector<16x32xf32>
    %168 = arith.truncf %167 : vector<16x32xf32> to vector<16x32xbf16>
    %c448 = arith.constant 448 : index
    %c0_54 = arith.constant 0 : index
    %169 = vector.load %arg0[%c448, %c0_54] : memref<832x128xbf16, #tpu.memory_space<vmem>>, vector<32x64xbf16>
    %cst_55 = arith.constant dense<0.000000e+00> : vector<16x64xf32>
    %170 = tpu.matmul %168, %169, %cst_55 {dimension_numbers = #tpu.dot_dimension_numbers<[1], [0], [0], [1], [0, 0, 1, 1], [], []>} : vector<16x32xbf16>, vector<32x64xbf16>, vector<16x64xf32> -> vector<16x64xf32>
    %cst_56 = arith.constant 0.000000e+00 : f32
    %171 = vector.broadcast %cst_56 : f32 to vector<16x64xf32>
    %172 = arith.maximumf %170, %171 : vector<16x64xf32>
    %173 = arith.truncf %172 : vector<16x64xf32> to vector<16x64xbf16>
    %c480 = arith.constant 480 : index
    %c0_57 = arith.constant 0 : index
    %174 = vector.load %arg0[%c480, %c0_57] : memref<832x128xbf16, #tpu.memory_space<vmem>>, vector<64x32xbf16>
    %cst_58 = arith.constant dense<0.000000e+00> : vector<16x32xf32>
    %175 = tpu.matmul %173, %174, %cst_58 {dimension_numbers = #tpu.dot_dimension_numbers<[1], [0], [0], [1], [0, 0, 1, 1], [], []>} : vector<16x64xbf16>, vector<64x32xbf16>, vector<16x32xf32> -> vector<16x32xf32>
    %176 = arith.addf %154, %175 : vector<16x32xf32>
    %177 = arith.mulf %176, %176 : vector<16x32xf32>
    %cst_59 = arith.constant dense<0.000000e+00> : vector<16xf32>
    %178 = vector.multi_reduction <add>, %177, %cst_59 [1] : vector<16x32xf32> to vector<16xf32>
    %179 = vector.shape_cast %178 : vector<16xf32> to vector<16x1xf32>
    %cst_60 = arith.constant 3.200000e+01 : f32
    %180 = vector.broadcast %cst_60 : f32 to vector<16x1xf32>
    %181 = arith.divf %179, %180 : vector<16x1xf32>
    %cst_61 = arith.constant 9.99999997E-7 : f32
    %182 = vector.broadcast %cst_61 : f32 to vector<16x1xf32>
    %183 = arith.addf %181, %182 : vector<16x1xf32>
    %184 = math.rsqrt %183 : vector<16x1xf32>
    %185 = vector.broadcast %184 : vector<16x1xf32> to vector<16x32xf32>
    %186 = arith.mulf %176, %185 : vector<16x32xf32>
    %187 = vector.extract_strided_slice %0 {offsets = [4, 0], sizes = [1, 32], strides = [1, 1]} : vector<12x32xf32> to vector<1x32xf32>
    %188 = vector.broadcast %187 : vector<1x32xf32> to vector<16x32xf32>
    %189 = arith.mulf %186, %188 : vector<16x32xf32>
    %190 = arith.truncf %189 : vector<16x32xf32> to vector<16x32xbf16>
    %c768 = arith.constant 768 : index
    %c0_62 = arith.constant 0 : index
    %191 = vector.load %arg0[%c768, %c0_62] : memref<832x128xbf16, #tpu.memory_space<vmem>>, vector<32x128xbf16>
    %cst_63 = arith.constant dense<0.000000e+00> : vector<16x128xf32>
    %192 = tpu.matmul %190, %191, %cst_63 {dimension_numbers = #tpu.dot_dimension_numbers<[1], [0], [0], [1], [0, 0, 1, 1], [], []>} : vector<16x32xbf16>, vector<32x128xbf16>, vector<16x128xf32> -> vector<16x128xf32>
    %c16 = arith.constant 16 : index
    %c0_64 = arith.constant 0 : index
    %193 = vector.load %arg2[%c16, %c0_64] : memref<32x32xf32, #tpu.memory_space<vmem>>, vector<16x32xf32>
    %194 = arith.mulf %193, %193 : vector<16x32xf32>
    %cst_65 = arith.constant dense<0.000000e+00> : vector<16xf32>
    %195 = vector.multi_reduction <add>, %194, %cst_65 [1] : vector<16x32xf32> to vector<16xf32>
    %196 = vector.shape_cast %195 : vector<16xf32> to vector<16x1xf32>
    %cst_66 = arith.constant 3.200000e+01 : f32
    %197 = vector.broadcast %cst_66 : f32 to vector<16x1xf32>
    %198 = arith.divf %196, %197 : vector<16x1xf32>
    %cst_67 = arith.constant 9.99999997E-7 : f32
    %199 = vector.broadcast %cst_67 : f32 to vector<16x1xf32>
    %200 = arith.addf %198, %199 : vector<16x1xf32>
    %201 = math.rsqrt %200 : vector<16x1xf32>
    %202 = vector.broadcast %201 : vector<16x1xf32> to vector<16x32xf32>
    %203 = arith.mulf %193, %202 : vector<16x32xf32>
    %204 = vector.extract_strided_slice %0 {offsets = [5, 0], sizes = [1, 32], strides = [1, 1]} : vector<12x32xf32> to vector<1x32xf32>
    %205 = vector.broadcast %204 : vector<1x32xf32> to vector<16x32xf32>
    %206 = arith.mulf %203, %205 : vector<16x32xf32>
    %207 = arith.truncf %206 : vector<16x32xf32> to vector<16x32xbf16>
    %c160 = arith.constant 160 : index
    %c0_68 = arith.constant 0 : index
    %208 = vector.load %arg0[%c160, %c0_68] : memref<832x128xbf16, #tpu.memory_space<vmem>>, vector<32x96xbf16>
    %cst_69 = arith.constant dense<0.000000e+00> : vector<16x96xf32>
    %209 = tpu.matmul %207, %208, %cst_69 {dimension_numbers = #tpu.dot_dimension_numbers<[1], [0], [0], [1], [0, 0, 1, 1], [], []>} : vector<16x32xbf16>, vector<32x96xbf16>, vector<16x96xf32> -> vector<16x96xf32>
    %210 = vector.extract_strided_slice %209 {offsets = [0, 0], sizes = [16, 32], strides = [1, 1]} : vector<16x96xf32> to vector<16x32xf32>
    %211 = vector.extract_strided_slice %209 {offsets = [0, 32], sizes = [16, 32], strides = [1, 1]} : vector<16x96xf32> to vector<16x32xf32>
    %212 = vector.extract_strided_slice %209 {offsets = [0, 64], sizes = [16, 32], strides = [1, 1]} : vector<16x96xf32> to vector<16x32xf32>
    %c192 = arith.constant 192 : index
    %c0_70 = arith.constant 0 : index
    %213 = vector.load %arg0[%c192, %c0_70] : memref<832x128xbf16, #tpu.memory_space<vmem>>, vector<32x32xbf16>
    %214 = arith.truncf %210 : vector<16x32xf32> to vector<16x32xbf16>
    %215 = arith.truncf %211 : vector<16x32xf32> to vector<16x32xbf16>
    %216 = arith.truncf %212 : vector<16x32xf32> to vector<16x32xbf16>
    %217 = vector.extract_strided_slice %214 {offsets = [0, 0], sizes = [16, 8], strides = [1, 1]} : vector<16x32xbf16> to vector<16x8xbf16>
    %218 = vector.extract_strided_slice %215 {offsets = [0, 0], sizes = [16, 8], strides = [1, 1]} : vector<16x32xbf16> to vector<16x8xbf16>
    %cst_71 = arith.constant dense<0.000000e+00> : vector<16x16xf32>
    %219 = tpu.matmul %217, %218, %cst_71 {dimension_numbers = #tpu.dot_dimension_numbers<[1], [1], [0], [0], [0, 0, 1, 0], [], []>} : vector<16x8xbf16>, vector<16x8xbf16>, vector<16x16xf32> -> vector<16x16xf32>
    %220 = vector.extract_strided_slice %214 {offsets = [0, 8], sizes = [16, 8], strides = [1, 1]} : vector<16x32xbf16> to vector<16x8xbf16>
    %221 = vector.extract_strided_slice %215 {offsets = [0, 8], sizes = [16, 8], strides = [1, 1]} : vector<16x32xbf16> to vector<16x8xbf16>
    %cst_72 = arith.constant dense<0.000000e+00> : vector<16x16xf32>
    %222 = tpu.matmul %220, %221, %cst_72 {dimension_numbers = #tpu.dot_dimension_numbers<[1], [1], [0], [0], [0, 0, 1, 0], [], []>} : vector<16x8xbf16>, vector<16x8xbf16>, vector<16x16xf32> -> vector<16x16xf32>
    %223 = vector.extract_strided_slice %214 {offsets = [0, 16], sizes = [16, 8], strides = [1, 1]} : vector<16x32xbf16> to vector<16x8xbf16>
    %224 = vector.extract_strided_slice %215 {offsets = [0, 16], sizes = [16, 8], strides = [1, 1]} : vector<16x32xbf16> to vector<16x8xbf16>
    %cst_73 = arith.constant dense<0.000000e+00> : vector<16x16xf32>
    %225 = tpu.matmul %223, %224, %cst_73 {dimension_numbers = #tpu.dot_dimension_numbers<[1], [1], [0], [0], [0, 0, 1, 0], [], []>} : vector<16x8xbf16>, vector<16x8xbf16>, vector<16x16xf32> -> vector<16x16xf32>
    %226 = vector.extract_strided_slice %214 {offsets = [0, 24], sizes = [16, 8], strides = [1, 1]} : vector<16x32xbf16> to vector<16x8xbf16>
    %227 = vector.extract_strided_slice %215 {offsets = [0, 24], sizes = [16, 8], strides = [1, 1]} : vector<16x32xbf16> to vector<16x8xbf16>
    %cst_74 = arith.constant dense<0.000000e+00> : vector<16x16xf32>
    %228 = tpu.matmul %226, %227, %cst_74 {dimension_numbers = #tpu.dot_dimension_numbers<[1], [1], [0], [0], [0, 0, 1, 0], [], []>} : vector<16x8xbf16>, vector<16x8xbf16>, vector<16x16xf32> -> vector<16x16xf32>
    %229 = tpu.concatenate %219, %222, %225, %228 in 0 : vector<16x16xf32>, vector<16x16xf32>, vector<16x16xf32>, vector<16x16xf32> -> vector<64x16xf32>
    %230 = arith.addf %229, %2 : vector<64x16xf32>
    %cst_75 = arith.constant dense<0xFF800000> : vector<64xf32>
    %231 = vector.multi_reduction <maximumf>, %230, %cst_75 [1] : vector<64x16xf32> to vector<64xf32>
    %232 = vector.shape_cast %231 : vector<64xf32> to vector<64x1xf32>
    %233 = vector.broadcast %232 : vector<64x1xf32> to vector<64x16xf32>
    %234 = arith.subf %230, %233 : vector<64x16xf32>
    %235 = math.exp %234 : vector<64x16xf32>
    %cst_76 = arith.constant dense<0.000000e+00> : vector<64xf32>
    %236 = vector.multi_reduction <add>, %235, %cst_76 [1] : vector<64x16xf32> to vector<64xf32>
    %237 = vector.shape_cast %236 : vector<64xf32> to vector<64x1xf32>
    %238 = tpu.reciprocal %237 {approx = true} : vector<64x1xf32> -> vector<64x1xf32>
    %239 = vector.broadcast %238 : vector<64x1xf32> to vector<64x16xf32>
    %240 = arith.mulf %235, %239 : vector<64x16xf32>
    %241 = arith.truncf %240 : vector<64x16xf32> to vector<64x16xbf16>
    %242 = vector.extract_strided_slice %241 {offsets = [0, 0], sizes = [16, 16], strides = [1, 1]} : vector<64x16xbf16> to vector<16x16xbf16>
    %243 = vector.extract_strided_slice %216 {offsets = [0, 0], sizes = [16, 8], strides = [1, 1]} : vector<16x32xbf16> to vector<16x8xbf16>
    %cst_77 = arith.constant dense<0.000000e+00> : vector<16x8xf32>
    %244 = tpu.matmul %242, %243, %cst_77 {dimension_numbers = #tpu.dot_dimension_numbers<[1], [0], [0], [1], [0, 0, 1, 1], [], []>} : vector<16x16xbf16>, vector<16x8xbf16>, vector<16x8xf32> -> vector<16x8xf32>
    %245 = vector.extract_strided_slice %241 {offsets = [16, 0], sizes = [16, 16], strides = [1, 1]} : vector<64x16xbf16> to vector<16x16xbf16>
    %246 = vector.extract_strided_slice %216 {offsets = [0, 8], sizes = [16, 8], strides = [1, 1]} : vector<16x32xbf16> to vector<16x8xbf16>
    %cst_78 = arith.constant dense<0.000000e+00> : vector<16x8xf32>
    %247 = tpu.matmul %245, %246, %cst_78 {dimension_numbers = #tpu.dot_dimension_numbers<[1], [0], [0], [1], [0, 0, 1, 1], [], []>} : vector<16x16xbf16>, vector<16x8xbf16>, vector<16x8xf32> -> vector<16x8xf32>
    %248 = vector.extract_strided_slice %241 {offsets = [32, 0], sizes = [16, 16], strides = [1, 1]} : vector<64x16xbf16> to vector<16x16xbf16>
    %249 = vector.extract_strided_slice %216 {offsets = [0, 16], sizes = [16, 8], strides = [1, 1]} : vector<16x32xbf16> to vector<16x8xbf16>
    %cst_79 = arith.constant dense<0.000000e+00> : vector<16x8xf32>
    %250 = tpu.matmul %248, %249, %cst_79 {dimension_numbers = #tpu.dot_dimension_numbers<[1], [0], [0], [1], [0, 0, 1, 1], [], []>} : vector<16x16xbf16>, vector<16x8xbf16>, vector<16x8xf32> -> vector<16x8xf32>
    %251 = vector.extract_strided_slice %241 {offsets = [48, 0], sizes = [16, 16], strides = [1, 1]} : vector<64x16xbf16> to vector<16x16xbf16>
    %252 = vector.extract_strided_slice %216 {offsets = [0, 24], sizes = [16, 8], strides = [1, 1]} : vector<16x32xbf16> to vector<16x8xbf16>
    %cst_80 = arith.constant dense<0.000000e+00> : vector<16x8xf32>
    %253 = tpu.matmul %251, %252, %cst_80 {dimension_numbers = #tpu.dot_dimension_numbers<[1], [0], [0], [1], [0, 0, 1, 1], [], []>} : vector<16x16xbf16>, vector<16x8xbf16>, vector<16x8xf32> -> vector<16x8xf32>
    %254 = tpu.concatenate %244, %247, %250, %253 in 1 : vector<16x8xf32>, vector<16x8xf32>, vector<16x8xf32>, vector<16x8xf32> -> vector<16x32xf32>
    %255 = arith.truncf %254 : vector<16x32xf32> to vector<16x32xbf16>
    %cst_81 = arith.constant dense<0.000000e+00> : vector<16x32xf32>
    %256 = tpu.matmul %255, %213, %cst_81 {dimension_numbers = #tpu.dot_dimension_numbers<[1], [0], [0], [1], [0, 0, 1, 1], [], []>} : vector<16x32xbf16>, vector<32x32xbf16>, vector<16x32xf32> -> vector<16x32xf32>
    %257 = arith.addf %193, %256 : vector<16x32xf32>
    %258 = arith.mulf %257, %257 : vector<16x32xf32>
    %cst_82 = arith.constant dense<0.000000e+00> : vector<16xf32>
    %259 = vector.multi_reduction <add>, %258, %cst_82 [1] : vector<16x32xf32> to vector<16xf32>
    %260 = vector.shape_cast %259 : vector<16xf32> to vector<16x1xf32>
    %cst_83 = arith.constant 3.200000e+01 : f32
    %261 = vector.broadcast %cst_83 : f32 to vector<16x1xf32>
    %262 = arith.divf %260, %261 : vector<16x1xf32>
    %cst_84 = arith.constant 9.99999997E-7 : f32
    %263 = vector.broadcast %cst_84 : f32 to vector<16x1xf32>
    %264 = arith.addf %262, %263 : vector<16x1xf32>
    %265 = math.rsqrt %264 : vector<16x1xf32>
    %266 = vector.broadcast %265 : vector<16x1xf32> to vector<16x32xf32>
    %267 = arith.mulf %257, %266 : vector<16x32xf32>
    %268 = vector.extract_strided_slice %0 {offsets = [7, 0], sizes = [1, 32], strides = [1, 1]} : vector<12x32xf32> to vector<1x32xf32>
    %269 = vector.broadcast %268 : vector<1x32xf32> to vector<16x32xf32>
    %270 = arith.mulf %267, %269 : vector<16x32xf32>
    %271 = arith.truncf %270 : vector<16x32xf32> to vector<16x32xbf16>
    %c224 = arith.constant 224 : index
    %c0_85 = arith.constant 0 : index
    %272 = vector.load %arg0[%c224, %c0_85] : memref<832x128xbf16, #tpu.memory_space<vmem>>, vector<32x32xbf16>
    %cst_86 = arith.constant dense<0.000000e+00> : vector<16x32xf32>
    %273 = tpu.matmul %271, %272, %cst_86 {dimension_numbers = #tpu.dot_dimension_numbers<[1], [0], [0], [1], [0, 0, 1, 1], [], []>} : vector<16x32xbf16>, vector<32x32xbf16>, vector<16x32xf32> -> vector<16x32xf32>
    %274 = vector.extract_strided_slice %192 {offsets = [0, 0], sizes = [16, 32], strides = [1, 1]} : vector<16x128xf32> to vector<16x32xf32>
    %275 = vector.extract_strided_slice %192 {offsets = [0, 32], sizes = [16, 32], strides = [1, 1]} : vector<16x128xf32> to vector<16x32xf32>
    %c256 = arith.constant 256 : index
    %c0_87 = arith.constant 0 : index
    %276 = vector.load %arg0[%c256, %c0_87] : memref<832x128xbf16, #tpu.memory_space<vmem>>, vector<32x32xbf16>
    %277 = arith.truncf %273 : vector<16x32xf32> to vector<16x32xbf16>
    %278 = arith.truncf %274 : vector<16x32xf32> to vector<16x32xbf16>
    %279 = arith.truncf %275 : vector<16x32xf32> to vector<16x32xbf16>
    %280 = vector.extract_strided_slice %277 {offsets = [0, 0], sizes = [16, 8], strides = [1, 1]} : vector<16x32xbf16> to vector<16x8xbf16>
    %281 = vector.extract_strided_slice %278 {offsets = [0, 0], sizes = [16, 8], strides = [1, 1]} : vector<16x32xbf16> to vector<16x8xbf16>
    %cst_88 = arith.constant dense<0.000000e+00> : vector<16x16xf32>
    %282 = tpu.matmul %280, %281, %cst_88 {dimension_numbers = #tpu.dot_dimension_numbers<[1], [1], [0], [0], [0, 0, 1, 0], [], []>} : vector<16x8xbf16>, vector<16x8xbf16>, vector<16x16xf32> -> vector<16x16xf32>
    %283 = vector.extract_strided_slice %277 {offsets = [0, 8], sizes = [16, 8], strides = [1, 1]} : vector<16x32xbf16> to vector<16x8xbf16>
    %284 = vector.extract_strided_slice %278 {offsets = [0, 8], sizes = [16, 8], strides = [1, 1]} : vector<16x32xbf16> to vector<16x8xbf16>
    %cst_89 = arith.constant dense<0.000000e+00> : vector<16x16xf32>
    %285 = tpu.matmul %283, %284, %cst_89 {dimension_numbers = #tpu.dot_dimension_numbers<[1], [1], [0], [0], [0, 0, 1, 0], [], []>} : vector<16x8xbf16>, vector<16x8xbf16>, vector<16x16xf32> -> vector<16x16xf32>
    %286 = vector.extract_strided_slice %277 {offsets = [0, 16], sizes = [16, 8], strides = [1, 1]} : vector<16x32xbf16> to vector<16x8xbf16>
    %287 = vector.extract_strided_slice %278 {offsets = [0, 16], sizes = [16, 8], strides = [1, 1]} : vector<16x32xbf16> to vector<16x8xbf16>
    %cst_90 = arith.constant dense<0.000000e+00> : vector<16x16xf32>
    %288 = tpu.matmul %286, %287, %cst_90 {dimension_numbers = #tpu.dot_dimension_numbers<[1], [1], [0], [0], [0, 0, 1, 0], [], []>} : vector<16x8xbf16>, vector<16x8xbf16>, vector<16x16xf32> -> vector<16x16xf32>
    %289 = vector.extract_strided_slice %277 {offsets = [0, 24], sizes = [16, 8], strides = [1, 1]} : vector<16x32xbf16> to vector<16x8xbf16>
    %290 = vector.extract_strided_slice %278 {offsets = [0, 24], sizes = [16, 8], strides = [1, 1]} : vector<16x32xbf16> to vector<16x8xbf16>
    %cst_91 = arith.constant dense<0.000000e+00> : vector<16x16xf32>
    %291 = tpu.matmul %289, %290, %cst_91 {dimension_numbers = #tpu.dot_dimension_numbers<[1], [1], [0], [0], [0, 0, 1, 0], [], []>} : vector<16x8xbf16>, vector<16x8xbf16>, vector<16x16xf32> -> vector<16x16xf32>
    %292 = tpu.concatenate %282, %285, %288, %291 in 0 : vector<16x16xf32>, vector<16x16xf32>, vector<16x16xf32>, vector<16x16xf32> -> vector<64x16xf32>
    %293 = arith.addf %292, %3 : vector<64x16xf32>
    %cst_92 = arith.constant dense<0xFF800000> : vector<64xf32>
    %294 = vector.multi_reduction <maximumf>, %293, %cst_92 [1] : vector<64x16xf32> to vector<64xf32>
    %295 = vector.shape_cast %294 : vector<64xf32> to vector<64x1xf32>
    %296 = vector.broadcast %295 : vector<64x1xf32> to vector<64x16xf32>
    %297 = arith.subf %293, %296 : vector<64x16xf32>
    %298 = math.exp %297 : vector<64x16xf32>
    %cst_93 = arith.constant dense<0.000000e+00> : vector<64xf32>
    %299 = vector.multi_reduction <add>, %298, %cst_93 [1] : vector<64x16xf32> to vector<64xf32>
    %300 = vector.shape_cast %299 : vector<64xf32> to vector<64x1xf32>
    %301 = tpu.reciprocal %300 {approx = true} : vector<64x1xf32> -> vector<64x1xf32>
    %302 = vector.broadcast %301 : vector<64x1xf32> to vector<64x16xf32>
    %303 = arith.mulf %298, %302 : vector<64x16xf32>
    %304 = arith.truncf %303 : vector<64x16xf32> to vector<64x16xbf16>
    %305 = vector.extract_strided_slice %304 {offsets = [0, 0], sizes = [16, 16], strides = [1, 1]} : vector<64x16xbf16> to vector<16x16xbf16>
    %306 = vector.extract_strided_slice %279 {offsets = [0, 0], sizes = [16, 8], strides = [1, 1]} : vector<16x32xbf16> to vector<16x8xbf16>
    %cst_94 = arith.constant dense<0.000000e+00> : vector<16x8xf32>
    %307 = tpu.matmul %305, %306, %cst_94 {dimension_numbers = #tpu.dot_dimension_numbers<[1], [0], [0], [1], [0, 0, 1, 1], [], []>} : vector<16x16xbf16>, vector<16x8xbf16>, vector<16x8xf32> -> vector<16x8xf32>
    %308 = vector.extract_strided_slice %304 {offsets = [16, 0], sizes = [16, 16], strides = [1, 1]} : vector<64x16xbf16> to vector<16x16xbf16>
    %309 = vector.extract_strided_slice %279 {offsets = [0, 8], sizes = [16, 8], strides = [1, 1]} : vector<16x32xbf16> to vector<16x8xbf16>
    %cst_95 = arith.constant dense<0.000000e+00> : vector<16x8xf32>
    %310 = tpu.matmul %308, %309, %cst_95 {dimension_numbers = #tpu.dot_dimension_numbers<[1], [0], [0], [1], [0, 0, 1, 1], [], []>} : vector<16x16xbf16>, vector<16x8xbf16>, vector<16x8xf32> -> vector<16x8xf32>
    %311 = vector.extract_strided_slice %304 {offsets = [32, 0], sizes = [16, 16], strides = [1, 1]} : vector<64x16xbf16> to vector<16x16xbf16>
    %312 = vector.extract_strided_slice %279 {offsets = [0, 16], sizes = [16, 8], strides = [1, 1]} : vector<16x32xbf16> to vector<16x8xbf16>
    %cst_96 = arith.constant dense<0.000000e+00> : vector<16x8xf32>
    %313 = tpu.matmul %311, %312, %cst_96 {dimension_numbers = #tpu.dot_dimension_numbers<[1], [0], [0], [1], [0, 0, 1, 1], [], []>} : vector<16x16xbf16>, vector<16x8xbf16>, vector<16x8xf32> -> vector<16x8xf32>
    %314 = vector.extract_strided_slice %304 {offsets = [48, 0], sizes = [16, 16], strides = [1, 1]} : vector<64x16xbf16> to vector<16x16xbf16>
    %315 = vector.extract_strided_slice %279 {offsets = [0, 24], sizes = [16, 8], strides = [1, 1]} : vector<16x32xbf16> to vector<16x8xbf16>
    %cst_97 = arith.constant dense<0.000000e+00> : vector<16x8xf32>
    %316 = tpu.matmul %314, %315, %cst_97 {dimension_numbers = #tpu.dot_dimension_numbers<[1], [0], [0], [1], [0, 0, 1, 1], [], []>} : vector<16x16xbf16>, vector<16x8xbf16>, vector<16x8xf32> -> vector<16x8xf32>
    %317 = tpu.concatenate %307, %310, %313, %316 in 1 : vector<16x8xf32>, vector<16x8xf32>, vector<16x8xf32>, vector<16x8xf32> -> vector<16x32xf32>
    %318 = arith.truncf %317 : vector<16x32xf32> to vector<16x32xbf16>
    %cst_98 = arith.constant dense<0.000000e+00> : vector<16x32xf32>
    %319 = tpu.matmul %318, %276, %cst_98 {dimension_numbers = #tpu.dot_dimension_numbers<[1], [0], [0], [1], [0, 0, 1, 1], [], []>} : vector<16x32xbf16>, vector<32x32xbf16>, vector<16x32xf32> -> vector<16x32xf32>
    %320 = arith.addf %257, %319 : vector<16x32xf32>
    %321 = arith.mulf %320, %320 : vector<16x32xf32>
    %cst_99 = arith.constant dense<0.000000e+00> : vector<16xf32>
    %322 = vector.multi_reduction <add>, %321, %cst_99 [1] : vector<16x32xf32> to vector<16xf32>
    %323 = vector.shape_cast %322 : vector<16xf32> to vector<16x1xf32>
    %cst_100 = arith.constant 3.200000e+01 : f32
    %324 = vector.broadcast %cst_100 : f32 to vector<16x1xf32>
    %325 = arith.divf %323, %324 : vector<16x1xf32>
    %cst_101 = arith.constant 9.99999997E-7 : f32
    %326 = vector.broadcast %cst_101 : f32 to vector<16x1xf32>
    %327 = arith.addf %325, %326 : vector<16x1xf32>
    %328 = math.rsqrt %327 : vector<16x1xf32>
    %329 = vector.broadcast %328 : vector<16x1xf32> to vector<16x32xf32>
    %330 = arith.mulf %320, %329 : vector<16x32xf32>
    %331 = vector.extract_strided_slice %0 {offsets = [9, 0], sizes = [1, 32], strides = [1, 1]} : vector<12x32xf32> to vector<1x32xf32>
    %332 = vector.broadcast %331 : vector<1x32xf32> to vector<16x32xf32>
    %333 = arith.mulf %330, %332 : vector<16x32xf32>
    %334 = arith.truncf %333 : vector<16x32xf32> to vector<16x32xbf16>
    %c288 = arith.constant 288 : index
    %c0_102 = arith.constant 0 : index
    %335 = vector.load %arg0[%c288, %c0_102] : memref<832x128xbf16, #tpu.memory_space<vmem>>, vector<32x64xbf16>
    %cst_103 = arith.constant dense<0.000000e+00> : vector<16x64xf32>
    %336 = tpu.matmul %334, %335, %cst_103 {dimension_numbers = #tpu.dot_dimension_numbers<[1], [0], [0], [1], [0, 0, 1, 1], [], []>} : vector<16x32xbf16>, vector<32x64xbf16>, vector<16x64xf32> -> vector<16x64xf32>
    %cst_104 = arith.constant 0.000000e+00 : f32
    %337 = vector.broadcast %cst_104 : f32 to vector<16x64xf32>
    %338 = arith.maximumf %336, %337 : vector<16x64xf32>
    %339 = arith.truncf %338 : vector<16x64xf32> to vector<16x64xbf16>
    %c320 = arith.constant 320 : index
    %c0_105 = arith.constant 0 : index
    %340 = vector.load %arg0[%c320, %c0_105] : memref<832x128xbf16, #tpu.memory_space<vmem>>, vector<64x32xbf16>
    %cst_106 = arith.constant dense<0.000000e+00> : vector<16x32xf32>
    %341 = tpu.matmul %339, %340, %cst_106 {dimension_numbers = #tpu.dot_dimension_numbers<[1], [0], [0], [1], [0, 0, 1, 1], [], []>} : vector<16x64xbf16>, vector<64x32xbf16>, vector<16x32xf32> -> vector<16x32xf32>
    %342 = arith.addf %320, %341 : vector<16x32xf32>
    %343 = arith.mulf %342, %342 : vector<16x32xf32>
    %cst_107 = arith.constant dense<0.000000e+00> : vector<16xf32>
    %344 = vector.multi_reduction <add>, %343, %cst_107 [1] : vector<16x32xf32> to vector<16xf32>
    %345 = vector.shape_cast %344 : vector<16xf32> to vector<16x1xf32>
    %cst_108 = arith.constant 3.200000e+01 : f32
    %346 = vector.broadcast %cst_108 : f32 to vector<16x1xf32>
    %347 = arith.divf %345, %346 : vector<16x1xf32>
    %cst_109 = arith.constant 9.99999997E-7 : f32
    %348 = vector.broadcast %cst_109 : f32 to vector<16x1xf32>
    %349 = arith.addf %347, %348 : vector<16x1xf32>
    %350 = math.rsqrt %349 : vector<16x1xf32>
    %351 = vector.broadcast %350 : vector<16x1xf32> to vector<16x32xf32>
    %352 = arith.mulf %342, %351 : vector<16x32xf32>
    %353 = vector.extract_strided_slice %0 {offsets = [6, 0], sizes = [1, 32], strides = [1, 1]} : vector<12x32xf32> to vector<1x32xf32>
    %354 = vector.broadcast %353 : vector<1x32xf32> to vector<16x32xf32>
    %355 = arith.mulf %352, %354 : vector<16x32xf32>
    %356 = arith.truncf %355 : vector<16x32xf32> to vector<16x32xbf16>
    %c544 = arith.constant 544 : index
    %c0_110 = arith.constant 0 : index
    %357 = vector.load %arg0[%c544, %c0_110] : memref<832x128xbf16, #tpu.memory_space<vmem>>, vector<32x96xbf16>
    %cst_111 = arith.constant dense<0.000000e+00> : vector<16x96xf32>
    %358 = tpu.matmul %356, %357, %cst_111 {dimension_numbers = #tpu.dot_dimension_numbers<[1], [0], [0], [1], [0, 0, 1, 1], [], []>} : vector<16x32xbf16>, vector<32x96xbf16>, vector<16x96xf32> -> vector<16x96xf32>
    %359 = vector.extract_strided_slice %358 {offsets = [0, 0], sizes = [16, 32], strides = [1, 1]} : vector<16x96xf32> to vector<16x32xf32>
    %360 = vector.extract_strided_slice %358 {offsets = [0, 32], sizes = [16, 32], strides = [1, 1]} : vector<16x96xf32> to vector<16x32xf32>
    %361 = vector.extract_strided_slice %358 {offsets = [0, 64], sizes = [16, 32], strides = [1, 1]} : vector<16x96xf32> to vector<16x32xf32>
    %c576 = arith.constant 576 : index
    %c0_112 = arith.constant 0 : index
    %362 = vector.load %arg0[%c576, %c0_112] : memref<832x128xbf16, #tpu.memory_space<vmem>>, vector<32x32xbf16>
    %363 = arith.truncf %359 : vector<16x32xf32> to vector<16x32xbf16>
    %364 = arith.truncf %360 : vector<16x32xf32> to vector<16x32xbf16>
    %365 = arith.truncf %361 : vector<16x32xf32> to vector<16x32xbf16>
    %366 = vector.extract_strided_slice %363 {offsets = [0, 0], sizes = [16, 8], strides = [1, 1]} : vector<16x32xbf16> to vector<16x8xbf16>
    %367 = vector.extract_strided_slice %364 {offsets = [0, 0], sizes = [16, 8], strides = [1, 1]} : vector<16x32xbf16> to vector<16x8xbf16>
    %cst_113 = arith.constant dense<0.000000e+00> : vector<16x16xf32>
    %368 = tpu.matmul %366, %367, %cst_113 {dimension_numbers = #tpu.dot_dimension_numbers<[1], [1], [0], [0], [0, 0, 1, 0], [], []>} : vector<16x8xbf16>, vector<16x8xbf16>, vector<16x16xf32> -> vector<16x16xf32>
    %369 = vector.extract_strided_slice %363 {offsets = [0, 8], sizes = [16, 8], strides = [1, 1]} : vector<16x32xbf16> to vector<16x8xbf16>
    %370 = vector.extract_strided_slice %364 {offsets = [0, 8], sizes = [16, 8], strides = [1, 1]} : vector<16x32xbf16> to vector<16x8xbf16>
    %cst_114 = arith.constant dense<0.000000e+00> : vector<16x16xf32>
    %371 = tpu.matmul %369, %370, %cst_114 {dimension_numbers = #tpu.dot_dimension_numbers<[1], [1], [0], [0], [0, 0, 1, 0], [], []>} : vector<16x8xbf16>, vector<16x8xbf16>, vector<16x16xf32> -> vector<16x16xf32>
    %372 = vector.extract_strided_slice %363 {offsets = [0, 16], sizes = [16, 8], strides = [1, 1]} : vector<16x32xbf16> to vector<16x8xbf16>
    %373 = vector.extract_strided_slice %364 {offsets = [0, 16], sizes = [16, 8], strides = [1, 1]} : vector<16x32xbf16> to vector<16x8xbf16>
    %cst_115 = arith.constant dense<0.000000e+00> : vector<16x16xf32>
    %374 = tpu.matmul %372, %373, %cst_115 {dimension_numbers = #tpu.dot_dimension_numbers<[1], [1], [0], [0], [0, 0, 1, 0], [], []>} : vector<16x8xbf16>, vector<16x8xbf16>, vector<16x16xf32> -> vector<16x16xf32>
    %375 = vector.extract_strided_slice %363 {offsets = [0, 24], sizes = [16, 8], strides = [1, 1]} : vector<16x32xbf16> to vector<16x8xbf16>
    %376 = vector.extract_strided_slice %364 {offsets = [0, 24], sizes = [16, 8], strides = [1, 1]} : vector<16x32xbf16> to vector<16x8xbf16>
    %cst_116 = arith.constant dense<0.000000e+00> : vector<16x16xf32>
    %377 = tpu.matmul %375, %376, %cst_116 {dimension_numbers = #tpu.dot_dimension_numbers<[1], [1], [0], [0], [0, 0, 1, 0], [], []>} : vector<16x8xbf16>, vector<16x8xbf16>, vector<16x16xf32> -> vector<16x16xf32>
    %378 = tpu.concatenate %368, %371, %374, %377 in 0 : vector<16x16xf32>, vector<16x16xf32>, vector<16x16xf32>, vector<16x16xf32> -> vector<64x16xf32>
    %379 = arith.addf %378, %2 : vector<64x16xf32>
    %cst_117 = arith.constant dense<0xFF800000> : vector<64xf32>
    %380 = vector.multi_reduction <maximumf>, %379, %cst_117 [1] : vector<64x16xf32> to vector<64xf32>
    %381 = vector.shape_cast %380 : vector<64xf32> to vector<64x1xf32>
    %382 = vector.broadcast %381 : vector<64x1xf32> to vector<64x16xf32>
    %383 = arith.subf %379, %382 : vector<64x16xf32>
    %384 = math.exp %383 : vector<64x16xf32>
    %cst_118 = arith.constant dense<0.000000e+00> : vector<64xf32>
    %385 = vector.multi_reduction <add>, %384, %cst_118 [1] : vector<64x16xf32> to vector<64xf32>
    %386 = vector.shape_cast %385 : vector<64xf32> to vector<64x1xf32>
    %387 = tpu.reciprocal %386 {approx = true} : vector<64x1xf32> -> vector<64x1xf32>
    %388 = vector.broadcast %387 : vector<64x1xf32> to vector<64x16xf32>
    %389 = arith.mulf %384, %388 : vector<64x16xf32>
    %390 = arith.truncf %389 : vector<64x16xf32> to vector<64x16xbf16>
    %391 = vector.extract_strided_slice %390 {offsets = [0, 0], sizes = [16, 16], strides = [1, 1]} : vector<64x16xbf16> to vector<16x16xbf16>
    %392 = vector.extract_strided_slice %365 {offsets = [0, 0], sizes = [16, 8], strides = [1, 1]} : vector<16x32xbf16> to vector<16x8xbf16>
    %cst_119 = arith.constant dense<0.000000e+00> : vector<16x8xf32>
    %393 = tpu.matmul %391, %392, %cst_119 {dimension_numbers = #tpu.dot_dimension_numbers<[1], [0], [0], [1], [0, 0, 1, 1], [], []>} : vector<16x16xbf16>, vector<16x8xbf16>, vector<16x8xf32> -> vector<16x8xf32>
    %394 = vector.extract_strided_slice %390 {offsets = [16, 0], sizes = [16, 16], strides = [1, 1]} : vector<64x16xbf16> to vector<16x16xbf16>
    %395 = vector.extract_strided_slice %365 {offsets = [0, 8], sizes = [16, 8], strides = [1, 1]} : vector<16x32xbf16> to vector<16x8xbf16>
    %cst_120 = arith.constant dense<0.000000e+00> : vector<16x8xf32>
    %396 = tpu.matmul %394, %395, %cst_120 {dimension_numbers = #tpu.dot_dimension_numbers<[1], [0], [0], [1], [0, 0, 1, 1], [], []>} : vector<16x16xbf16>, vector<16x8xbf16>, vector<16x8xf32> -> vector<16x8xf32>
    %397 = vector.extract_strided_slice %390 {offsets = [32, 0], sizes = [16, 16], strides = [1, 1]} : vector<64x16xbf16> to vector<16x16xbf16>
    %398 = vector.extract_strided_slice %365 {offsets = [0, 16], sizes = [16, 8], strides = [1, 1]} : vector<16x32xbf16> to vector<16x8xbf16>
    %cst_121 = arith.constant dense<0.000000e+00> : vector<16x8xf32>
    %399 = tpu.matmul %397, %398, %cst_121 {dimension_numbers = #tpu.dot_dimension_numbers<[1], [0], [0], [1], [0, 0, 1, 1], [], []>} : vector<16x16xbf16>, vector<16x8xbf16>, vector<16x8xf32> -> vector<16x8xf32>
    %400 = vector.extract_strided_slice %390 {offsets = [48, 0], sizes = [16, 16], strides = [1, 1]} : vector<64x16xbf16> to vector<16x16xbf16>
    %401 = vector.extract_strided_slice %365 {offsets = [0, 24], sizes = [16, 8], strides = [1, 1]} : vector<16x32xbf16> to vector<16x8xbf16>
    %cst_122 = arith.constant dense<0.000000e+00> : vector<16x8xf32>
    %402 = tpu.matmul %400, %401, %cst_122 {dimension_numbers = #tpu.dot_dimension_numbers<[1], [0], [0], [1], [0, 0, 1, 1], [], []>} : vector<16x16xbf16>, vector<16x8xbf16>, vector<16x8xf32> -> vector<16x8xf32>
    %403 = tpu.concatenate %393, %396, %399, %402 in 1 : vector<16x8xf32>, vector<16x8xf32>, vector<16x8xf32>, vector<16x8xf32> -> vector<16x32xf32>
    %404 = arith.truncf %403 : vector<16x32xf32> to vector<16x32xbf16>
    %cst_123 = arith.constant dense<0.000000e+00> : vector<16x32xf32>
    %405 = tpu.matmul %404, %362, %cst_123 {dimension_numbers = #tpu.dot_dimension_numbers<[1], [0], [0], [1], [0, 0, 1, 1], [], []>} : vector<16x32xbf16>, vector<32x32xbf16>, vector<16x32xf32> -> vector<16x32xf32>
    %406 = arith.addf %342, %405 : vector<16x32xf32>
    %407 = arith.mulf %406, %406 : vector<16x32xf32>
    %cst_124 = arith.constant dense<0.000000e+00> : vector<16xf32>
    %408 = vector.multi_reduction <add>, %407, %cst_124 [1] : vector<16x32xf32> to vector<16xf32>
    %409 = vector.shape_cast %408 : vector<16xf32> to vector<16x1xf32>
    %cst_125 = arith.constant 3.200000e+01 : f32
    %410 = vector.broadcast %cst_125 : f32 to vector<16x1xf32>
    %411 = arith.divf %409, %410 : vector<16x1xf32>
    %cst_126 = arith.constant 9.99999997E-7 : f32
    %412 = vector.broadcast %cst_126 : f32 to vector<16x1xf32>
    %413 = arith.addf %411, %412 : vector<16x1xf32>
    %414 = math.rsqrt %413 : vector<16x1xf32>
    %415 = vector.broadcast %414 : vector<16x1xf32> to vector<16x32xf32>
    %416 = arith.mulf %406, %415 : vector<16x32xf32>
    %417 = vector.extract_strided_slice %0 {offsets = [8, 0], sizes = [1, 32], strides = [1, 1]} : vector<12x32xf32> to vector<1x32xf32>
    %418 = vector.broadcast %417 : vector<1x32xf32> to vector<16x32xf32>
    %419 = arith.mulf %416, %418 : vector<16x32xf32>
    %420 = arith.truncf %419 : vector<16x32xf32> to vector<16x32xbf16>
    %c608 = arith.constant 608 : index
    %c0_127 = arith.constant 0 : index
    %421 = vector.load %arg0[%c608, %c0_127] : memref<832x128xbf16, #tpu.memory_space<vmem>>, vector<32x32xbf16>
    %cst_128 = arith.constant dense<0.000000e+00> : vector<16x32xf32>
    %422 = tpu.matmul %420, %421, %cst_128 {dimension_numbers = #tpu.dot_dimension_numbers<[1], [0], [0], [1], [0, 0, 1, 1], [], []>} : vector<16x32xbf16>, vector<32x32xbf16>, vector<16x32xf32> -> vector<16x32xf32>
    %423 = vector.extract_strided_slice %192 {offsets = [0, 64], sizes = [16, 32], strides = [1, 1]} : vector<16x128xf32> to vector<16x32xf32>
    %424 = vector.extract_strided_slice %192 {offsets = [0, 96], sizes = [16, 32], strides = [1, 1]} : vector<16x128xf32> to vector<16x32xf32>
    %c640 = arith.constant 640 : index
    %c0_129 = arith.constant 0 : index
    %425 = vector.load %arg0[%c640, %c0_129] : memref<832x128xbf16, #tpu.memory_space<vmem>>, vector<32x32xbf16>
    %426 = arith.truncf %422 : vector<16x32xf32> to vector<16x32xbf16>
    %427 = arith.truncf %423 : vector<16x32xf32> to vector<16x32xbf16>
    %428 = arith.truncf %424 : vector<16x32xf32> to vector<16x32xbf16>
    %429 = vector.extract_strided_slice %426 {offsets = [0, 0], sizes = [16, 8], strides = [1, 1]} : vector<16x32xbf16> to vector<16x8xbf16>
    %430 = vector.extract_strided_slice %427 {offsets = [0, 0], sizes = [16, 8], strides = [1, 1]} : vector<16x32xbf16> to vector<16x8xbf16>
    %cst_130 = arith.constant dense<0.000000e+00> : vector<16x16xf32>
    %431 = tpu.matmul %429, %430, %cst_130 {dimension_numbers = #tpu.dot_dimension_numbers<[1], [1], [0], [0], [0, 0, 1, 0], [], []>} : vector<16x8xbf16>, vector<16x8xbf16>, vector<16x16xf32> -> vector<16x16xf32>
    %432 = vector.extract_strided_slice %426 {offsets = [0, 8], sizes = [16, 8], strides = [1, 1]} : vector<16x32xbf16> to vector<16x8xbf16>
    %433 = vector.extract_strided_slice %427 {offsets = [0, 8], sizes = [16, 8], strides = [1, 1]} : vector<16x32xbf16> to vector<16x8xbf16>
    %cst_131 = arith.constant dense<0.000000e+00> : vector<16x16xf32>
    %434 = tpu.matmul %432, %433, %cst_131 {dimension_numbers = #tpu.dot_dimension_numbers<[1], [1], [0], [0], [0, 0, 1, 0], [], []>} : vector<16x8xbf16>, vector<16x8xbf16>, vector<16x16xf32> -> vector<16x16xf32>
    %435 = vector.extract_strided_slice %426 {offsets = [0, 16], sizes = [16, 8], strides = [1, 1]} : vector<16x32xbf16> to vector<16x8xbf16>
    %436 = vector.extract_strided_slice %427 {offsets = [0, 16], sizes = [16, 8], strides = [1, 1]} : vector<16x32xbf16> to vector<16x8xbf16>
    %cst_132 = arith.constant dense<0.000000e+00> : vector<16x16xf32>
    %437 = tpu.matmul %435, %436, %cst_132 {dimension_numbers = #tpu.dot_dimension_numbers<[1], [1], [0], [0], [0, 0, 1, 0], [], []>} : vector<16x8xbf16>, vector<16x8xbf16>, vector<16x16xf32> -> vector<16x16xf32>
    %438 = vector.extract_strided_slice %426 {offsets = [0, 24], sizes = [16, 8], strides = [1, 1]} : vector<16x32xbf16> to vector<16x8xbf16>
    %439 = vector.extract_strided_slice %427 {offsets = [0, 24], sizes = [16, 8], strides = [1, 1]} : vector<16x32xbf16> to vector<16x8xbf16>
    %cst_133 = arith.constant dense<0.000000e+00> : vector<16x16xf32>
    %440 = tpu.matmul %438, %439, %cst_133 {dimension_numbers = #tpu.dot_dimension_numbers<[1], [1], [0], [0], [0, 0, 1, 0], [], []>} : vector<16x8xbf16>, vector<16x8xbf16>, vector<16x16xf32> -> vector<16x16xf32>
    %441 = tpu.concatenate %431, %434, %437, %440 in 0 : vector<16x16xf32>, vector<16x16xf32>, vector<16x16xf32>, vector<16x16xf32> -> vector<64x16xf32>
    %442 = arith.addf %441, %3 : vector<64x16xf32>
    %cst_134 = arith.constant dense<0xFF800000> : vector<64xf32>
    %443 = vector.multi_reduction <maximumf>, %442, %cst_134 [1] : vector<64x16xf32> to vector<64xf32>
    %444 = vector.shape_cast %443 : vector<64xf32> to vector<64x1xf32>
    %445 = vector.broadcast %444 : vector<64x1xf32> to vector<64x16xf32>
    %446 = arith.subf %442, %445 : vector<64x16xf32>
    %447 = math.exp %446 : vector<64x16xf32>
    %cst_135 = arith.constant dense<0.000000e+00> : vector<64xf32>
    %448 = vector.multi_reduction <add>, %447, %cst_135 [1] : vector<64x16xf32> to vector<64xf32>
    %449 = vector.shape_cast %448 : vector<64xf32> to vector<64x1xf32>
    %450 = tpu.reciprocal %449 {approx = true} : vector<64x1xf32> -> vector<64x1xf32>
    %451 = vector.broadcast %450 : vector<64x1xf32> to vector<64x16xf32>
    %452 = arith.mulf %447, %451 : vector<64x16xf32>
    %453 = arith.truncf %452 : vector<64x16xf32> to vector<64x16xbf16>
    %454 = vector.extract_strided_slice %453 {offsets = [0, 0], sizes = [16, 16], strides = [1, 1]} : vector<64x16xbf16> to vector<16x16xbf16>
    %455 = vector.extract_strided_slice %428 {offsets = [0, 0], sizes = [16, 8], strides = [1, 1]} : vector<16x32xbf16> to vector<16x8xbf16>
    %cst_136 = arith.constant dense<0.000000e+00> : vector<16x8xf32>
    %456 = tpu.matmul %454, %455, %cst_136 {dimension_numbers = #tpu.dot_dimension_numbers<[1], [0], [0], [1], [0, 0, 1, 1], [], []>} : vector<16x16xbf16>, vector<16x8xbf16>, vector<16x8xf32> -> vector<16x8xf32>
    %457 = vector.extract_strided_slice %453 {offsets = [16, 0], sizes = [16, 16], strides = [1, 1]} : vector<64x16xbf16> to vector<16x16xbf16>
    %458 = vector.extract_strided_slice %428 {offsets = [0, 8], sizes = [16, 8], strides = [1, 1]} : vector<16x32xbf16> to vector<16x8xbf16>
    %cst_137 = arith.constant dense<0.000000e+00> : vector<16x8xf32>
    %459 = tpu.matmul %457, %458, %cst_137 {dimension_numbers = #tpu.dot_dimension_numbers<[1], [0], [0], [1], [0, 0, 1, 1], [], []>} : vector<16x16xbf16>, vector<16x8xbf16>, vector<16x8xf32> -> vector<16x8xf32>
    %460 = vector.extract_strided_slice %453 {offsets = [32, 0], sizes = [16, 16], strides = [1, 1]} : vector<64x16xbf16> to vector<16x16xbf16>
    %461 = vector.extract_strided_slice %428 {offsets = [0, 16], sizes = [16, 8], strides = [1, 1]} : vector<16x32xbf16> to vector<16x8xbf16>
    %cst_138 = arith.constant dense<0.000000e+00> : vector<16x8xf32>
    %462 = tpu.matmul %460, %461, %cst_138 {dimension_numbers = #tpu.dot_dimension_numbers<[1], [0], [0], [1], [0, 0, 1, 1], [], []>} : vector<16x16xbf16>, vector<16x8xbf16>, vector<16x8xf32> -> vector<16x8xf32>
    %463 = vector.extract_strided_slice %453 {offsets = [48, 0], sizes = [16, 16], strides = [1, 1]} : vector<64x16xbf16> to vector<16x16xbf16>
    %464 = vector.extract_strided_slice %428 {offsets = [0, 24], sizes = [16, 8], strides = [1, 1]} : vector<16x32xbf16> to vector<16x8xbf16>
    %cst_139 = arith.constant dense<0.000000e+00> : vector<16x8xf32>
    %465 = tpu.matmul %463, %464, %cst_139 {dimension_numbers = #tpu.dot_dimension_numbers<[1], [0], [0], [1], [0, 0, 1, 1], [], []>} : vector<16x16xbf16>, vector<16x8xbf16>, vector<16x8xf32> -> vector<16x8xf32>
    %466 = tpu.concatenate %456, %459, %462, %465 in 1 : vector<16x8xf32>, vector<16x8xf32>, vector<16x8xf32>, vector<16x8xf32> -> vector<16x32xf32>
    %467 = arith.truncf %466 : vector<16x32xf32> to vector<16x32xbf16>
    %cst_140 = arith.constant dense<0.000000e+00> : vector<16x32xf32>
    %468 = tpu.matmul %467, %425, %cst_140 {dimension_numbers = #tpu.dot_dimension_numbers<[1], [0], [0], [1], [0, 0, 1, 1], [], []>} : vector<16x32xbf16>, vector<32x32xbf16>, vector<16x32xf32> -> vector<16x32xf32>
    %469 = arith.addf %406, %468 : vector<16x32xf32>
    %470 = arith.mulf %469, %469 : vector<16x32xf32>
    %cst_141 = arith.constant dense<0.000000e+00> : vector<16xf32>
    %471 = vector.multi_reduction <add>, %470, %cst_141 [1] : vector<16x32xf32> to vector<16xf32>
    %472 = vector.shape_cast %471 : vector<16xf32> to vector<16x1xf32>
    %cst_142 = arith.constant 3.200000e+01 : f32
    %473 = vector.broadcast %cst_142 : f32 to vector<16x1xf32>
    %474 = arith.divf %472, %473 : vector<16x1xf32>
    %cst_143 = arith.constant 9.99999997E-7 : f32
    %475 = vector.broadcast %cst_143 : f32 to vector<16x1xf32>
    %476 = arith.addf %474, %475 : vector<16x1xf32>
    %477 = math.rsqrt %476 : vector<16x1xf32>
    %478 = vector.broadcast %477 : vector<16x1xf32> to vector<16x32xf32>
    %479 = arith.mulf %469, %478 : vector<16x32xf32>
    %480 = vector.extract_strided_slice %0 {offsets = [10, 0], sizes = [1, 32], strides = [1, 1]} : vector<12x32xf32> to vector<1x32xf32>
    %481 = vector.broadcast %480 : vector<1x32xf32> to vector<16x32xf32>
    %482 = arith.mulf %479, %481 : vector<16x32xf32>
    %483 = arith.truncf %482 : vector<16x32xf32> to vector<16x32xbf16>
    %c672 = arith.constant 672 : index
    %c0_144 = arith.constant 0 : index
    %484 = vector.load %arg0[%c672, %c0_144] : memref<832x128xbf16, #tpu.memory_space<vmem>>, vector<32x64xbf16>
    %cst_145 = arith.constant dense<0.000000e+00> : vector<16x64xf32>
    %485 = tpu.matmul %483, %484, %cst_145 {dimension_numbers = #tpu.dot_dimension_numbers<[1], [0], [0], [1], [0, 0, 1, 1], [], []>} : vector<16x32xbf16>, vector<32x64xbf16>, vector<16x64xf32> -> vector<16x64xf32>
    %cst_146 = arith.constant 0.000000e+00 : f32
    %486 = vector.broadcast %cst_146 : f32 to vector<16x64xf32>
    %487 = arith.maximumf %485, %486 : vector<16x64xf32>
    %488 = arith.truncf %487 : vector<16x64xf32> to vector<16x64xbf16>
    %c704 = arith.constant 704 : index
    %c0_147 = arith.constant 0 : index
    %489 = vector.load %arg0[%c704, %c0_147] : memref<832x128xbf16, #tpu.memory_space<vmem>>, vector<64x32xbf16>
    %cst_148 = arith.constant dense<0.000000e+00> : vector<16x32xf32>
    %490 = tpu.matmul %488, %489, %cst_148 {dimension_numbers = #tpu.dot_dimension_numbers<[1], [0], [0], [1], [0, 0, 1, 1], [], []>} : vector<16x64xbf16>, vector<64x32xbf16>, vector<16x32xf32> -> vector<16x32xf32>
    %491 = arith.addf %469, %490 : vector<16x32xf32>
    %492 = arith.mulf %491, %491 : vector<16x32xf32>
    %cst_149 = arith.constant dense<0.000000e+00> : vector<16xf32>
    %493 = vector.multi_reduction <add>, %492, %cst_149 [1] : vector<16x32xf32> to vector<16xf32>
    %494 = vector.shape_cast %493 : vector<16xf32> to vector<16x1xf32>
    %cst_150 = arith.constant 3.200000e+01 : f32
    %495 = vector.broadcast %cst_150 : f32 to vector<16x1xf32>
    %496 = arith.divf %494, %495 : vector<16x1xf32>
    %cst_151 = arith.constant 9.99999997E-7 : f32
    %497 = vector.broadcast %cst_151 : f32 to vector<16x1xf32>
    %498 = arith.addf %496, %497 : vector<16x1xf32>
    %499 = math.rsqrt %498 : vector<16x1xf32>
    %500 = vector.broadcast %499 : vector<16x1xf32> to vector<16x32xf32>
    %501 = arith.mulf %491, %500 : vector<16x32xf32>
    %502 = vector.extract_strided_slice %0 {offsets = [11, 0], sizes = [1, 32], strides = [1, 1]} : vector<12x32xf32> to vector<1x32xf32>
    %503 = vector.broadcast %502 : vector<1x32xf32> to vector<16x32xf32>
    %504 = arith.mulf %501, %503 : vector<16x32xf32>
    %cst_152 = arith.constant 0.176776692 : f32
    %505 = vector.broadcast %cst_152 : f32 to vector<16x32xf32>
    %506 = arith.mulf %504, %505 : vector<16x32xf32>
    %507 = arith.truncf %506 : vector<16x32xf32> to vector<16x32xbf16>
    %c800 = arith.constant 800 : index
    %c0_153 = arith.constant 0 : index
    %508 = vector.load %arg0[%c800, %c0_153] : memref<832x128xbf16, #tpu.memory_space<vmem>>, vector<32x64xbf16>
    %cst_154 = arith.constant dense<0.000000e+00> : vector<16x64xf32>
    %509 = tpu.matmul %507, %508, %cst_154 {dimension_numbers = #tpu.dot_dimension_numbers<[1], [0], [0], [1], [0, 0, 1, 1], [], []>} : vector<16x32xbf16>, vector<32x64xbf16>, vector<16x64xf32> -> vector<16x64xf32>
    %c0_155 = arith.constant 0 : index
    %c0_156 = arith.constant 0 : index
    %510 = vector.load %arg6[%c0_155, %c0_156] : memref<16x1xi32, #tpu.memory_space<vmem>>, vector<16x1xi32>
    %cst_157 = arith.constant dense<0xFF800000> : vector<16xf32>
    %511 = vector.multi_reduction <maximumf>, %509, %cst_157 [1] : vector<16x64xf32> to vector<16xf32>
    %512 = vector.shape_cast %511 : vector<16xf32> to vector<16x1xf32>
    %513 = vector.broadcast %512 : vector<16x1xf32> to vector<16x64xf32>
    %514 = arith.subf %509, %513 : vector<16x64xf32>
    %515 = math.exp %514 : vector<16x64xf32>
    %cst_158 = arith.constant dense<0.000000e+00> : vector<16xf32>
    %516 = vector.multi_reduction <add>, %515, %cst_158 [1] : vector<16x64xf32> to vector<16xf32>
    %517 = vector.shape_cast %516 : vector<16xf32> to vector<16x1xf32>
    %518 = math.log %517 : vector<16x1xf32>
    %519 = arith.addf %518, %512 : vector<16x1xf32>
    %520 = tpu.iota {dimensions = array<i32: 1>} : vector<16x64xi32>
    %521 = vector.broadcast %510 : vector<16x1xi32> to vector<16x64xi32>
    %522 = arith.cmpi eq, %520, %521 : vector<16x64xi32>
    %523 = arith.extui %522 : vector<16x64xi1> to vector<16x64xi32>
    %524 = arith.sitofp %523 : vector<16x64xi32> to vector<16x64xf32>
    %525 = arith.mulf %524, %509 : vector<16x64xf32>
    %cst_159 = arith.constant dense<0.000000e+00> : vector<16xf32>
    %526 = vector.multi_reduction <add>, %525, %cst_159 [1] : vector<16x64xf32> to vector<16xf32>
    %527 = vector.shape_cast %526 : vector<16xf32> to vector<16x1xf32>
    %c-100_i32 = arith.constant -100 : i32
    %528 = vector.broadcast %c-100_i32 : i32 to vector<16x1xi32>
    %529 = arith.cmpi ne, %510, %528 : vector<16x1xi32>
    %530 = arith.extui %529 : vector<16x1xi1> to vector<16x1xi32>
    %531 = arith.sitofp %530 : vector<16x1xi32> to vector<16x1xf32>
    %532 = arith.subf %519, %527 : vector<16x1xf32>
    %533 = arith.mulf %532, %531 : vector<16x1xf32>
    %cst_160 = arith.constant dense<0.000000e+00> : vector<1xf32>
    %534 = vector.multi_reduction <add>, %533, %cst_160 [0] : vector<16x1xf32> to vector<1xf32>
    %535 = vector.shape_cast %534 : vector<1xf32> to vector<1x1xf32>
    %cst_161 = arith.constant dense<0.000000e+00> : vector<1xf32>
    %536 = vector.multi_reduction <add>, %531, %cst_161 [0] : vector<16x1xf32> to vector<1xf32>
    %537 = vector.shape_cast %536 : vector<1xf32> to vector<1x1xf32>
    %cst_162 = arith.constant 1.000000e+00 : f32
    %538 = vector.broadcast %cst_162 : f32 to vector<1x1xf32>
    %539 = arith.maximumf %537, %538 : vector<1x1xf32>
    %540 = arith.divf %535, %539 : vector<1x1xf32>
    %c0_163 = arith.constant 0 : index
    %c0_164 = arith.constant 0 : index
    %541 = vector.load %arg7[%c0_163, %c0_164] : memref<1x1xf32, #tpu.memory_space<vmem>>, vector<1x1xf32>
    tpu.vector_store %arg7[%c0_163, %c0_164], %540 {strides = array<i32>} : memref<1x1xf32, #tpu.memory_space<vmem>>, vector<1x1xf32>,
    return
  }
}

</mosaic_0001>

<llo_original>
// kernel: t5_generation_loss.1
$region0: #{t5_generation_loss.1}
  #allocation0 [shape = 'u32[]', space=smem, size = 0x4, offset = 0x4, fixed_abs, tag = 'smem constant byte address 0x4 - core index']
  #allocation1 [shape = 'u32[72,128]{1,0:T(1,128)}', space=vmem, size = 0x9000, scoped, tag = 'internal scratch']
  %s0 = inlined_call_operand.vmem [shape: bf16[832,128], index: 0, kind: input, shape index: {}]
  %s1 = inlined_call_operand.vmem [shape: f32[12,32], index: 1, kind: input, shape index: {}]
  %s2 = inlined_call_operand.vmem [shape: f32[32,32], index: 2, kind: input, shape index: {}]
  %s3 = inlined_call_operand.vmem [shape: f32[64,16], index: 3, kind: input, shape index: {}]
  %s4 = inlined_call_operand.vmem [shape: f32[64,16], index: 4, kind: input, shape index: {}]
  %s5 = inlined_call_operand.vmem [shape: f32[64,16], index: 5, kind: input, shape index: {}]
  %s6 = inlined_call_operand.vmem [shape: s32[16,1], index: 6, kind: input, shape index: {}]
  %s7 = inlined_call_operand.hbm [shape: f32[1,1], index: 7, kind: output, shape index: {}]
  %s8 = sld [smem:[#allocation0]]
  $region38: #{t5_generation_loss.1} parent=0
    _
  %s10 = ssub.s32 1, %s8
  %s11 = scalar_select 0, %s10, %s8
  $region1: #{t5_generation_loss.1} parent=0
    #allocation2 [shape = 'u8[512]{0}', space=vmem, size = 0x400, scoped, tag = 'output window, operand 0, single buffered']
    #allocation3 [shape = 's32[1]{0}', space=sflag, size = 0x4, scoped, tag = 'scoped memory for t5_generation_loss.1']
    %12 = vsyncpa [#allocation3], 0
    // Predicated region
    $region2: #{t5_generation_loss.1} parent=1 // pred_check
      _
    $region3: #{t5_generation_loss.1} parent=1 // pred_check_branch
      %14 = sbr.rel (0) target = $region5
    $region4: #{t5_generation_loss.1} parent=1 // pred_region
      _
    $region5: #{t5_generation_loss.1} parent=1 // pred_fallthru
      _
    // Predicated region
    $region6: #{t5_generation_loss.1} parent=1 // pred_check
      _
    $region7: #{t5_generation_loss.1} parent=1 // pred_check_branch
      %16 = sbr.rel (0) target = $region9
    $region8: #{t5_generation_loss.1} parent=1 // pred_region
      _
    $region9: #{t5_generation_loss.1} parent=1 // pred_fallthru
      _
    // Predicated region
    $region10: #{t5_generation_loss.1} parent=1 // pred_check
      _
    $region11: #{t5_generation_loss.1} parent=1 // pred_check_branch
      %18 = sbr.rel (0) target = $region13
    $region12: #{t5_generation_loss.1} parent=1 // pred_region
      _
    $region13: #{t5_generation_loss.1} parent=1 // pred_fallthru
      _
    // Predicated region
    $region14: #{t5_generation_loss.1} parent=1 // pred_check
      _
    $region15: #{t5_generation_loss.1} parent=1 // pred_check_branch
      %20 = sbr.rel (0) target = $region17
    $region16: #{t5_generation_loss.1} parent=1 // pred_region
      _
    $region17: #{t5_generation_loss.1} parent=1 // pred_fallthru
      _
    // Predicated region
    $region18: #{t5_generation_loss.1} parent=1 // pred_check
      _
    $region19: #{t5_generation_loss.1} parent=1 // pred_check_branch
      %22 = sbr.rel (0) target = $region21
    $region20: #{t5_generation_loss.1} parent=1 // pred_region
      _
    $region21: #{t5_generation_loss.1} parent=1 // pred_fallthru
      _
    // Predicated region
    $region22: #{t5_generation_loss.1} parent=1 // pred_check
      _
    $region23: #{t5_generation_loss.1} parent=1 // pred_check_branch
      %24 = sbr.rel (0) target = $region25
    $region24: #{t5_generation_loss.1} parent=1 // pred_region
      _
    $region25: #{t5_generation_loss.1} parent=1 // pred_fallthru
      _
    // Predicated region
    $region26: #{t5_generation_loss.1} parent=1 // pred_check
      _
    $region27: #{t5_generation_loss.1} parent=1 // pred_check_branch
      %26 = sbr.rel (0) target = $region29
    $region28: #{t5_generation_loss.1} parent=1 // pred_region
      _
    $region29: #{t5_generation_loss.1} parent=1 // pred_fallthru
      _
    %v28 = vld [vmem:[%s1] sm:$0xff]
    %v29 = vld [vmem:[%s1 + $0x8] sm:$0xf]
    %v30 = vld [vmem:[%s3] sm:$0xff]
    %v31 = vld [vmem:[%s3 + $0x8] sm:$0xff]
    %v32 = vld [vmem:[%s3 + $0x10] sm:$0xff]
    %v33 = vld [vmem:[%s3 + $0x18] sm:$0xff]
    %v34 = vld [vmem:[%s3 + $0x20] sm:$0xff]
    %v35 = vld [vmem:[%s3 + $0x28] sm:$0xff]
    %v36 = vld [vmem:[%s3 + $0x30] sm:$0xff]
    %v37 = vld [vmem:[%s3 + $0x38] sm:$0xff]
    %v38 = vld [vmem:[%s4] sm:$0xff]
    %v39 = vld [vmem:[%s4 + $0x8] sm:$0xff]
    %v40 = vld [vmem:[%s4 + $0x10] sm:$0xff]
    %v41 = vld [vmem:[%s4 + $0x18] sm:$0xff]
    %v42 = vld [vmem:[%s4 + $0x20] sm:$0xff]
    %v43 = vld [vmem:[%s4 + $0x28] sm:$0xff]
    %v44 = vld [vmem:[%s4 + $0x30] sm:$0xff]
    %v45 = vld [vmem:[%s4 + $0x38] sm:$0xff]
    %v46 = vld [vmem:[%s5] sm:$0xff]
    %v47 = vld [vmem:[%s5 + $0x8] sm:$0xff]
    %v48 = vld [vmem:[%s5 + $0x10] sm:$0xff]
    %v49 = vld [vmem:[%s5 + $0x18] sm:$0xff]
    %v50 = vld [vmem:[%s5 + $0x20] sm:$0xff]
    %v51 = vld [vmem:[%s5 + $0x28] sm:$0xff]
    %v52 = vld [vmem:[%s5 + $0x30] sm:$0xff]
    %v53 = vld [vmem:[%s5 + $0x38] sm:$0xff]
    %v54 = vld [vmem:[%s2] sm:$0xff]
    %v55 = vld [vmem:[%s2 + $0x8] sm:$0xff]
    %v56 = vmul.f32 %v54, %v54
    %v57 = vmul.f32 %v55, %v55
    %vm58 = vcmask 261120
    %v59 = vsel %vm58, %v56, 0.0
    %60 = vadd.xlane.f32.xlu0 %v59
    %v61 = vpop.xlane.xlu0 %60
    %v62 = vsel %vm58, %v57, 0.0
    %63 = vadd.xlane.f32.xlu0 %v62
    %v64 = vpop.xlane.xlu0 %63
    %v65 = vrcp.pop 32.0
    %v66 = vmul.f32 32.0, %v65
    %v67 = vsub.f32 1.0, %v66
    %v68 = vmul.f32 %v65, %v67
    %v69 = vadd.f32 %v65, %v68
    %vm70 = vweird.f32 %v65
    %v71 = vsel %vm70, %v65, %v69
    %v72 = vmul.f32 %v61, %v71
    %v73 = vmul.f32 %v64, %v71
    %v74 = vadd.f32 %v72, 1e-06
    %v75 = vadd.f32 %v73, 1e-06
    %v76 = vrsqrt.pop %v74
    %v77 = vmul.f32 %v76, %v74
    %v78 = vmul.f32 %v77, %v76
    %v79 = vmul.f32 0.5, %v78
    %v80 = vsub.f32 1.5, %v79
    %v81 = vmul.f32 %v76, %v80
    %vm82 = vweird.f32 %v74
    %vm83 = vweird.f32 %v76
    %vm84 = vmor %vm82, %vm83
    %v85 = vsel %vm84, %v76, %v81
    %v86 = vrsqrt.pop %v75
    %v87 = vmul.f32 %v86, %v75
    %v88 = vmul.f32 %v87, %v86
    %v89 = vmul.f32 0.5, %v88
    %v90 = vsub.f32 1.5, %v89
    %v91 = vmul.f32 %v86, %v90
    %vm92 = vweird.f32 %v75
    %vm93 = vweird.f32 %v86
    %vm94 = vmor %vm92, %vm93
    %v95 = vsel %vm94, %v86, %v91
    %v96 = vmul.f32 %v54, %v85
    %v97 = vmul.f32 %v55, %v95
    %v98 = vperm.slane %v28, 0
    %v99 = vmul.f32 %v96, %v98
    %v100 = vmul.f32 %v97, %v98
    %v101 = vpack.c.bf16 %v100, %v99
    %v102 = vld [vmem:[%s0] sm:$0xf]
    %v103 = vld [vmem:[%s0 + $0x4] sm:$0xf]
    %v104 = vld [vmem:[%s0 + $0x8] sm:$0xf]
    %v105 = vld [vmem:[%s0 + $0xc] sm:$0xf]
    %v110 = vunpack.c.l.b16 %v102
    %v111 = vunpack.c.l.b16 %v103
    %v112 = vunpack.c.l.b16 %v104
    %v113 = vunpack.c.l.b16 %v105
    %v114 = vpack.c.b16 %v111, %v110
    %v115 = vpack.c.b16 %v113, %v112
    %v119 = vsel %vm58, %v101, 0
    %121 = vmatpush.bf16.msra.mxu0 0
    %122 = vmatpush.bf16.msra.mxu0 0
    %123 = vmatpush.bf16.msra.mxu0 0
    %124 = vmatpush.bf16.msra.mxu0 0
    %125 = vmatpush.bf16.msra.mxu0 0
    %126 = vmatpush.bf16.msra.mxu0 0
    %127 = vmatpush.bf16.msra.mxu0 %v115
    %128 = vmatpush.bf16.msra.mxu0 %v114
    %129 = vmatmul.bf16.gmra.mxu0 %v119
    %v130 = vpop.f32.mrf.mxu0
    %v131 = vadd.f32 0.0, %v130
    %v132 = vpop.f32.mrf.mxu0
    %v133 = vadd.f32 0.0, %v132
    %134 = vdwg.mxu0
    %v135 = vld [vmem:[%s0 + $0x10] sm:$0xf]
    %v136 = vld [vmem:[%s0 + $0x14] sm:$0xf]
    %v137 = vld [vmem:[%s0 + $0x18] sm:$0xf]
    %v138 = vld [vmem:[%s0 + $0x1c] sm:$0xf]
    %v139 = vpack.c.bf16 %v131, %v131
    %v140 = vpack.c.bf16 %v133, %v133
    %v143 = vunpack.c.l.b16 %v139
    %v144 = vunpack.c.l.b16 %v140
    %v145 = vpack.c.b16 %v144, %v143
    %146 = vrot.lane.b32.xlu0 %v145, 96
    %v147 = vpop.permute.xlu0 %146
    %vm148 = vcmask 64512
    %v150 = vsel %vm148, %v145, 0
    %v153 = vsel %vm148, %v147, 0
    %155 = vmatpush.bf16.xpose.msra.mxu0 0
    %156 = vmatpush.bf16.xpose.msra.mxu0 0
    %157 = vmatpush.bf16.xpose.msra.mxu0 0
    %158 = vmatpush.bf16.xpose.msra.mxu0 0
    %159 = vmatpush.bf16.xpose.msra.mxu0 0
    %160 = vmatpush.bf16.xpose.msra.mxu0 0
    %161 = vmatpush.bf16.xpose.msra.mxu0 0
    %162 = vmatpush.bf16.xpose.msra.mxu0 %v153
    %163 = vmatmul.bf16.gmra.mxu0 %v150
    %v164 = vpop.f32.mrf.mxu0
    %v165 = vadd.f32 0.0, %v164
    %v166 = vpop.f32.mrf.mxu0
    %v167 = vadd.f32 0.0, %v166
    %168 = vdwg.mxu0
    %169 = vrot.lane.b32.xlu0 %v145, 120
    %v170 = vpop.permute.xlu0 %169
    %171 = vrot.lane.b32.xlu0 %v145, 88
    %v172 = vpop.permute.xlu0 %171
    %v174 = vsel %vm148, %v170, 0
    %v177 = vsel %vm148, %v172, 0
    %179 = vmatpush.bf16.xpose.msra.mxu0 0
    %180 = vmatpush.bf16.xpose.msra.mxu0 0
    %181 = vmatpush.bf16.xpose.msra.mxu0 0
    %182 = vmatpush.bf16.xpose.msra.mxu0 0
    %183 = vmatpush.bf16.xpose.msra.mxu0 0
    %184 = vmatpush.bf16.xpose.msra.mxu0 0
    %185 = vmatpush.bf16.xpose.msra.mxu0 0
    %186 = vmatpush.bf16.xpose.msra.mxu0 %v177
    %187 = vmatmul.bf16.gmra.mxu0 %v174
    %v188 = vpop.f32.mrf.mxu0
    %v189 = vadd.f32 0.0, %v188
    %v190 = vpop.f32.mrf.mxu0
    %v191 = vadd.f32 0.0, %v190
    %192 = vdwg.mxu0
    %193 = vrot.lane.b32.xlu0 %v145, 112
    %v194 = vpop.permute.xlu0 %193
    %195 = vrot.lane.b32.xlu0 %v145, 80
    %v196 = vpop.permute.xlu0 %195
    %v198 = vsel %vm148, %v194, 0
    %v201 = vsel %vm148, %v196, 0
    %203 = vmatpush.bf16.xpose.msra.mxu0 0
    %204 = vmatpush.bf16.xpose.msra.mxu0 0
    %205 = vmatpush.bf16.xpose.msra.mxu0 0
    %206 = vmatpush.bf16.xpose.msra.mxu0 0
    %207 = vmatpush.bf16.xpose.msra.mxu0 0
    %208 = vmatpush.bf16.xpose.msra.mxu0 0
    %209 = vmatpush.bf16.xpose.msra.mxu0 0
    %210 = vmatpush.bf16.xpose.msra.mxu0 %v201
    %211 = vmatmul.bf16.gmra.mxu0 %v198
    %v212 = vpop.f32.mrf.mxu0
    %v213 = vadd.f32 0.0, %v212
    %v214 = vpop.f32.mrf.mxu0
    %v215 = vadd.f32 0.0, %v214
    %216 = vdwg.mxu0
    %217 = vrot.lane.b32.xlu0 %v145, 104
    %v218 = vpop.permute.xlu0 %217
    %219 = vrot.lane.b32.xlu0 %v145, 72
    %v220 = vpop.permute.xlu0 %219
    %v222 = vsel %vm148, %v218, 0
    %v225 = vsel %vm148, %v220, 0
    %227 = vmatpush.bf16.xpose.msra.mxu0 0
    %228 = vmatpush.bf16.xpose.msra.mxu0 0
    %229 = vmatpush.bf16.xpose.msra.mxu0 0
    %230 = vmatpush.bf16.xpose.msra.mxu0 0
    %231 = vmatpush.bf16.xpose.msra.mxu0 0
    %232 = vmatpush.bf16.xpose.msra.mxu0 0
    %233 = vmatpush.bf16.xpose.msra.mxu0 0
    %234 = vmatpush.bf16.xpose.msra.mxu0 %v225
    %235 = vmatmul.bf16.gmra.mxu0 %v222
    %v236 = vpop.f32.mrf.mxu0
    %v237 = vadd.f32 0.0, %v236
    %v238 = vpop.f32.mrf.mxu0
    %v239 = vadd.f32 0.0, %v238
    %240 = vdwg.mxu0
    %v241 = vadd.f32 %v165, %v30
    %v242 = vadd.f32 %v167, %v31
    %v243 = vadd.f32 %v189, %v32
    %v244 = vadd.f32 %v191, %v33
    %v245 = vadd.f32 %v213, %v34
    %v246 = vadd.f32 %v215, %v35
    %v247 = vadd.f32 %v237, %v36
    %v248 = vadd.f32 %v239, %v37
    %vm249 = vcmask 130048
    %v250 = vsel %vm249, %v241, -inf
    %251 = vmax.xlane.f32.xlu0 %v250
    %v252 = vpop.xlane.xlu0 %251
    %v253 = vsel %vm249, %v242, -inf
    %254 = vmax.xlane.f32.xlu0 %v253
    %v255 = vpop.xlane.xlu0 %254
    %v256 = vsel %vm249, %v243, -inf
    %257 = vmax.xlane.f32.xlu0 %v256
    %v258 = vpop.xlane.xlu0 %257
    %v259 = vsel %vm249, %v244, -inf
    %260 = vmax.xlane.f32.xlu0 %v259
    %v261 = vpop.xlane.xlu0 %260
    %v262 = vsel %vm249, %v245, -inf
    %263 = vmax.xlane.f32.xlu0 %v262
    %v264 = vpop.xlane.xlu0 %263
    %v265 = vsel %vm249, %v246, -inf
    %266 = vmax.xlane.f32.xlu0 %v265
    %v267 = vpop.xlane.xlu0 %266
    %v268 = vsel %vm249, %v247, -inf
    %269 = vmax.xlane.f32.xlu0 %v268
    %v270 = vpop.xlane.xlu0 %269
    %v271 = vsel %vm249, %v248, -inf
    %272 = vmax.xlane.f32.xlu0 %v271
    %v273 = vpop.xlane.xlu0 %272
    %v274 = vsub.f32 %v241, %v252
    %v275 = vsub.f32 %v242, %v255
    %v276 = vsub.f32 %v243, %v258
    %v277 = vsub.f32 %v244, %v261
    %v278 = vsub.f32 %v245, %v264
    %v279 = vsub.f32 %v246, %v267
    %v280 = vsub.f32 %v247, %v270
    %v281 = vsub.f32 %v248, %v273
    %v282 = vmul.f32 %v274, 1.442695
    %v283 = vpow.pop %v282
    %v284 = vmul.f32 %v275, 1.442695
    %v285 = vpow.pop %v284
    %v286 = vmul.f32 %v276, 1.442695
    %v287 = vpow.pop %v286
    %v288 = vmul.f32 %v277, 1.442695
    %v289 = vpow.pop %v288
    %v290 = vmul.f32 %v278, 1.442695
    %v291 = vpow.pop %v290
    %v292 = vmul.f32 %v279, 1.442695
    %v293 = vpow.pop %v292
    %v294 = vmul.f32 %v280, 1.442695
    %v295 = vpow.pop %v294
    %v296 = vmul.f32 %v281, 1.442695
    %v297 = vpow.pop %v296
    %v298 = vsel %vm249, %v283, 0.0
    %299 = vadd.xlane.f32.xlu0 %v298
    %v300 = vpop.xlane.xlu0 %299
    %v301 = vsel %vm249, %v285, 0.0
    %302 = vadd.xlane.f32.xlu0 %v301
    %v303 = vpop.xlane.xlu0 %302
    %v304 = vsel %vm249, %v287, 0.0
    %305 = vadd.xlane.f32.xlu0 %v304
    %v306 = vpop.xlane.xlu0 %305
    %v307 = vsel %vm249, %v289, 0.0
    %308 = vadd.xlane.f32.xlu0 %v307
    %v309 = vpop.xlane.xlu0 %308
    %v310 = vsel %vm249, %v291, 0.0
    %311 = vadd.xlane.f32.xlu0 %v310
    %v312 = vpop.xlane.xlu0 %311
    %v313 = vsel %vm249, %v293, 0.0
    %314 = vadd.xlane.f32.xlu0 %v313
    %v315 = vpop.xlane.xlu0 %314
    %v316 = vsel %vm249, %v295, 0.0
    %317 = vadd.xlane.f32.xlu0 %v316
    %v318 = vpop.xlane.xlu0 %317
    %v319 = vsel %vm249, %v297, 0.0
    %320 = vadd.xlane.f32.xlu0 %v319
    %v321 = vpop.xlane.xlu0 %320
    %v322 = vrcp.pop %v300
    %v323 = vrcp.pop %v303
    %v324 = vrcp.pop %v306
    %v325 = vrcp.pop %v309
    %v326 = vrcp.pop %v312
    %v327 = vrcp.pop %v315
    %v328 = vrcp.pop %v318
    %v329 = vrcp.pop %v321
    %v330 = vmul.f32 %v283, %v322
    %v331 = vmul.f32 %v285, %v323
    %v332 = vmul.f32 %v287, %v324
    %v333 = vmul.f32 %v289, %v325
    %v334 = vmul.f32 %v291, %v326
    %v335 = vmul.f32 %v293, %v327
    %v336 = vmul.f32 %v295, %v328
    %v337 = vmul.f32 %v297, %v329
    %v338 = vpack.c.bf16 %v330, %v330
    %v339 = vpack.c.bf16 %v331, %v331
    %v340 = vpack.c.bf16 %v332, %v332
    %v341 = vpack.c.bf16 %v333, %v333
    %v342 = vpack.c.bf16 %v334, %v334
    %v343 = vpack.c.bf16 %v335, %v335
    %v344 = vpack.c.bf16 %v336, %v336
    %v345 = vpack.c.bf16 %v337, %v337
    %v348 = vunpack.c.l.b16 %v338
    %v349 = vunpack.c.l.b16 %v339
    %v350 = vpack.c.b16 %v349, %v348
    %351 = vrot.lane.b32.xlu0 %v145, 64
    %v352 = vpop.permute.xlu0 %351
    %v355 = vsel %vm249, %v350, 0
    %357 = vmatpush.bf16.msra.mxu0 0
    %358 = vmatpush.bf16.msra.mxu0 0
    %359 = vmatpush.bf16.msra.mxu0 0
    %360 = vmatpush.bf16.msra.mxu0 0
    %361 = vmatpush.bf16.msra.mxu0 0
    %362 = vmatpush.bf16.msra.mxu0 0
    %363 = vmatpush.bf16.msra.mxu0 0
    %364 = vmatpush.bf16.msra.mxu0 %v352
    %365 = vmatmul.bf16.gmra.mxu0 %v355
    %v366 = vpop.f32.mrf.mxu0
    %v367 = vadd.f32 0.0, %v366
    %v368 = vpop.f32.mrf.mxu0
    %v369 = vadd.f32 0.0, %v368
    %370 = vdwg.mxu0
    %v373 = vunpack.c.l.b16 %v340
    %v374 = vunpack.c.l.b16 %v341
    %v375 = vpack.c.b16 %v374, %v373
    %376 = vrot.lane.b32.xlu0 %v145, 56
    %v377 = vpop.permute.xlu0 %376
    %v380 = vsel %vm249, %v375, 0
    %382 = vmatpush.bf16.msra.mxu0 0
    %383 = vmatpush.bf16.msra.mxu0 0
    %384 = vmatpush.bf16.msra.mxu0 0
    %385 = vmatpush.bf16.msra.mxu0 0
    %386 = vmatpush.bf16.msra.mxu0 0
    %387 = vmatpush.bf16.msra.mxu0 0
    %388 = vmatpush.bf16.msra.mxu0 0
    %389 = vmatpush.bf16.msra.mxu0 %v377
    %390 = vmatmul.bf16.gmra.mxu0 %v380
    %v391 = vpop.f32.mrf.mxu0
    %v392 = vadd.f32 0.0, %v391
    %v393 = vpop.f32.mrf.mxu0
    %v394 = vadd.f32 0.0, %v393
    %395 = vdwg.mxu0
    %v398 = vunpack.c.l.b16 %v342
    %v399 = vunpack.c.l.b16 %v343
    %v400 = vpack.c.b16 %v399, %v398
    %401 = vrot.lane.b32.xlu0 %v145, 48
    %v402 = vpop.permute.xlu0 %401
    %v405 = vsel %vm249, %v400, 0
    %407 = vmatpush.bf16.msra.mxu0 0
    %408 = vmatpush.bf16.msra.mxu0 0
    %409 = vmatpush.bf16.msra.mxu0 0
    %410 = vmatpush.bf16.msra.mxu0 0
    %411 = vmatpush.bf16.msra.mxu0 0
    %412 = vmatpush.bf16.msra.mxu0 0
    %413 = vmatpush.bf16.msra.mxu0 0
    %414 = vmatpush.bf16.msra.mxu0 %v402
    %415 = vmatmul.bf16.gmra.mxu0 %v405
    %v416 = vpop.f32.mrf.mxu0
    %v417 = vadd.f32 0.0, %v416
    %v418 = vpop.f32.mrf.mxu0
    %v419 = vadd.f32 0.0, %v418
    %420 = vdwg.mxu0
    %v423 = vunpack.c.l.b16 %v344
    %v424 = vunpack.c.l.b16 %v345
    %v425 = vpack.c.b16 %v424, %v423
    %426 = vrot.lane.b32.xlu0 %v145, 40
    %v427 = vpop.permute.xlu0 %426
    %v430 = vsel %vm249, %v425, 0
    %432 = vmatpush.bf16.msra.mxu0 0
    %433 = vmatpush.bf16.msra.mxu0 0
    %434 = vmatpush.bf16.msra.mxu0 0
    %435 = vmatpush.bf16.msra.mxu0 0
    %436 = vmatpush.bf16.msra.mxu0 0
    %437 = vmatpush.bf16.msra.mxu0 0
    %438 = vmatpush.bf16.msra.mxu0 0
    %439 = vmatpush.bf16.msra.mxu0 %v427
    %440 = vmatmul.bf16.gmra.mxu0 %v430
    %v441 = vpop.f32.mrf.mxu0
    %v442 = vadd.f32 0.0, %v441
    %v443 = vpop.f32.mrf.mxu0
    %v444 = vadd.f32 0.0, %v443
    %445 = vdwg.mxu0
    %448 = vrot.lane.b32.xlu0 %v392, 8
    %v449 = vpop.permute.xlu0 %448
    %450 = vrot.lane.b32.xlu0 %v394, 8
    %v451 = vpop.permute.xlu0 %450
    %456 = vrot.lane.b32.xlu0 %v417, 16
    %v457 = vpop.permute.xlu0 %456
    %458 = vrot.lane.b32.xlu0 %v419, 16
    %v459 = vpop.permute.xlu0 %458
    %464 = vrot.lane.b32.xlu0 %v442, 24
    %v465 = vpop.permute.xlu0 %464
    %466 = vrot.lane.b32.xlu0 %v444, 24
    %v467 = vpop.permute.xlu0 %466
    %v470 = vsel %vm148, %v367, %v449
    %v471 = vsel %vm148, %v369, %v451
    %v472 = vsel %vm249, %v470, %v457
    %v473 = vsel %vm249, %v471, %v459
    %vm474 = vcmask 195584
    %v475 = vsel %vm474, %v472, %v465
    %v476 = vsel %vm474, %v473, %v467
    %v477 = vpack.c.bf16 %v476, %v475
    %v482 = vunpack.c.l.b16 %v135
    %v483 = vunpack.c.l.b16 %v136
    %v484 = vunpack.c.l.b16 %v137
    %v485 = vunpack.c.l.b16 %v138
    %v486 = vpack.c.b16 %v483, %v482
    %v487 = vpack.c.b16 %v485, %v484
    %v491 = vsel %vm58, %v477, 0
    %493 = vmatpush.bf16.msra.mxu0 0
    %494 = vmatpush.bf16.msra.mxu0 0
    %495 = vmatpush.bf16.msra.mxu0 0
    %496 = vmatpush.bf16.msra.mxu0 0
    %497 = vmatpush.bf16.msra.mxu0 0
    %498 = vmatpush.bf16.msra.mxu0 0
    %499 = vmatpush.bf16.msra.mxu0 %v487
    %500 = vmatpush.bf16.msra.mxu0 %v486
    %501 = vmatmul.bf16.gmra.mxu0 %v491
    %v502 = vpop.f32.mrf.mxu0
    %v503 = vadd.f32 0.0, %v502
    %v504 = vpop.f32.mrf.mxu0
    %v505 = vadd.f32 0.0, %v504
    %506 = vdwg.mxu0
    %v507 = vadd.f32 %v54, %v503
    %v508 = vadd.f32 %v55, %v505
    %v509 = vmul.f32 %v507, %v507
    %v510 = vmul.f32 %v508, %v508
    %v511 = vsel %vm58, %v509, 0.0
    %512 = vadd.xlane.f32.xlu0 %v511
    %v513 = vpop.xlane.xlu0 %512
    %v514 = vsel %vm58, %v510, 0.0
    %515 = vadd.xlane.f32.xlu0 %v514
    %v516 = vpop.xlane.xlu0 %515
    %v517 = vmul.f32 %v513, %v71
    %v518 = vmul.f32 %v516, %v71
    %v519 = vadd.f32 %v517, 1e-06
    %v520 = vadd.f32 %v518, 1e-06
    %v521 = vrsqrt.pop %v519
    %v522 = vmul.f32 %v521, %v519
    %v523 = vmul.f32 %v522, %v521
    %v524 = vmul.f32 0.5, %v523
    %v525 = vsub.f32 1.5, %v524
    %v526 = vmul.f32 %v521, %v525
    %vm527 = vweird.f32 %v519
    %vm528 = vweird.f32 %v521
    %vm529 = vmor %vm527, %vm528
    %v530 = vsel %vm529, %v521, %v526
    %v531 = vrsqrt.pop %v520
    %v532 = vmul.f32 %v531, %v520
    %v533 = vmul.f32 %v532, %v531
    %v534 = vmul.f32 0.5, %v533
    %v535 = vsub.f32 1.5, %v534
    %v536 = vmul.f32 %v531, %v535
    %vm537 = vweird.f32 %v520
    %vm538 = vweird.f32 %v531
    %vm539 = vmor %vm537, %vm538
    %v540 = vsel %vm539, %v531, %v536
    %v541 = vmul.f32 %v507, %v530
    %v542 = vmul.f32 %v508, %v540
    %v543 = vperm.slane %v28, 2
    %v544 = vmul.f32 %v541, %v543
    %v545 = vmul.f32 %v542, %v543
    %v546 = vpack.c.bf16 %v545, %v544
    %v547 = vld [vmem:[%s0 + $0x20] sm:$0xf]
    %v548 = vld [vmem:[%s0 + $0x24] sm:$0xf]
    %v549 = vld [vmem:[%s0 + $0x28] sm:$0xf]
    %v550 = vld [vmem:[%s0 + $0x2c] sm:$0xf]
    %v555 = vunpack.c.l.b16 %v547
    %v556 = vunpack.c.l.b16 %v548
    %v557 = vunpack.c.l.b16 %v549
    %v558 = vunpack.c.l.b16 %v550
    %v559 = vpack.c.b16 %v556, %v555
    %v560 = vpack.c.b16 %v558, %v557
    %v564 = vsel %vm58, %v546, 0
    %566 = vmatpush.bf16.msra.mxu0 0
    %567 = vmatpush.bf16.msra.mxu0 0
    %568 = vmatpush.bf16.msra.mxu0 0
    %569 = vmatpush.bf16.msra.mxu0 0
    %570 = vmatpush.bf16.msra.mxu0 0
    %571 = vmatpush.bf16.msra.mxu0 0
    %572 = vmatpush.bf16.msra.mxu0 %v560
    %573 = vmatpush.bf16.msra.mxu0 %v559
    %574 = vmatmul.bf16.gmra.mxu0 %v564
    %v575 = vpop.f32.mrf.mxu0
    %v576 = vadd.f32 0.0, %v575
    %v577 = vpop.f32.mrf.mxu0
    %v578 = vadd.f32 0.0, %v577
    %579 = vdwg.mxu0
    %v580 = vmax.f32 %v576, 0.0
    %v581 = vmax.f32 %v578, 0.0
    %v582 = vpack.c.bf16 %v581, %v580
    %v583 = vld [vmem:[%s0 + $0x30] sm:$0xf]
    %v584 = vld [vmem:[%s0 + $0x34] sm:$0xf]
    %v585 = vld [vmem:[%s0 + $0x38] sm:$0xf]
    %v586 = vld [vmem:[%s0 + $0x3c] sm:$0xf]
    %v587 = vld [vmem:[%s0 + $0x40] sm:$0xf]
    %v588 = vld [vmem:[%s0 + $0x44] sm:$0xf]
    %v589 = vld [vmem:[%s0 + $0x48] sm:$0xf]
    %v590 = vld [vmem:[%s0 + $0x4c] sm:$0xf]
    %v599 = vunpack.c.l.b16 %v583
    %v600 = vunpack.c.l.b16 %v584
    %v601 = vunpack.c.l.b16 %v585
    %v602 = vunpack.c.l.b16 %v586
    %v603 = vunpack.c.l.b16 %v587
    %v604 = vunpack.c.l.b16 %v588
    %v605 = vunpack.c.l.b16 %v589
    %v606 = vunpack.c.l.b16 %v590
    %v607 = vpack.c.b16 %v600, %v599
    %v608 = vpack.c.b16 %v602, %v601
    %v609 = vpack.c.b16 %v604, %v603
    %v610 = vpack.c.b16 %v606, %v605
    %vm615 = vcmask 523264
    %v617 = vsel %vm615, %v582, 0
    %619 = vmatpush.bf16.msra.mxu0 0
    %620 = vmatpush.bf16.msra.mxu0 0
    %621 = vmatpush.bf16.msra.mxu0 0
    %622 = vmatpush.bf16.msra.mxu0 0
    %623 = vmatpush.bf16.msra.mxu0 %v610
    %624 = vmatpush.bf16.msra.mxu0 %v609
    %625 = vmatpush.bf16.msra.mxu0 %v608
    %626 = vmatpush.bf16.msra.mxu0 %v607
    %627 = vmatmul.bf16.gmra.mxu0 %v617
    %v628 = vpop.f32.mrf.mxu0
    %v629 = vadd.f32 0.0, %v628
    %v630 = vpop.f32.mrf.mxu0
    %v631 = vadd.f32 0.0, %v630
    %632 = vdwg.mxu0
    %v633 = vadd.f32 %v507, %v629
    %v634 = vadd.f32 %v508, %v631
    %v635 = vmul.f32 %v633, %v633
    %v636 = vmul.f32 %v634, %v634
    %v637 = vsel %vm58, %v635, 0.0
    %638 = vadd.xlane.f32.xlu0 %v637
    %v639 = vpop.xlane.xlu0 %638
    %v640 = vsel %vm58, %v636, 0.0
    %641 = vadd.xlane.f32.xlu0 %v640
    %v642 = vpop.xlane.xlu0 %641
    %v643 = vmul.f32 %v639, %v71
    %v644 = vmul.f32 %v642, %v71
    %v645 = vadd.f32 %v643, 1e-06
    %v646 = vadd.f32 %v644, 1e-06
    %v647 = vrsqrt.pop %v645
    %v648 = vmul.f32 %v647, %v645
    %v649 = vmul.f32 %v648, %v647
    %v650 = vmul.f32 0.5, %v649
    %v651 = vsub.f32 1.5, %v650
    %v652 = vmul.f32 %v647, %v651
    %vm653 = vweird.f32 %v645
    %vm654 = vweird.f32 %v647
    %vm655 = vmor %vm653, %vm654
    %v656 = vsel %vm655, %v647, %v652
    %v657 = vrsqrt.pop %v646
    %v658 = vmul.f32 %v657, %v646
    %v659 = vmul.f32 %v658, %v657
    %v660 = vmul.f32 0.5, %v659
    %v661 = vsub.f32 1.5, %v660
    %v662 = vmul.f32 %v657, %v661
    %vm663 = vweird.f32 %v646
    %vm664 = vweird.f32 %v657
    %vm665 = vmor %vm663, %vm664
    %v666 = vsel %vm665, %v657, %v662
    %v667 = vmul.f32 %v633, %v656
    %v668 = vmul.f32 %v634, %v666
    %v669 = vperm.slane %v28, 1
    %v670 = vmul.f32 %v667, %v669
    %v671 = vmul.f32 %v668, %v669
    %v672 = vpack.c.bf16 %v671, %v670
    %v673 = vld [vmem:[%s0 + $0xc0] sm:$0xf]
    %v674 = vld [vmem:[%s0 + $0xc4] sm:$0xf]
    %v675 = vld [vmem:[%s0 + $0xc8] sm:$0xf]
    %v676 = vld [vmem:[%s0 + $0xcc] sm:$0xf]
    %v681 = vunpack.c.l.b16 %v673
    %v682 = vunpack.c.l.b16 %v674
    %v683 = vunpack.c.l.b16 %v675
    %v684 = vunpack.c.l.b16 %v676
    %v685 = vpack.c.b16 %v682, %v681
    %v686 = vpack.c.b16 %v684, %v683
    %v690 = vsel %vm58, %v672, 0
    %692 = vmatpush.bf16.msra.mxu0 0
    %693 = vmatpush.bf16.msra.mxu0 0
    %694 = vmatpush.bf16.msra.mxu0 0
    %695 = vmatpush.bf16.msra.mxu0 0
    %696 = vmatpush.bf16.msra.mxu0 0
    %697 = vmatpush.bf16.msra.mxu0 0
    %698 = vmatpush.bf16.msra.mxu0 %v686
    %699 = vmatpush.bf16.msra.mxu0 %v685
    %700 = vmatmul.bf16.gmra.mxu0 %v690
    %v701 = vpop.f32.mrf.mxu0
    %v702 = vadd.f32 0.0, %v701
    %v703 = vpop.f32.mrf.mxu0
    %v704 = vadd.f32 0.0, %v703
    %705 = vdwg.mxu0
    %v706 = vld [vmem:[%s0 + $0xd0] sm:$0xf]
    %v707 = vld [vmem:[%s0 + $0xd4] sm:$0xf]
    %v708 = vld [vmem:[%s0 + $0xd8] sm:$0xf]
    %v709 = vld [vmem:[%s0 + $0xdc] sm:$0xf]
    %v710 = vpack.c.bf16 %v702, %v702
    %v711 = vpack.c.bf16 %v704, %v704
    %v714 = vunpack.c.l.b16 %v710
    %v715 = vunpack.c.l.b16 %v711
    %v716 = vpack.c.b16 %v715, %v714
    %717 = vrot.lane.b32.xlu0 %v716, 96
    %v718 = vpop.permute.xlu0 %717
    %v720 = vsel %vm148, %v716, 0
    %v723 = vsel %vm148, %v718, 0
    %725 = vmatpush.bf16.xpose.msra.mxu0 0
    %726 = vmatpush.bf16.xpose.msra.mxu0 0
    %727 = vmatpush.bf16.xpose.msra.mxu0 0
    %728 = vmatpush.bf16.xpose.msra.mxu0 0
    %729 = vmatpush.bf16.xpose.msra.mxu0 0
    %730 = vmatpush.bf16.xpose.msra.mxu0 0
    %731 = vmatpush.bf16.xpose.msra.mxu0 0
    %732 = vmatpush.bf16.xpose.msra.mxu0 %v723
    %733 = vmatmul.bf16.gmra.mxu0 %v720
    %v734 = vpop.f32.mrf.mxu0
    %v735 = vadd.f32 0.0, %v734
    %v736 = vpop.f32.mrf.mxu0
    %v737 = vadd.f32 0.0, %v736
    %738 = vdwg.mxu0
    %739 = vrot.lane.b32.xlu0 %v716, 120
    %v740 = vpop.permute.xlu0 %739
    %741 = vrot.lane.b32.xlu0 %v716, 88
    %v742 = vpop.permute.xlu0 %741
    %v744 = vsel %vm148, %v740, 0
    %v747 = vsel %vm148, %v742, 0
    %749 = vmatpush.bf16.xpose.msra.mxu0 0
    %750 = vmatpush.bf16.xpose.msra.mxu0 0
    %751 = vmatpush.bf16.xpose.msra.mxu0 0
    %752 = vmatpush.bf16.xpose.msra.mxu0 0
    %753 = vmatpush.bf16.xpose.msra.mxu0 0
    %754 = vmatpush.bf16.xpose.msra.mxu0 0
    %755 = vmatpush.bf16.xpose.msra.mxu0 0
    %756 = vmatpush.bf16.xpose.msra.mxu0 %v747
    %757 = vmatmul.bf16.gmra.mxu0 %v744
    %v758 = vpop.f32.mrf.mxu0
    %v759 = vadd.f32 0.0, %v758
    %v760 = vpop.f32.mrf.mxu0
    %v761 = vadd.f32 0.0, %v760
    %762 = vdwg.mxu0
    %763 = vrot.lane.b32.xlu0 %v716, 112
    %v764 = vpop.permute.xlu0 %763
    %765 = vrot.lane.b32.xlu0 %v716, 80
    %v766 = vpop.permute.xlu0 %765
    %v768 = vsel %vm148, %v764, 0
    %v771 = vsel %vm148, %v766, 0
    %773 = vmatpush.bf16.xpose.msra.mxu0 0
    %774 = vmatpush.bf16.xpose.msra.mxu0 0
    %775 = vmatpush.bf16.xpose.msra.mxu0 0
    %776 = vmatpush.bf16.xpose.msra.mxu0 0
    %777 = vmatpush.bf16.xpose.msra.mxu0 0
    %778 = vmatpush.bf16.xpose.msra.mxu0 0
    %779 = vmatpush.bf16.xpose.msra.mxu0 0
    %780 = vmatpush.bf16.xpose.msra.mxu0 %v771
    %781 = vmatmul.bf16.gmra.mxu0 %v768
    %v782 = vpop.f32.mrf.mxu0
    %v783 = vadd.f32 0.0, %v782
    %v784 = vpop.f32.mrf.mxu0
    %v785 = vadd.f32 0.0, %v784
    %786 = vdwg.mxu0
    %787 = vrot.lane.b32.xlu0 %v716, 104
    %v788 = vpop.permute.xlu0 %787
    %789 = vrot.lane.b32.xlu0 %v716, 72
    %v790 = vpop.permute.xlu0 %789
    %v792 = vsel %vm148, %v788, 0
    %v795 = vsel %vm148, %v790, 0
    %797 = vmatpush.bf16.xpose.msra.mxu0 0
    %798 = vmatpush.bf16.xpose.msra.mxu0 0
    %799 = vmatpush.bf16.xpose.msra.mxu0 0
    %800 = vmatpush.bf16.xpose.msra.mxu0 0
    %801 = vmatpush.bf16.xpose.msra.mxu0 0
    %802 = vmatpush.bf16.xpose.msra.mxu0 0
    %803 = vmatpush.bf16.xpose.msra.mxu0 0
    %804 = vmatpush.bf16.xpose.msra.mxu0 %v795
    %805 = vmatmul.bf16.gmra.mxu0 %v792
    %v806 = vpop.f32.mrf.mxu0
    %v807 = vadd.f32 0.0, %v806
    %v808 = vpop.f32.mrf.mxu0
    %v809 = vadd.f32 0.0, %v808
    %810 = vdwg.mxu0
    %v811 = vadd.f32 %v735, %v30
    %v812 = vadd.f32 %v737, %v31
    %v813 = vadd.f32 %v759, %v32
    %v814 = vadd.f32 %v761, %v33
    %v815 = vadd.f32 %v783, %v34
    %v816 = vadd.f32 %v785, %v35
    %v817 = vadd.f32 %v807, %v36
    %v818 = vadd.f32 %v809, %v37
    %v819 = vsel %vm249, %v811, -inf
    %820 = vmax.xlane.f32.xlu0 %v819
    %v821 = vpop.xlane.xlu0 %820
    %v822 = vsel %vm249, %v812, -inf
    %823 = vmax.xlane.f32.xlu0 %v822
    %v824 = vpop.xlane.xlu0 %823
    %v825 = vsel %vm249, %v813, -inf
    %826 = vmax.xlane.f32.xlu0 %v825
    %v827 = vpop.xlane.xlu0 %826
    %v828 = vsel %vm249, %v814, -inf
    %829 = vmax.xlane.f32.xlu0 %v828
    %v830 = vpop.xlane.xlu0 %829
    %v831 = vsel %vm249, %v815, -inf
    %832 = vmax.xlane.f32.xlu0 %v831
    %v833 = vpop.xlane.xlu0 %832
    %v834 = vsel %vm249, %v816, -inf
    %835 = vmax.xlane.f32.xlu0 %v834
    %v836 = vpop.xlane.xlu0 %835
    %v837 = vsel %vm249, %v817, -inf
    %838 = vmax.xlane.f32.xlu0 %v837
    %v839 = vpop.xlane.xlu0 %838
    %v840 = vsel %vm249, %v818, -inf
    %841 = vmax.xlane.f32.xlu0 %v840
    %v842 = vpop.xlane.xlu0 %841
    %v843 = vsub.f32 %v811, %v821
    %v844 = vsub.f32 %v812, %v824
    %v845 = vsub.f32 %v813, %v827
    %v846 = vsub.f32 %v814, %v830
    %v847 = vsub.f32 %v815, %v833
    %v848 = vsub.f32 %v816, %v836
    %v849 = vsub.f32 %v817, %v839
    %v850 = vsub.f32 %v818, %v842
    %v851 = vmul.f32 %v843, 1.442695
    %v852 = vpow.pop %v851
    %v853 = vmul.f32 %v844, 1.442695
    %v854 = vpow.pop %v853
    %v855 = vmul.f32 %v845, 1.442695
    %v856 = vpow.pop %v855
    %v857 = vmul.f32 %v846, 1.442695
    %v858 = vpow.pop %v857
    %v859 = vmul.f32 %v847, 1.442695
    %v860 = vpow.pop %v859
    %v861 = vmul.f32 %v848, 1.442695
    %v862 = vpow.pop %v861
    %v863 = vmul.f32 %v849, 1.442695
    %v864 = vpow.pop %v863
    %v865 = vmul.f32 %v850, 1.442695
    %v866 = vpow.pop %v865
    %v867 = vsel %vm249, %v852, 0.0
    %868 = vadd.xlane.f32.xlu0 %v867
    %v869 = vpop.xlane.xlu0 %868
    %v870 = vsel %vm249, %v854, 0.0
    %871 = vadd.xlane.f32.xlu0 %v870
    %v872 = vpop.xlane.xlu0 %871
    %v873 = vsel %vm249, %v856, 0.0
    %874 = vadd.xlane.f32.xlu0 %v873
    %v875 = vpop.xlane.xlu0 %874
    %v876 = vsel %vm249, %v858, 0.0
    %877 = vadd.xlane.f32.xlu0 %v876
    %v878 = vpop.xlane.xlu0 %877
    %v879 = vsel %vm249, %v860, 0.0
    %880 = vadd.xlane.f32.xlu0 %v879
    %v881 = vpop.xlane.xlu0 %880
    %v882 = vsel %vm249, %v862, 0.0
    %883 = vadd.xlane.f32.xlu0 %v882
    %v884 = vpop.xlane.xlu0 %883
    %v885 = vsel %vm249, %v864, 0.0
    %886 = vadd.xlane.f32.xlu0 %v885
    %v887 = vpop.xlane.xlu0 %886
    %v888 = vsel %vm249, %v866, 0.0
    %889 = vadd.xlane.f32.xlu0 %v888
    %v890 = vpop.xlane.xlu0 %889
    %v891 = vrcp.pop %v869
    %v892 = vrcp.pop %v872
    %v893 = vrcp.pop %v875
    %v894 = vrcp.pop %v878
    %v895 = vrcp.pop %v881
    %v896 = vrcp.pop %v884
    %v897 = vrcp.pop %v887
    %v898 = vrcp.pop %v890
    %v899 = vmul.f32 %v852, %v891
    %v900 = vmul.f32 %v854, %v892
    %v901 = vmul.f32 %v856, %v893
    %v902 = vmul.f32 %v858, %v894
    %v903 = vmul.f32 %v860, %v895
    %v904 = vmul.f32 %v862, %v896
    %v905 = vmul.f32 %v864, %v897
    %v906 = vmul.f32 %v866, %v898
    %v907 = vpack.c.bf16 %v899, %v899
    %v908 = vpack.c.bf16 %v900, %v900
    %v909 = vpack.c.bf16 %v901, %v901
    %v910 = vpack.c.bf16 %v902, %v902
    %v911 = vpack.c.bf16 %v903, %v903
    %v912 = vpack.c.bf16 %v904, %v904
    %v913 = vpack.c.bf16 %v905, %v905
    %v914 = vpack.c.bf16 %v906, %v906
    %v917 = vunpack.c.l.b16 %v907
    %v918 = vunpack.c.l.b16 %v908
    %v919 = vpack.c.b16 %v918, %v917
    %920 = vrot.lane.b32.xlu0 %v716, 64
    %v921 = vpop.permute.xlu0 %920
    %v924 = vsel %vm249, %v919, 0
    %926 = vmatpush.bf16.msra.mxu0 0
    %927 = vmatpush.bf16.msra.mxu0 0
    %928 = vmatpush.bf16.msra.mxu0 0
    %929 = vmatpush.bf16.msra.mxu0 0
    %930 = vmatpush.bf16.msra.mxu0 0
    %931 = vmatpush.bf16.msra.mxu0 0
    %932 = vmatpush.bf16.msra.mxu0 0
    %933 = vmatpush.bf16.msra.mxu0 %v921
    %934 = vmatmul.bf16.gmra.mxu0 %v924
    %v935 = vpop.f32.mrf.mxu0
    %v936 = vadd.f32 0.0, %v935
    %v937 = vpop.f32.mrf.mxu0
    %v938 = vadd.f32 0.0, %v937
    %939 = vdwg.mxu0
    %v942 = vunpack.c.l.b16 %v909
    %v943 = vunpack.c.l.b16 %v910
    %v944 = vpack.c.b16 %v943, %v942
    %945 = vrot.lane.b32.xlu0 %v716, 56
    %v946 = vpop.permute.xlu0 %945
    %v949 = vsel %vm249, %v944, 0
    %951 = vmatpush.bf16.msra.mxu0 0
    %952 = vmatpush.bf16.msra.mxu0 0
    %953 = vmatpush.bf16.msra.mxu0 0
    %954 = vmatpush.bf16.msra.mxu0 0
    %955 = vmatpush.bf16.msra.mxu0 0
    %956 = vmatpush.bf16.msra.mxu0 0
    %957 = vmatpush.bf16.msra.mxu0 0
    %958 = vmatpush.bf16.msra.mxu0 %v946
    %959 = vmatmul.bf16.gmra.mxu0 %v949
    %v960 = vpop.f32.mrf.mxu0
    %v961 = vadd.f32 0.0, %v960
    %v962 = vpop.f32.mrf.mxu0
    %v963 = vadd.f32 0.0, %v962
    %964 = vdwg.mxu0
    %v967 = vunpack.c.l.b16 %v911
    %v968 = vunpack.c.l.b16 %v912
    %v969 = vpack.c.b16 %v968, %v967
    %970 = vrot.lane.b32.xlu0 %v716, 48
    %v971 = vpop.permute.xlu0 %970
    %v974 = vsel %vm249, %v969, 0
    %976 = vmatpush.bf16.msra.mxu0 0
    %977 = vmatpush.bf16.msra.mxu0 0
    %978 = vmatpush.bf16.msra.mxu0 0
    %979 = vmatpush.bf16.msra.mxu0 0
    %980 = vmatpush.bf16.msra.mxu0 0
    %981 = vmatpush.bf16.msra.mxu0 0
    %982 = vmatpush.bf16.msra.mxu0 0
    %983 = vmatpush.bf16.msra.mxu0 %v971
    %984 = vmatmul.bf16.gmra.mxu0 %v974
    %v985 = vpop.f32.mrf.mxu0
    %v986 = vadd.f32 0.0, %v985
    %v987 = vpop.f32.mrf.mxu0
    %v988 = vadd.f32 0.0, %v987
    %989 = vdwg.mxu0
    %v992 = vunpack.c.l.b16 %v913
    %v993 = vunpack.c.l.b16 %v914
    %v994 = vpack.c.b16 %v993, %v992
    %995 = vrot.lane.b32.xlu0 %v716, 40
    %v996 = vpop.permute.xlu0 %995
    %v999 = vsel %vm249, %v994, 0
    %1001 = vmatpush.bf16.msra.mxu0 0
    %1002 = vmatpush.bf16.msra.mxu0 0
    %1003 = vmatpush.bf16.msra.mxu0 0
    %1004 = vmatpush.bf16.msra.mxu0 0
    %1005 = vmatpush.bf16.msra.mxu0 0
    %1006 = vmatpush.bf16.msra.mxu0 0
    %1007 = vmatpush.bf16.msra.mxu0 0
    %1008 = vmatpush.bf16.msra.mxu0 %v996
    %1009 = vmatmul.bf16.gmra.mxu0 %v999
    %v1010 = vpop.f32.mrf.mxu0
    %v1011 = vadd.f32 0.0, %v1010
    %v1012 = vpop.f32.mrf.mxu0
    %v1013 = vadd.f32 0.0, %v1012
    %1014 = vdwg.mxu0
    %1017 = vrot.lane.b32.xlu0 %v961, 8
    %v1018 = vpop.permute.xlu0 %1017
    %1019 = vrot.lane.b32.xlu0 %v963, 8
    %v1020 = vpop.permute.xlu0 %1019
    %1025 = vrot.lane.b32.xlu0 %v986, 16
    %v1026 = vpop.permute.xlu0 %1025
    %1027 = vrot.lane.b32.xlu0 %v988, 16
    %v1028 = vpop.permute.xlu0 %1027
    %1033 = vrot.lane.b32.xlu0 %v1011, 24
    %v1034 = vpop.permute.xlu0 %1033
    %1035 = vrot.lane.b32.xlu0 %v1013, 24
    %v1036 = vpop.permute.xlu0 %1035
    %v1039 = vsel %vm148, %v936, %v1018
    %v1040 = vsel %vm148, %v938, %v1020
    %v1041 = vsel %vm249, %v1039, %v1026
    %v1042 = vsel %vm249, %v1040, %v1028
    %v1043 = vsel %vm474, %v1041, %v1034
    %v1044 = vsel %vm474, %v1042, %v1036
    %v1045 = vpack.c.bf16 %v1044, %v1043
    %v1050 = vunpack.c.l.b16 %v706
    %v1051 = vunpack.c.l.b16 %v707
    %v1052 = vunpack.c.l.b16 %v708
    %v1053 = vunpack.c.l.b16 %v709
    %v1054 = vpack.c.b16 %v1051, %v1050
    %v1055 = vpack.c.b16 %v1053, %v1052
    %v1059 = vsel %vm58, %v1045, 0
    %1061 = vmatpush.bf16.msra.mxu0 0
    %1062 = vmatpush.bf16.msra.mxu0 0
    %1063 = vmatpush.bf16.msra.mxu0 0
    %1064 = vmatpush.bf16.msra.mxu0 0
    %1065 = vmatpush.bf16.msra.mxu0 0
    %1066 = vmatpush.bf16.msra.mxu0 0
    %1067 = vmatpush.bf16.msra.mxu0 %v1055
    %1068 = vmatpush.bf16.msra.mxu0 %v1054
    %1069 = vmatmul.bf16.gmra.mxu0 %v1059
    %v1070 = vpop.f32.mrf.mxu0
    %v1071 = vadd.f32 0.0, %v1070
    %v1072 = vpop.f32.mrf.mxu0
    %v1073 = vadd.f32 0.0, %v1072
    %1074 = vdwg.mxu0
    %v1075 = vadd.f32 %v633, %v1071
    %v1076 = vadd.f32 %v634, %v1073
    %v1077 = vmul.f32 %v1075, %v1075
    %v1078 = vmul.f32 %v1076, %v1076
    %v1079 = vsel %vm58, %v1077, 0.0
    %1080 = vadd.xlane.f32.xlu0 %v1079
    %v1081 = vpop.xlane.xlu0 %1080
    %v1082 = vsel %vm58, %v1078, 0.0
    %1083 = vadd.xlane.f32.xlu0 %v1082
    %v1084 = vpop.xlane.xlu0 %1083
    %v1085 = vmul.f32 %v1081, %v71
    %v1086 = vmul.f32 %v1084, %v71
    %v1087 = vadd.f32 %v1085, 1e-06
    %v1088 = vadd.f32 %v1086, 1e-06
    %v1089 = vrsqrt.pop %v1087
    %v1090 = vmul.f32 %v1089, %v1087
    %v1091 = vmul.f32 %v1090, %v1089
    %v1092 = vmul.f32 0.5, %v1091
    %v1093 = vsub.f32 1.5, %v1092
    %v1094 = vmul.f32 %v1089, %v1093
    %vm1095 = vweird.f32 %v1087
    %vm1096 = vweird.f32 %v1089
    %vm1097 = vmor %vm1095, %vm1096
    %v1098 = vsel %vm1097, %v1089, %v1094
    %v1099 = vrsqrt.pop %v1088
    %v1100 = vmul.f32 %v1099, %v1088
    %v1101 = vmul.f32 %v1100, %v1099
    %v1102 = vmul.f32 0.5, %v1101
    %v1103 = vsub.f32 1.5, %v1102
    %v1104 = vmul.f32 %v1099, %v1103
    %vm1105 = vweird.f32 %v1088
    %vm1106 = vweird.f32 %v1099
    %vm1107 = vmor %vm1105, %vm1106
    %v1108 = vsel %vm1107, %v1099, %v1104
    %v1109 = vmul.f32 %v1075, %v1098
    %v1110 = vmul.f32 %v1076, %v1108
    %v1111 = vperm.slane %v28, 3
    %v1112 = vmul.f32 %v1109, %v1111
    %v1113 = vmul.f32 %v1110, %v1111
    %v1114 = vpack.c.bf16 %v1113, %v1112
    %v1115 = vld [vmem:[%s0 + $0xe0] sm:$0xf]
    %v1116 = vld [vmem:[%s0 + $0xe4] sm:$0xf]
    %v1117 = vld [vmem:[%s0 + $0xe8] sm:$0xf]
    %v1118 = vld [vmem:[%s0 + $0xec] sm:$0xf]
    %v1123 = vunpack.c.l.b16 %v1115
    %v1124 = vunpack.c.l.b16 %v1116
    %v1125 = vunpack.c.l.b16 %v1117
    %v1126 = vunpack.c.l.b16 %v1118
    %v1127 = vpack.c.b16 %v1124, %v1123
    %v1128 = vpack.c.b16 %v1126, %v1125
    %v1132 = vsel %vm58, %v1114, 0
    %1134 = vmatpush.bf16.msra.mxu0 0
    %1135 = vmatpush.bf16.msra.mxu0 0
    %1136 = vmatpush.bf16.msra.mxu0 0
    %1137 = vmatpush.bf16.msra.mxu0 0
    %1138 = vmatpush.bf16.msra.mxu0 0
    %1139 = vmatpush.bf16.msra.mxu0 0
    %1140 = vmatpush.bf16.msra.mxu0 %v1128
    %1141 = vmatpush.bf16.msra.mxu0 %v1127
    %1142 = vmatmul.bf16.gmra.mxu0 %v1132
    %v1143 = vpop.f32.mrf.mxu0
    %v1144 = vadd.f32 0.0, %v1143
    %v1145 = vpop.f32.mrf.mxu0
    %v1146 = vadd.f32 0.0, %v1145
    %1147 = vdwg.mxu0
    %v1148 = vmax.f32 %v1144, 0.0
    %v1149 = vmax.f32 %v1146, 0.0
    %v1150 = vpack.c.bf16 %v1149, %v1148
    %v1151 = vld [vmem:[%s0 + $0xf0] sm:$0xf]
    %v1152 = vld [vmem:[%s0 + $0xf4] sm:$0xf]
    %v1153 = vld [vmem:[%s0 + $0xf8] sm:$0xf]
    %v1154 = vld [vmem:[%s0 + $0xfc] sm:$0xf]
    %v1155 = vld [vmem:[%s0 + $0x100] sm:$0xf]
    %v1156 = vld [vmem:[%s0 + $0x104] sm:$0xf]
    %v1157 = vld [vmem:[%s0 + $0x108] sm:$0xf]
    %v1158 = vld [vmem:[%s0 + $0x10c] sm:$0xf]
    %v1167 = vunpack.c.l.b16 %v1151
    %v1168 = vunpack.c.l.b16 %v1152
    %v1169 = vunpack.c.l.b16 %v1153
    %v1170 = vunpack.c.l.b16 %v1154
    %v1171 = vunpack.c.l.b16 %v1155
    %v1172 = vunpack.c.l.b16 %v1156
    %v1173 = vunpack.c.l.b16 %v1157
    %v1174 = vunpack.c.l.b16 %v1158
    %v1175 = vpack.c.b16 %v1168, %v1167
    %v1176 = vpack.c.b16 %v1170, %v1169
    %v1177 = vpack.c.b16 %v1172, %v1171
    %v1178 = vpack.c.b16 %v1174, %v1173
    %v1184 = vsel %vm615, %v1150, 0
    %1186 = vmatpush.bf16.msra.mxu0 0
    %1187 = vmatpush.bf16.msra.mxu0 0
    %1188 = vmatpush.bf16.msra.mxu0 0
    %1189 = vmatpush.bf16.msra.mxu0 0
    %1190 = vmatpush.bf16.msra.mxu0 %v1178
    %1191 = vmatpush.bf16.msra.mxu0 %v1177
    %1192 = vmatpush.bf16.msra.mxu0 %v1176
    %1193 = vmatpush.bf16.msra.mxu0 %v1175
    %1194 = vmatmul.bf16.gmra.mxu0 %v1184
    %v1195 = vpop.f32.mrf.mxu0
    %v1196 = vadd.f32 0.0, %v1195
    %v1197 = vpop.f32.mrf.mxu0
    %v1198 = vadd.f32 0.0, %v1197
    %1199 = vdwg.mxu0
    %v1200 = vadd.f32 %v1075, %v1196
    %v1201 = vadd.f32 %v1076, %v1198
    %v1202 = vmul.f32 %v1200, %v1200
    %v1203 = vmul.f32 %v1201, %v1201
    %v1204 = vsel %vm58, %v1202, 0.0
    %1205 = vadd.xlane.f32.xlu0 %v1204
    %v1206 = vpop.xlane.xlu0 %1205
    %v1207 = vsel %vm58, %v1203, 0.0
    %1208 = vadd.xlane.f32.xlu0 %v1207
    %v1209 = vpop.xlane.xlu0 %1208
    %v1210 = vmul.f32 %v1206, %v71
    %v1211 = vmul.f32 %v1209, %v71
    %v1212 = vadd.f32 %v1210, 1e-06
    %v1213 = vadd.f32 %v1211, 1e-06
    %v1214 = vrsqrt.pop %v1212
    %v1215 = vmul.f32 %v1214, %v1212
    %v1216 = vmul.f32 %v1215, %v1214
    %v1217 = vmul.f32 0.5, %v1216
    %v1218 = vsub.f32 1.5, %v1217
    %v1219 = vmul.f32 %v1214, %v1218
    %vm1220 = vweird.f32 %v1212
    %vm1221 = vweird.f32 %v1214
    %vm1222 = vmor %vm1220, %vm1221
    %v1223 = vsel %vm1222, %v1214, %v1219
    %v1224 = vrsqrt.pop %v1213
    %v1225 = vmul.f32 %v1224, %v1213
    %v1226 = vmul.f32 %v1225, %v1224
    %v1227 = vmul.f32 0.5, %v1226
    %v1228 = vsub.f32 1.5, %v1227
    %v1229 = vmul.f32 %v1224, %v1228
    %vm1230 = vweird.f32 %v1213
    %vm1231 = vweird.f32 %v1224
    %vm1232 = vmor %vm1230, %vm1231
    %v1233 = vsel %vm1232, %v1224, %v1229
    %v1234 = vmul.f32 %v1200, %v1223
    %v1235 = vmul.f32 %v1201, %v1233
    %v1236 = vperm.slane %v28, 4
    %v1237 = vmul.f32 %v1234, %v1236
    %v1238 = vmul.f32 %v1235, %v1236
    %v1239 = vpack.c.bf16 %v1238, %v1237
    %v1240 = vld [vmem:[%s0 + $0x180] sm:$0xf]
    %v1241 = vld [vmem:[%s0 + $0x184] sm:$0xf]
    %v1242 = vld [vmem:[%s0 + $0x188] sm:$0xf]
    %v1243 = vld [vmem:[%s0 + $0x18c] sm:$0xf]
    %v1248 = vunpack.c.l.b16 %v1240
    %v1249 = vunpack.c.l.b16 %v1241
    %v1250 = vunpack.c.l.b16 %v1242
    %v1251 = vunpack.c.l.b16 %v1243
    %v1252 = vpack.c.b16 %v1249, %v1248
    %v1253 = vpack.c.b16 %v1251, %v1250
    %v1257 = vsel %vm58, %v1239, 0
    %1259 = vmatpush.bf16.msra.mxu0 0
    %1260 = vmatpush.bf16.msra.mxu0 0
    %1261 = vmatpush.bf16.msra.mxu0 0
    %1262 = vmatpush.bf16.msra.mxu0 0
    %1263 = vmatpush.bf16.msra.mxu0 0
    %1264 = vmatpush.bf16.msra.mxu0 0
    %1265 = vmatpush.bf16.msra.mxu0 %v1253
    %1266 = vmatpush.bf16.msra.mxu0 %v1252
    %1267 = vmatmul.bf16.gmra.mxu0 %v1257
    %v1268 = vpop.f32.mrf.mxu0
    %v1269 = vadd.f32 0.0, %v1268
    %v1270 = vpop.f32.mrf.mxu0
    %v1271 = vadd.f32 0.0, %v1270
    %1272 = vdwg.mxu0
    %v1273 = vld [vmem:[%s2 + $0x10] sm:$0xff]
    %v1274 = vld [vmem:[%s2 + $0x18] sm:$0xff]
    %v1275 = vmul.f32 %v1273, %v1273
    %v1276 = vmul.f32 %v1274, %v1274
    %v1277 = vsel %vm58, %v1275, 0.0
    %1278 = vadd.xlane.f32.xlu0 %v1277
    %v1279 = vpop.xlane.xlu0 %1278
    %v1280 = vsel %vm58, %v1276, 0.0
    %1281 = vadd.xlane.f32.xlu0 %v1280
    %v1282 = vpop.xlane.xlu0 %1281
    %v1283 = vmul.f32 %v1279, %v71
    %v1284 = vmul.f32 %v1282, %v71
    %v1285 = vadd.f32 %v1283, 1e-06
    %v1286 = vadd.f32 %v1284, 1e-06
    %v1287 = vrsqrt.pop %v1285
    %v1288 = vmul.f32 %v1287, %v1285
    %v1289 = vmul.f32 %v1288, %v1287
    %v1290 = vmul.f32 0.5, %v1289
    %v1291 = vsub.f32 1.5, %v1290
    %v1292 = vmul.f32 %v1287, %v1291
    %vm1293 = vweird.f32 %v1285
    %vm1294 = vweird.f32 %v1287
    %vm1295 = vmor %vm1293, %vm1294
    %v1296 = vsel %vm1295, %v1287, %v1292
    %v1297 = vrsqrt.pop %v1286
    %v1298 = vmul.f32 %v1297, %v1286
    %v1299 = vmul.f32 %v1298, %v1297
    %v1300 = vmul.f32 0.5, %v1299
    %v1301 = vsub.f32 1.5, %v1300
    %v1302 = vmul.f32 %v1297, %v1301
    %vm1303 = vweird.f32 %v1286
    %vm1304 = vweird.f32 %v1297
    %vm1305 = vmor %vm1303, %vm1304
    %v1306 = vsel %vm1305, %v1297, %v1302
    %v1307 = vmul.f32 %v1273, %v1296
    %v1308 = vmul.f32 %v1274, %v1306
    %v1309 = vperm.slane %v28, 5
    %v1310 = vmul.f32 %v1307, %v1309
    %v1311 = vmul.f32 %v1308, %v1309
    %v1312 = vpack.c.bf16 %v1311, %v1310
    %v1313 = vld [vmem:[%s0 + $0x50] sm:$0xf]
    %v1314 = vld [vmem:[%s0 + $0x54] sm:$0xf]
    %v1315 = vld [vmem:[%s0 + $0x58] sm:$0xf]
    %v1316 = vld [vmem:[%s0 + $0x5c] sm:$0xf]
    %v1321 = vunpack.c.l.b16 %v1313
    %v1322 = vunpack.c.l.b16 %v1314
    %v1323 = vunpack.c.l.b16 %v1315
    %v1324 = vunpack.c.l.b16 %v1316
    %v1325 = vpack.c.b16 %v1322, %v1321
    %v1326 = vpack.c.b16 %v1324, %v1323
    %v1330 = vsel %vm58, %v1312, 0
    %1332 = vmatpush.bf16.msra.mxu0 0
    %1333 = vmatpush.bf16.msra.mxu0 0
    %1334 = vmatpush.bf16.msra.mxu0 0
    %1335 = vmatpush.bf16.msra.mxu0 0
    %1336 = vmatpush.bf16.msra.mxu0 0
    %1337 = vmatpush.bf16.msra.mxu0 0
    %1338 = vmatpush.bf16.msra.mxu0 %v1326
    %1339 = vmatpush.bf16.msra.mxu0 %v1325
    %1340 = vmatmul.bf16.gmra.mxu0 %v1330
    %v1341 = vpop.f32.mrf.mxu0
    %v1342 = vadd.f32 0.0, %v1341
    %v1343 = vpop.f32.mrf.mxu0
    %v1344 = vadd.f32 0.0, %v1343
    %1345 = vdwg.mxu0
    %v1346 = vld [vmem:[%s0 + $0x60] sm:$0xf]
    %v1347 = vld [vmem:[%s0 + $0x64] sm:$0xf]
    %v1348 = vld [vmem:[%s0 + $0x68] sm:$0xf]
    %v1349 = vld [vmem:[%s0 + $0x6c] sm:$0xf]
    %v1350 = vpack.c.bf16 %v1342, %v1342
    %v1351 = vpack.c.bf16 %v1344, %v1344
    %v1354 = vunpack.c.l.b16 %v1350
    %v1355 = vunpack.c.l.b16 %v1351
    %v1356 = vpack.c.b16 %v1355, %v1354
    %1357 = vrot.lane.b32.xlu0 %v1356, 96
    %v1358 = vpop.permute.xlu0 %1357
    %v1360 = vsel %vm148, %v1356, 0
    %v1363 = vsel %vm148, %v1358, 0
    %1365 = vmatpush.bf16.xpose.msra.mxu0 0
    %1366 = vmatpush.bf16.xpose.msra.mxu0 0
    %1367 = vmatpush.bf16.xpose.msra.mxu0 0
    %1368 = vmatpush.bf16.xpose.msra.mxu0 0
    %1369 = vmatpush.bf16.xpose.msra.mxu0 0
    %1370 = vmatpush.bf16.xpose.msra.mxu0 0
    %1371 = vmatpush.bf16.xpose.msra.mxu0 0
    %1372 = vmatpush.bf16.xpose.msra.mxu0 %v1363
    %1373 = vmatmul.bf16.gmra.mxu0 %v1360
    %v1374 = vpop.f32.mrf.mxu0
    %v1375 = vadd.f32 0.0, %v1374
    %v1376 = vpop.f32.mrf.mxu0
    %v1377 = vadd.f32 0.0, %v1376
    %1378 = vdwg.mxu0
    %1379 = vrot.lane.b32.xlu0 %v1356, 120
    %v1380 = vpop.permute.xlu0 %1379
    %1381 = vrot.lane.b32.xlu0 %v1356, 88
    %v1382 = vpop.permute.xlu0 %1381
    %v1384 = vsel %vm148, %v1380, 0
    %v1387 = vsel %vm148, %v1382, 0
    %1389 = vmatpush.bf16.xpose.msra.mxu0 0
    %1390 = vmatpush.bf16.xpose.msra.mxu0 0
    %1391 = vmatpush.bf16.xpose.msra.mxu0 0
    %1392 = vmatpush.bf16.xpose.msra.mxu0 0
    %1393 = vmatpush.bf16.xpose.msra.mxu0 0
    %1394 = vmatpush.bf16.xpose.msra.mxu0 0
    %1395 = vmatpush.bf16.xpose.msra.mxu0 0
    %1396 = vmatpush.bf16.xpose.msra.mxu0 %v1387
    %1397 = vmatmul.bf16.gmra.mxu0 %v1384
    %v1398 = vpop.f32.mrf.mxu0
    %v1399 = vadd.f32 0.0, %v1398
    %v1400 = vpop.f32.mrf.mxu0
    %v1401 = vadd.f32 0.0, %v1400
    %1402 = vdwg.mxu0
    %1403 = vrot.lane.b32.xlu0 %v1356, 112
    %v1404 = vpop.permute.xlu0 %1403
    %1405 = vrot.lane.b32.xlu0 %v1356, 80
    %v1406 = vpop.permute.xlu0 %1405
    %v1408 = vsel %vm148, %v1404, 0
    %v1411 = vsel %vm148, %v1406, 0
    %1413 = vmatpush.bf16.xpose.msra.mxu0 0
    %1414 = vmatpush.bf16.xpose.msra.mxu0 0
    %1415 = vmatpush.bf16.xpose.msra.mxu0 0
    %1416 = vmatpush.bf16.xpose.msra.mxu0 0
    %1417 = vmatpush.bf16.xpose.msra.mxu0 0
    %1418 = vmatpush.bf16.xpose.msra.mxu0 0
    %1419 = vmatpush.bf16.xpose.msra.mxu0 0
    %1420 = vmatpush.bf16.xpose.msra.mxu0 %v1411
    %1421 = vmatmul.bf16.gmra.mxu0 %v1408
    %v1422 = vpop.f32.mrf.mxu0
    %v1423 = vadd.f32 0.0, %v1422
    %v1424 = vpop.f32.mrf.mxu0
    %v1425 = vadd.f32 0.0, %v1424
    %1426 = vdwg.mxu0
    %1427 = vrot.lane.b32.xlu0 %v1356, 104
    %v1428 = vpop.permute.xlu0 %1427
    %1429 = vrot.lane.b32.xlu0 %v1356, 72
    %v1430 = vpop.permute.xlu0 %1429
    %v1432 = vsel %vm148, %v1428, 0
    %v1435 = vsel %vm148, %v1430, 0
    %1437 = vmatpush.bf16.xpose.msra.mxu0 0
    %1438 = vmatpush.bf16.xpose.msra.mxu0 0
    %1439 = vmatpush.bf16.xpose.msra.mxu0 0
    %1440 = vmatpush.bf16.xpose.msra.mxu0 0
    %1441 = vmatpush.bf16.xpose.msra.mxu0 0
    %1442 = vmatpush.bf16.xpose.msra.mxu0 0
    %1443 = vmatpush.bf16.xpose.msra.mxu0 0
    %1444 = vmatpush.bf16.xpose.msra.mxu0 %v1435
    %1445 = vmatmul.bf16.gmra.mxu0 %v1432
    %v1446 = vpop.f32.mrf.mxu0
    %v1447 = vadd.f32 0.0, %v1446
    %v1448 = vpop.f32.mrf.mxu0
    %v1449 = vadd.f32 0.0, %v1448
    %1450 = vdwg.mxu0
    %v1451 = vadd.f32 %v1375, %v38
    %v1452 = vadd.f32 %v1377, %v39
    %v1453 = vadd.f32 %v1399, %v40
    %v1454 = vadd.f32 %v1401, %v41
    %v1455 = vadd.f32 %v1423, %v42
    %v1456 = vadd.f32 %v1425, %v43
    %v1457 = vadd.f32 %v1447, %v44
    %v1458 = vadd.f32 %v1449, %v45
    %v1459 = vsel %vm249, %v1451, -inf
    %1460 = vmax.xlane.f32.xlu0 %v1459
    %v1461 = vpop.xlane.xlu0 %1460
    %v1462 = vsel %vm249, %v1452, -inf
    %1463 = vmax.xlane.f32.xlu0 %v1462
    %v1464 = vpop.xlane.xlu0 %1463
    %v1465 = vsel %vm249, %v1453, -inf
    %1466 = vmax.xlane.f32.xlu0 %v1465
    %v1467 = vpop.xlane.xlu0 %1466
    %v1468 = vsel %vm249, %v1454, -inf
    %1469 = vmax.xlane.f32.xlu0 %v1468
    %v1470 = vpop.xlane.xlu0 %1469
    %v1471 = vsel %vm249, %v1455, -inf
    %1472 = vmax.xlane.f32.xlu0 %v1471
    %v1473 = vpop.xlane.xlu0 %1472
    %v1474 = vsel %vm249, %v1456, -inf
    %1475 = vmax.xlane.f32.xlu0 %v1474
    %v1476 = vpop.xlane.xlu0 %1475
    %v1477 = vsel %vm249, %v1457, -inf
    %1478 = vmax.xlane.f32.xlu0 %v1477
    %v1479 = vpop.xlane.xlu0 %1478
    %v1480 = vsel %vm249, %v1458, -inf
    %1481 = vmax.xlane.f32.xlu0 %v1480
    %v1482 = vpop.xlane.xlu0 %1481
    %v1483 = vsub.f32 %v1451, %v1461
    %v1484 = vsub.f32 %v1452, %v1464
    %v1485 = vsub.f32 %v1453, %v1467
    %v1486 = vsub.f32 %v1454, %v1470
    %v1487 = vsub.f32 %v1455, %v1473
    %v1488 = vsub.f32 %v1456, %v1476
    %v1489 = vsub.f32 %v1457, %v1479
    %v1490 = vsub.f32 %v1458, %v1482
    %v1491 = vmul.f32 %v1483, 1.442695
    %v1492 = vpow.pop %v1491
    %v1493 = vmul.f32 %v1484, 1.442695
    %v1494 = vpow.pop %v1493
    %v1495 = vmul.f32 %v1485, 1.442695
    %v1496 = vpow.pop %v1495
    %v1497 = vmul.f32 %v1486, 1.442695
    %v1498 = vpow.pop %v1497
    %v1499 = vmul.f32 %v1487, 1.442695
    %v1500 = vpow.pop %v1499
    %v1501 = vmul.f32 %v1488, 1.442695
    %v1502 = vpow.pop %v1501
    %v1503 = vmul.f32 %v1489, 1.442695
    %v1504 = vpow.pop %v1503
    %v1505 = vmul.f32 %v1490, 1.442695
    %v1506 = vpow.pop %v1505
    %v1507 = vsel %vm249, %v1492, 0.0
    %1508 = vadd.xlane.f32.xlu0 %v1507
    %v1509 = vpop.xlane.xlu0 %1508
    %v1510 = vsel %vm249, %v1494, 0.0
    %1511 = vadd.xlane.f32.xlu0 %v1510
    %v1512 = vpop.xlane.xlu0 %1511
    %v1513 = vsel %vm249, %v1496, 0.0
    %1514 = vadd.xlane.f32.xlu0 %v1513
    %v1515 = vpop.xlane.xlu0 %1514
    %v1516 = vsel %vm249, %v1498, 0.0
    %1517 = vadd.xlane.f32.xlu0 %v1516
    %v1518 = vpop.xlane.xlu0 %1517
    %v1519 = vsel %vm249, %v1500, 0.0
    %1520 = vadd.xlane.f32.xlu0 %v1519
    %v1521 = vpop.xlane.xlu0 %1520
    %v1522 = vsel %vm249, %v1502, 0.0
    %1523 = vadd.xlane.f32.xlu0 %v1522
    %v1524 = vpop.xlane.xlu0 %1523
    %v1525 = vsel %vm249, %v1504, 0.0
    %1526 = vadd.xlane.f32.xlu0 %v1525
    %v1527 = vpop.xlane.xlu0 %1526
    %v1528 = vsel %vm249, %v1506, 0.0
    %1529 = vadd.xlane.f32.xlu0 %v1528
    %v1530 = vpop.xlane.xlu0 %1529
    %v1531 = vrcp.pop %v1509
    %v1532 = vrcp.pop %v1512
    %v1533 = vrcp.pop %v1515
    %v1534 = vrcp.pop %v1518
    %v1535 = vrcp.pop %v1521
    %v1536 = vrcp.pop %v1524
    %v1537 = vrcp.pop %v1527
    %v1538 = vrcp.pop %v1530
    %v1539 = vmul.f32 %v1492, %v1531
    %v1540 = vmul.f32 %v1494, %v1532
    %v1541 = vmul.f32 %v1496, %v1533
    %v1542 = vmul.f32 %v1498, %v1534
    %v1543 = vmul.f32 %v1500, %v1535
    %v1544 = vmul.f32 %v1502, %v1536
    %v1545 = vmul.f32 %v1504, %v1537
    %v1546 = vmul.f32 %v1506, %v1538
    %v1547 = vpack.c.bf16 %v1539, %v1539
    %v1548 = vpack.c.bf16 %v1540, %v1540
    %v1549 = vpack.c.bf16 %v1541, %v1541
    %v1550 = vpack.c.bf16 %v1542, %v1542
    %v1551 = vpack.c.bf16 %v1543, %v1543
    %v1552 = vpack.c.bf16 %v1544, %v1544
    %v1553 = vpack.c.bf16 %v1545, %v1545
    %v1554 = vpack.c.bf16 %v1546, %v1546
    %v1557 = vunpack.c.l.b16 %v1547
    %v1558 = vunpack.c.l.b16 %v1548
    %v1559 = vpack.c.b16 %v1558, %v1557
    %1560 = vrot.lane.b32.xlu0 %v1356, 64
    %v1561 = vpop.permute.xlu0 %1560
    %v1564 = vsel %vm249, %v1559, 0
    %1566 = vmatpush.bf16.msra.mxu0 0
    %1567 = vmatpush.bf16.msra.mxu0 0
    %1568 = vmatpush.bf16.msra.mxu0 0
    %1569 = vmatpush.bf16.msra.mxu0 0
    %1570 = vmatpush.bf16.msra.mxu0 0
    %1571 = vmatpush.bf16.msra.mxu0 0
    %1572 = vmatpush.bf16.msra.mxu0 0
    %1573 = vmatpush.bf16.msra.mxu0 %v1561
    %1574 = vmatmul.bf16.gmra.mxu0 %v1564
    %v1575 = vpop.f32.mrf.mxu0
    %v1576 = vadd.f32 0.0, %v1575
    %v1577 = vpop.f32.mrf.mxu0
    %v1578 = vadd.f32 0.0, %v1577
    %1579 = vdwg.mxu0
    %v1582 = vunpack.c.l.b16 %v1549
    %v1583 = vunpack.c.l.b16 %v1550
    %v1584 = vpack.c.b16 %v1583, %v1582
    %1585 = vrot.lane.b32.xlu0 %v1356, 56
    %v1586 = vpop.permute.xlu0 %1585
    %v1589 = vsel %vm249, %v1584, 0
    %1591 = vmatpush.bf16.msra.mxu0 0
    %1592 = vmatpush.bf16.msra.mxu0 0
    %1593 = vmatpush.bf16.msra.mxu0 0
    %1594 = vmatpush.bf16.msra.mxu0 0
    %1595 = vmatpush.bf16.msra.mxu0 0
    %1596 = vmatpush.bf16.msra.mxu0 0
    %1597 = vmatpush.bf16.msra.mxu0 0
    %1598 = vmatpush.bf16.msra.mxu0 %v1586
    %1599 = vmatmul.bf16.gmra.mxu0 %v1589
    %v1600 = vpop.f32.mrf.mxu0
    %v1601 = vadd.f32 0.0, %v1600
    %v1602 = vpop.f32.mrf.mxu0
    %v1603 = vadd.f32 0.0, %v1602
    %1604 = vdwg.mxu0
    %v1607 = vunpack.c.l.b16 %v1551
    %v1608 = vunpack.c.l.b16 %v1552
    %v1609 = vpack.c.b16 %v1608, %v1607
    %1610 = vrot.lane.b32.xlu0 %v1356, 48
    %v1611 = vpop.permute.xlu0 %1610
    %v1614 = vsel %vm249, %v1609, 0
    %1616 = vmatpush.bf16.msra.mxu0 0
    %1617 = vmatpush.bf16.msra.mxu0 0
    %1618 = vmatpush.bf16.msra.mxu0 0
    %1619 = vmatpush.bf16.msra.mxu0 0
    %1620 = vmatpush.bf16.msra.mxu0 0
    %1621 = vmatpush.bf16.msra.mxu0 0
    %1622 = vmatpush.bf16.msra.mxu0 0
    %1623 = vmatpush.bf16.msra.mxu0 %v1611
    %1624 = vmatmul.bf16.gmra.mxu0 %v1614
    %v1625 = vpop.f32.mrf.mxu0
    %v1626 = vadd.f32 0.0, %v1625
    %v1627 = vpop.f32.mrf.mxu0
    %v1628 = vadd.f32 0.0, %v1627
    %1629 = vdwg.mxu0
    %v1632 = vunpack.c.l.b16 %v1553
    %v1633 = vunpack.c.l.b16 %v1554
    %v1634 = vpack.c.b16 %v1633, %v1632
    %1635 = vrot.lane.b32.xlu0 %v1356, 40
    %v1636 = vpop.permute.xlu0 %1635
    %v1639 = vsel %vm249, %v1634, 0
    %1641 = vmatpush.bf16.msra.mxu0 0
    %1642 = vmatpush.bf16.msra.mxu0 0
    %1643 = vmatpush.bf16.msra.mxu0 0
    %1644 = vmatpush.bf16.msra.mxu0 0
    %1645 = vmatpush.bf16.msra.mxu0 0
    %1646 = vmatpush.bf16.msra.mxu0 0
    %1647 = vmatpush.bf16.msra.mxu0 0
    %1648 = vmatpush.bf16.msra.mxu0 %v1636
    %1649 = vmatmul.bf16.gmra.mxu0 %v1639
    %v1650 = vpop.f32.mrf.mxu0
    %v1651 = vadd.f32 0.0, %v1650
    %v1652 = vpop.f32.mrf.mxu0
    %v1653 = vadd.f32 0.0, %v1652
    %1654 = vdwg.mxu0
    %1657 = vrot.lane.b32.xlu0 %v1601, 8
    %v1658 = vpop.permute.xlu0 %1657
    %1659 = vrot.lane.b32.xlu0 %v1603, 8
    %v1660 = vpop.permute.xlu0 %1659
    %1665 = vrot.lane.b32.xlu0 %v1626, 16
    %v1666 = vpop.permute.xlu0 %1665
    %1667 = vrot.lane.b32.xlu0 %v1628, 16
    %v1668 = vpop.permute.xlu0 %1667
    %1673 = vrot.lane.b32.xlu0 %v1651, 24
    %v1674 = vpop.permute.xlu0 %1673
    %1675 = vrot.lane.b32.xlu0 %v1653, 24
    %v1676 = vpop.permute.xlu0 %1675
    %v1679 = vsel %vm148, %v1576, %v1658
    %v1680 = vsel %vm148, %v1578, %v1660
    %v1681 = vsel %vm249, %v1679, %v1666
    %v1682 = vsel %vm249, %v1680, %v1668
    %v1683 = vsel %vm474, %v1681, %v1674
    %v1684 = vsel %vm474, %v1682, %v1676
    %v1685 = vpack.c.bf16 %v1684, %v1683
    %v1690 = vunpack.c.l.b16 %v1346
    %v1691 = vunpack.c.l.b16 %v1347
    %v1692 = vunpack.c.l.b16 %v1348
    %v1693 = vunpack.c.l.b16 %v1349
    %v1694 = vpack.c.b16 %v1691, %v1690
    %v1695 = vpack.c.b16 %v1693, %v1692
    %v1699 = vsel %vm58, %v1685, 0
    %1701 = vmatpush.bf16.msra.mxu0 0
    %1702 = vmatpush.bf16.msra.mxu0 0
    %1703 = vmatpush.bf16.msra.mxu0 0
    %1704 = vmatpush.bf16.msra.mxu0 0
    %1705 = vmatpush.bf16.msra.mxu0 0
    %1706 = vmatpush.bf16.msra.mxu0 0
    %1707 = vmatpush.bf16.msra.mxu0 %v1695
    %1708 = vmatpush.bf16.msra.mxu0 %v1694
    %1709 = vmatmul.bf16.gmra.mxu0 %v1699
    %v1710 = vpop.f32.mrf.mxu0
    %v1711 = vadd.f32 0.0, %v1710
    %v1712 = vpop.f32.mrf.mxu0
    %v1713 = vadd.f32 0.0, %v1712
    %1714 = vdwg.mxu0
    %v1715 = vadd.f32 %v1273, %v1711
    %v1716 = vadd.f32 %v1274, %v1713
    %v1717 = vmul.f32 %v1715, %v1715
    %v1718 = vmul.f32 %v1716, %v1716
    %v1719 = vsel %vm58, %v1717, 0.0
    %1720 = vadd.xlane.f32.xlu0 %v1719
    %v1721 = vpop.xlane.xlu0 %1720
    %v1722 = vsel %vm58, %v1718, 0.0
    %1723 = vadd.xlane.f32.xlu0 %v1722
    %v1724 = vpop.xlane.xlu0 %1723
    %v1725 = vmul.f32 %v1721, %v71
    %v1726 = vmul.f32 %v1724, %v71
    %v1727 = vadd.f32 %v1725, 1e-06
    %v1728 = vadd.f32 %v1726, 1e-06
    %v1729 = vrsqrt.pop %v1727
    %v1730 = vmul.f32 %v1729, %v1727
    %v1731 = vmul.f32 %v1730, %v1729
    %v1732 = vmul.f32 0.5, %v1731
    %v1733 = vsub.f32 1.5, %v1732
    %v1734 = vmul.f32 %v1729, %v1733
    %vm1735 = vweird.f32 %v1727
    %vm1736 = vweird.f32 %v1729
    %vm1737 = vmor %vm1735, %vm1736
    %v1738 = vsel %vm1737, %v1729, %v1734
    %v1739 = vrsqrt.pop %v1728
    %v1740 = vmul.f32 %v1739, %v1728
    %v1741 = vmul.f32 %v1740, %v1739
    %v1742 = vmul.f32 0.5, %v1741
    %v1743 = vsub.f32 1.5, %v1742
    %v1744 = vmul.f32 %v1739, %v1743
    %vm1745 = vweird.f32 %v1728
    %vm1746 = vweird.f32 %v1739
    %vm1747 = vmor %vm1745, %vm1746
    %v1748 = vsel %vm1747, %v1739, %v1744
    %v1749 = vmul.f32 %v1715, %v1738
    %v1750 = vmul.f32 %v1716, %v1748
    %v1751 = vperm.slane %v28, 7
    %v1752 = vmul.f32 %v1749, %v1751
    %v1753 = vmul.f32 %v1750, %v1751
    %v1754 = vpack.c.bf16 %v1753, %v1752
    %v1755 = vld [vmem:[%s0 + $0x70] sm:$0xf]
    %v1756 = vld [vmem:[%s0 + $0x74] sm:$0xf]
    %v1757 = vld [vmem:[%s0 + $0x78] sm:$0xf]
    %v1758 = vld [vmem:[%s0 + $0x7c] sm:$0xf]
    %v1763 = vunpack.c.l.b16 %v1755
    %v1764 = vunpack.c.l.b16 %v1756
    %v1765 = vunpack.c.l.b16 %v1757
    %v1766 = vunpack.c.l.b16 %v1758
    %v1767 = vpack.c.b16 %v1764, %v1763
    %v1768 = vpack.c.b16 %v1766, %v1765
    %v1772 = vsel %vm58, %v1754, 0
    %1774 = vmatpush.bf16.msra.mxu0 0
    %1775 = vmatpush.bf16.msra.mxu0 0
    %1776 = vmatpush.bf16.msra.mxu0 0
    %1777 = vmatpush.bf16.msra.mxu0 0
    %1778 = vmatpush.bf16.msra.mxu0 0
    %1779 = vmatpush.bf16.msra.mxu0 0
    %1780 = vmatpush.bf16.msra.mxu0 %v1768
    %1781 = vmatpush.bf16.msra.mxu0 %v1767
    %1782 = vmatmul.bf16.gmra.mxu0 %v1772
    %v1783 = vpop.f32.mrf.mxu0
    %v1784 = vadd.f32 0.0, %v1783
    %v1785 = vpop.f32.mrf.mxu0
    %v1786 = vadd.f32 0.0, %v1785
    %1787 = vdwg.mxu0
    %v1788 = vld [vmem:[%s0 + $0x80] sm:$0xf]
    %v1789 = vld [vmem:[%s0 + $0x84] sm:$0xf]
    %v1790 = vld [vmem:[%s0 + $0x88] sm:$0xf]
    %v1791 = vld [vmem:[%s0 + $0x8c] sm:$0xf]
    %v1792 = vpack.c.bf16 %v1784, %v1784
    %v1793 = vpack.c.bf16 %v1786, %v1786
    %v1794 = vpack.c.bf16 %v1269, %v1269
    %v1795 = vpack.c.bf16 %v1271, %v1271
    %v1798 = vunpack.c.l.b16 %v1792
    %v1799 = vunpack.c.l.b16 %v1793
    %v1800 = vpack.c.b16 %v1799, %v1798
    %v1803 = vunpack.c.l.b16 %v1794
    %v1804 = vunpack.c.l.b16 %v1795
    %v1805 = vpack.c.b16 %v1804, %v1803
    %v1807 = vsel %vm148, %v1800, 0
    %v1810 = vsel %vm148, %v1805, 0
    %1812 = vmatpush.bf16.xpose.msra.mxu0 0
    %1813 = vmatpush.bf16.xpose.msra.mxu0 0
    %1814 = vmatpush.bf16.xpose.msra.mxu0 0
    %1815 = vmatpush.bf16.xpose.msra.mxu0 0
    %1816 = vmatpush.bf16.xpose.msra.mxu0 0
    %1817 = vmatpush.bf16.xpose.msra.mxu0 0
    %1818 = vmatpush.bf16.xpose.msra.mxu0 0
    %1819 = vmatpush.bf16.xpose.msra.mxu0 %v1810
    %1820 = vmatmul.bf16.gmra.mxu0 %v1807
    %v1821 = vpop.f32.mrf.mxu0
    %v1822 = vadd.f32 0.0, %v1821
    %v1823 = vpop.f32.mrf.mxu0
    %v1824 = vadd.f32 0.0, %v1823
    %1825 = vdwg.mxu0
    %1826 = vrot.lane.b32.xlu0 %v1800, 120
    %v1827 = vpop.permute.xlu0 %1826
    %1828 = vrot.lane.b32.xlu0 %v1805, 120
    %v1829 = vpop.permute.xlu0 %1828
    %v1831 = vsel %vm148, %v1827, 0
    %v1834 = vsel %vm148, %v1829, 0
    %1836 = vmatpush.bf16.xpose.msra.mxu0 0
    %1837 = vmatpush.bf16.xpose.msra.mxu0 0
    %1838 = vmatpush.bf16.xpose.msra.mxu0 0
    %1839 = vmatpush.bf16.xpose.msra.mxu0 0
    %1840 = vmatpush.bf16.xpose.msra.mxu0 0
    %1841 = vmatpush.bf16.xpose.msra.mxu0 0
    %1842 = vmatpush.bf16.xpose.msra.mxu0 0
    %1843 = vmatpush.bf16.xpose.msra.mxu0 %v1834
    %1844 = vmatmul.bf16.gmra.mxu0 %v1831
    %v1845 = vpop.f32.mrf.mxu0
    %v1846 = vadd.f32 0.0, %v1845
    %v1847 = vpop.f32.mrf.mxu0
    %v1848 = vadd.f32 0.0, %v1847
    %1849 = vdwg.mxu0
    %1850 = vrot.lane.b32.xlu0 %v1800, 112
    %v1851 = vpop.permute.xlu0 %1850
    %1852 = vrot.lane.b32.xlu0 %v1805, 112
    %v1853 = vpop.permute.xlu0 %1852
    %v1855 = vsel %vm148, %v1851, 0
    %v1858 = vsel %vm148, %v1853, 0
    %1860 = vmatpush.bf16.xpose.msra.mxu0 0
    %1861 = vmatpush.bf16.xpose.msra.mxu0 0
    %1862 = vmatpush.bf16.xpose.msra.mxu0 0
    %1863 = vmatpush.bf16.xpose.msra.mxu0 0
    %1864 = vmatpush.bf16.xpose.msra.mxu0 0
    %1865 = vmatpush.bf16.xpose.msra.mxu0 0
    %1866 = vmatpush.bf16.xpose.msra.mxu0 0
    %1867 = vmatpush.bf16.xpose.msra.mxu0 %v1858
    %1868 = vmatmul.bf16.gmra.mxu0 %v1855
    %v1869 = vpop.f32.mrf.mxu0
    %v1870 = vadd.f32 0.0, %v1869
    %v1871 = vpop.f32.mrf.mxu0
    %v1872 = vadd.f32 0.0, %v1871
    %1873 = vdwg.mxu0
    %1874 = vrot.lane.b32.xlu0 %v1800, 104
    %v1875 = vpop.permute.xlu0 %1874
    %1876 = vrot.lane.b32.xlu0 %v1805, 104
    %v1877 = vpop.permute.xlu0 %1876
    %v1879 = vsel %vm148, %v1875, 0
    %v1882 = vsel %vm148, %v1877, 0
    %1884 = vmatpush.bf16.xpose.msra.mxu0 0
    %1885 = vmatpush.bf16.xpose.msra.mxu0 0
    %1886 = vmatpush.bf16.xpose.msra.mxu0 0
    %1887 = vmatpush.bf16.xpose.msra.mxu0 0
    %1888 = vmatpush.bf16.xpose.msra.mxu0 0
    %1889 = vmatpush.bf16.xpose.msra.mxu0 0
    %1890 = vmatpush.bf16.xpose.msra.mxu0 0
    %1891 = vmatpush.bf16.xpose.msra.mxu0 %v1882
    %1892 = vmatmul.bf16.gmra.mxu0 %v1879
    %v1893 = vpop.f32.mrf.mxu0
    %v1894 = vadd.f32 0.0, %v1893
    %v1895 = vpop.f32.mrf.mxu0
    %v1896 = vadd.f32 0.0, %v1895
    %1897 = vdwg.mxu0
    %v1898 = vadd.f32 %v1822, %v46
    %v1899 = vadd.f32 %v1824, %v47
    %v1900 = vadd.f32 %v1846, %v48
    %v1901 = vadd.f32 %v1848, %v49
    %v1902 = vadd.f32 %v1870, %v50
    %v1903 = vadd.f32 %v1872, %v51
    %v1904 = vadd.f32 %v1894, %v52
    %v1905 = vadd.f32 %v1896, %v53
    %v1906 = vsel %vm249, %v1898, -inf
    %1907 = vmax.xlane.f32.xlu0 %v1906
    %v1908 = vpop.xlane.xlu0 %1907
    %v1909 = vsel %vm249, %v1899, -inf
    %1910 = vmax.xlane.f32.xlu0 %v1909
    %v1911 = vpop.xlane.xlu0 %1910
    %v1912 = vsel %vm249, %v1900, -inf
    %1913 = vmax.xlane.f32.xlu0 %v1912
    %v1914 = vpop.xlane.xlu0 %1913
    %v1915 = vsel %vm249, %v1901, -inf
    %1916 = vmax.xlane.f32.xlu0 %v1915
    %v1917 = vpop.xlane.xlu0 %1916
    %v1918 = vsel %vm249, %v1902, -inf
    %1919 = vmax.xlane.f32.xlu0 %v1918
    %v1920 = vpop.xlane.xlu0 %1919
    %v1921 = vsel %vm249, %v1903, -inf
    %1922 = vmax.xlane.f32.xlu0 %v1921
    %v1923 = vpop.xlane.xlu0 %1922
    %v1924 = vsel %vm249, %v1904, -inf
    %1925 = vmax.xlane.f32.xlu0 %v1924
    %v1926 = vpop.xlane.xlu0 %1925
    %v1927 = vsel %vm249, %v1905, -inf
    %1928 = vmax.xlane.f32.xlu0 %v1927
    %v1929 = vpop.xlane.xlu0 %1928
    %v1930 = vsub.f32 %v1898, %v1908
    %v1931 = vsub.f32 %v1899, %v1911
    %v1932 = vsub.f32 %v1900, %v1914
    %v1933 = vsub.f32 %v1901, %v1917
    %v1934 = vsub.f32 %v1902, %v1920
    %v1935 = vsub.f32 %v1903, %v1923
    %v1936 = vsub.f32 %v1904, %v1926
    %v1937 = vsub.f32 %v1905, %v1929
    %v1938 = vmul.f32 %v1930, 1.442695
    %v1939 = vpow.pop %v1938
    %v1940 = vmul.f32 %v1931, 1.442695
    %v1941 = vpow.pop %v1940
    %v1942 = vmul.f32 %v1932, 1.442695
    %v1943 = vpow.pop %v1942
    %v1944 = vmul.f32 %v1933, 1.442695
    %v1945 = vpow.pop %v1944
    %v1946 = vmul.f32 %v1934, 1.442695
    %v1947 = vpow.pop %v1946
    %v1948 = vmul.f32 %v1935, 1.442695
    %v1949 = vpow.pop %v1948
    %v1950 = vmul.f32 %v1936, 1.442695
    %v1951 = vpow.pop %v1950
    %v1952 = vmul.f32 %v1937, 1.442695
    %v1953 = vpow.pop %v1952
    %v1954 = vsel %vm249, %v1939, 0.0
    %1955 = vadd.xlane.f32.xlu0 %v1954
    %v1956 = vpop.xlane.xlu0 %1955
    %v1957 = vsel %vm249, %v1941, 0.0
    %1958 = vadd.xlane.f32.xlu0 %v1957
    %v1959 = vpop.xlane.xlu0 %1958
    %v1960 = vsel %vm249, %v1943, 0.0
    %1961 = vadd.xlane.f32.xlu0 %v1960
    %v1962 = vpop.xlane.xlu0 %1961
    %v1963 = vsel %vm249, %v1945, 0.0
    %1964 = vadd.xlane.f32.xlu0 %v1963
    %v1965 = vpop.xlane.xlu0 %1964
    %v1966 = vsel %vm249, %v1947, 0.0
    %1967 = vadd.xlane.f32.xlu0 %v1966
    %v1968 = vpop.xlane.xlu0 %1967
    %v1969 = vsel %vm249, %v1949, 0.0
    %1970 = vadd.xlane.f32.xlu0 %v1969
    %v1971 = vpop.xlane.xlu0 %1970
    %v1972 = vsel %vm249, %v1951, 0.0
    %1973 = vadd.xlane.f32.xlu0 %v1972
    %v1974 = vpop.xlane.xlu0 %1973
    %v1975 = vsel %vm249, %v1953, 0.0
    %1976 = vadd.xlane.f32.xlu0 %v1975
    %v1977 = vpop.xlane.xlu0 %1976
    %v1978 = vrcp.pop %v1956
    %v1979 = vrcp.pop %v1959
    %v1980 = vrcp.pop %v1962
    %v1981 = vrcp.pop %v1965
    %v1982 = vrcp.pop %v1968
    %v1983 = vrcp.pop %v1971
    %v1984 = vrcp.pop %v1974
    %v1985 = vrcp.pop %v1977
    %v1986 = vmul.f32 %v1939, %v1978
    %v1987 = vmul.f32 %v1941, %v1979
    %v1988 = vmul.f32 %v1943, %v1980
    %v1989 = vmul.f32 %v1945, %v1981
    %v1990 = vmul.f32 %v1947, %v1982
    %v1991 = vmul.f32 %v1949, %v1983
    %v1992 = vmul.f32 %v1951, %v1984
    %v1993 = vmul.f32 %v1953, %v1985
    %v1994 = vpack.c.bf16 %v1986, %v1986
    %v1995 = vpack.c.bf16 %v1987, %v1987
    %v1996 = vpack.c.bf16 %v1988, %v1988
    %v1997 = vpack.c.bf16 %v1989, %v1989
    %v1998 = vpack.c.bf16 %v1990, %v1990
    %v1999 = vpack.c.bf16 %v1991, %v1991
    %v2000 = vpack.c.bf16 %v1992, %v1992
    %v2001 = vpack.c.bf16 %v1993, %v1993
    %v2004 = vunpack.c.l.b16 %v1994
    %v2005 = vunpack.c.l.b16 %v1995
    %v2006 = vpack.c.b16 %v2005, %v2004
    %2007 = vrot.lane.b32.xlu0 %v1805, 96
    %v2008 = vpop.permute.xlu0 %2007
    %v2011 = vsel %vm249, %v2006, 0
    %2013 = vmatpush.bf16.msra.mxu0 0
    %2014 = vmatpush.bf16.msra.mxu0 0
    %2015 = vmatpush.bf16.msra.mxu0 0
    %2016 = vmatpush.bf16.msra.mxu0 0
    %2017 = vmatpush.bf16.msra.mxu0 0
    %2018 = vmatpush.bf16.msra.mxu0 0
    %2019 = vmatpush.bf16.msra.mxu0 0
    %2020 = vmatpush.bf16.msra.mxu0 %v2008
    %2021 = vmatmul.bf16.gmra.mxu0 %v2011
    %v2022 = vpop.f32.mrf.mxu0
    %v2023 = vadd.f32 0.0, %v2022
    %v2024 = vpop.f32.mrf.mxu0
    %v2025 = vadd.f32 0.0, %v2024
    %2026 = vdwg.mxu0
    %v2029 = vunpack.c.l.b16 %v1996
    %v2030 = vunpack.c.l.b16 %v1997
    %v2031 = vpack.c.b16 %v2030, %v2029
    %2032 = vrot.lane.b32.xlu0 %v1805, 88
    %v2033 = vpop.permute.xlu0 %2032
    %v2036 = vsel %vm249, %v2031, 0
    %2038 = vmatpush.bf16.msra.mxu0 0
    %2039 = vmatpush.bf16.msra.mxu0 0
    %2040 = vmatpush.bf16.msra.mxu0 0
    %2041 = vmatpush.bf16.msra.mxu0 0
    %2042 = vmatpush.bf16.msra.mxu0 0
    %2043 = vmatpush.bf16.msra.mxu0 0
    %2044 = vmatpush.bf16.msra.mxu0 0
    %2045 = vmatpush.bf16.msra.mxu0 %v2033
    %2046 = vmatmul.bf16.gmra.mxu0 %v2036
    %v2047 = vpop.f32.mrf.mxu0
    %v2048 = vadd.f32 0.0, %v2047
    %v2049 = vpop.f32.mrf.mxu0
    %v2050 = vadd.f32 0.0, %v2049
    %2051 = vdwg.mxu0
    %v2054 = vunpack.c.l.b16 %v1998
    %v2055 = vunpack.c.l.b16 %v1999
    %v2056 = vpack.c.b16 %v2055, %v2054
    %2057 = vrot.lane.b32.xlu0 %v1805, 80
    %v2058 = vpop.permute.xlu0 %2057
    %v2061 = vsel %vm249, %v2056, 0
    %2063 = vmatpush.bf16.msra.mxu0 0
    %2064 = vmatpush.bf16.msra.mxu0 0
    %2065 = vmatpush.bf16.msra.mxu0 0
    %2066 = vmatpush.bf16.msra.mxu0 0
    %2067 = vmatpush.bf16.msra.mxu0 0
    %2068 = vmatpush.bf16.msra.mxu0 0
    %2069 = vmatpush.bf16.msra.mxu0 0
    %2070 = vmatpush.bf16.msra.mxu0 %v2058
    %2071 = vmatmul.bf16.gmra.mxu0 %v2061
    %v2072 = vpop.f32.mrf.mxu0
    %v2073 = vadd.f32 0.0, %v2072
    %v2074 = vpop.f32.mrf.mxu0
    %v2075 = vadd.f32 0.0, %v2074
    %2076 = vdwg.mxu0
    %v2079 = vunpack.c.l.b16 %v2000
    %v2080 = vunpack.c.l.b16 %v2001
    %v2081 = vpack.c.b16 %v2080, %v2079
    %2082 = vrot.lane.b32.xlu0 %v1805, 72
    %v2083 = vpop.permute.xlu0 %2082
    %v2086 = vsel %vm249, %v2081, 0
    %2088 = vmatpush.bf16.msra.mxu0 0
    %2089 = vmatpush.bf16.msra.mxu0 0
    %2090 = vmatpush.bf16.msra.mxu0 0
    %2091 = vmatpush.bf16.msra.mxu0 0
    %2092 = vmatpush.bf16.msra.mxu0 0
    %2093 = vmatpush.bf16.msra.mxu0 0
    %2094 = vmatpush.bf16.msra.mxu0 0
    %2095 = vmatpush.bf16.msra.mxu0 %v2083
    %2096 = vmatmul.bf16.gmra.mxu0 %v2086
    %v2097 = vpop.f32.mrf.mxu0
    %v2098 = vadd.f32 0.0, %v2097
    %v2099 = vpop.f32.mrf.mxu0
    %v2100 = vadd.f32 0.0, %v2099
    %2101 = vdwg.mxu0
    %2104 = vrot.lane.b32.xlu0 %v2048, 8
    %v2105 = vpop.permute.xlu0 %2104
    %2106 = vrot.lane.b32.xlu0 %v2050, 8
    %v2107 = vpop.permute.xlu0 %2106
    %2112 = vrot.lane.b32.xlu0 %v2073, 16
    %v2113 = vpop.permute.xlu0 %2112
    %2114 = vrot.lane.b32.xlu0 %v2075, 16
    %v2115 = vpop.permute.xlu0 %2114
    %2120 = vrot.lane.b32.xlu0 %v2098, 24
    %v2121 = vpop.permute.xlu0 %2120
    %2122 = vrot.lane.b32.xlu0 %v2100, 24
    %v2123 = vpop.permute.xlu0 %2122
    %v2126 = vsel %vm148, %v2023, %v2105
    %v2127 = vsel %vm148, %v2025, %v2107
    %v2128 = vsel %vm249, %v2126, %v2113
    %v2129 = vsel %vm249, %v2127, %v2115
    %v2130 = vsel %vm474, %v2128, %v2121
    %v2131 = vsel %vm474, %v2129, %v2123
    %v2132 = vpack.c.bf16 %v2131, %v2130
    %v2137 = vunpack.c.l.b16 %v1788
    %v2138 = vunpack.c.l.b16 %v1789
    %v2139 = vunpack.c.l.b16 %v1790
    %v2140 = vunpack.c.l.b16 %v1791
    %v2141 = vpack.c.b16 %v2138, %v2137
    %v2142 = vpack.c.b16 %v2140, %v2139
    %v2146 = vsel %vm58, %v2132, 0
    %2148 = vmatpush.bf16.msra.mxu0 0
    %2149 = vmatpush.bf16.msra.mxu0 0
    %2150 = vmatpush.bf16.msra.mxu0 0
    %2151 = vmatpush.bf16.msra.mxu0 0
    %2152 = vmatpush.bf16.msra.mxu0 0
    %2153 = vmatpush.bf16.msra.mxu0 0
    %2154 = vmatpush.bf16.msra.mxu0 %v2142
    %2155 = vmatpush.bf16.msra.mxu0 %v2141
    %2156 = vmatmul.bf16.gmra.mxu0 %v2146
    %v2157 = vpop.f32.mrf.mxu0
    %v2158 = vadd.f32 0.0, %v2157
    %v2159 = vpop.f32.mrf.mxu0
    %v2160 = vadd.f32 0.0, %v2159
    %2161 = vdwg.mxu0
    %v2162 = vadd.f32 %v1715, %v2158
    %v2163 = vadd.f32 %v1716, %v2160
    %v2164 = vmul.f32 %v2162, %v2162
    %v2165 = vmul.f32 %v2163, %v2163
    %v2166 = vsel %vm58, %v2164, 0.0
    %2167 = vadd.xlane.f32.xlu0 %v2166
    %v2168 = vpop.xlane.xlu0 %2167
    %v2169 = vsel %vm58, %v2165, 0.0
    %2170 = vadd.xlane.f32.xlu0 %v2169
    %v2171 = vpop.xlane.xlu0 %2170
    %v2172 = vmul.f32 %v2168, %v71
    %v2173 = vmul.f32 %v2171, %v71
    %v2174 = vadd.f32 %v2172, 1e-06
    %v2175 = vadd.f32 %v2173, 1e-06
    %v2176 = vrsqrt.pop %v2174
    %v2177 = vmul.f32 %v2176, %v2174
    %v2178 = vmul.f32 %v2177, %v2176
    %v2179 = vmul.f32 0.5, %v2178
    %v2180 = vsub.f32 1.5, %v2179
    %v2181 = vmul.f32 %v2176, %v2180
    %vm2182 = vweird.f32 %v2174
    %vm2183 = vweird.f32 %v2176
    %vm2184 = vmor %vm2182, %vm2183
    %v2185 = vsel %vm2184, %v2176, %v2181
    %v2186 = vrsqrt.pop %v2175
    %v2187 = vmul.f32 %v2186, %v2175
    %v2188 = vmul.f32 %v2187, %v2186
    %v2189 = vmul.f32 0.5, %v2188
    %v2190 = vsub.f32 1.5, %v2189
    %v2191 = vmul.f32 %v2186, %v2190
    %vm2192 = vweird.f32 %v2175
    %vm2193 = vweird.f32 %v2186
    %vm2194 = vmor %vm2192, %vm2193
    %v2195 = vsel %vm2194, %v2186, %v2191
    %v2196 = vmul.f32 %v2162, %v2185
    %v2197 = vmul.f32 %v2163, %v2195
    %v2198 = vperm.slane %v29, 1
    %v2199 = vmul.f32 %v2196, %v2198
    %v2200 = vmul.f32 %v2197, %v2198
    %v2201 = vpack.c.bf16 %v2200, %v2199
    %v2202 = vld [vmem:[%s0 + $0x90] sm:$0xf]
    %v2203 = vld [vmem:[%s0 + $0x94] sm:$0xf]
    %v2204 = vld [vmem:[%s0 + $0x98] sm:$0xf]
    %v2205 = vld [vmem:[%s0 + $0x9c] sm:$0xf]
    %v2210 = vunpack.c.l.b16 %v2202
    %v2211 = vunpack.c.l.b16 %v2203
    %v2212 = vunpack.c.l.b16 %v2204
    %v2213 = vunpack.c.l.b16 %v2205
    %v2214 = vpack.c.b16 %v2211, %v2210
    %v2215 = vpack.c.b16 %v2213, %v2212
    %v2219 = vsel %vm58, %v2201, 0
    %2221 = vmatpush.bf16.msra.mxu0 0
    %2222 = vmatpush.bf16.msra.mxu0 0
    %2223 = vmatpush.bf16.msra.mxu0 0
    %2224 = vmatpush.bf16.msra.mxu0 0
    %2225 = vmatpush.bf16.msra.mxu0 0
    %2226 = vmatpush.bf16.msra.mxu0 0
    %2227 = vmatpush.bf16.msra.mxu0 %v2215
    %2228 = vmatpush.bf16.msra.mxu0 %v2214
    %2229 = vmatmul.bf16.gmra.mxu0 %v2219
    %v2230 = vpop.f32.mrf.mxu0
    %v2231 = vadd.f32 0.0, %v2230
    %v2232 = vpop.f32.mrf.mxu0
    %v2233 = vadd.f32 0.0, %v2232
    %2234 = vdwg.mxu0
    %v2235 = vmax.f32 %v2231, 0.0
    %v2236 = vmax.f32 %v2233, 0.0
    %v2237 = vpack.c.bf16 %v2236, %v2235
    %v2238 = vld [vmem:[%s0 + $0xa0] sm:$0xf]
    %v2239 = vld [vmem:[%s0 + $0xa4] sm:$0xf]
    %v2240 = vld [vmem:[%s0 + $0xa8] sm:$0xf]
    %v2241 = vld [vmem:[%s0 + $0xac] sm:$0xf]
    %v2242 = vld [vmem:[%s0 + $0xb0] sm:$0xf]
    %v2243 = vld [vmem:[%s0 + $0xb4] sm:$0xf]
    %v2244 = vld [vmem:[%s0 + $0xb8] sm:$0xf]
    %v2245 = vld [vmem:[%s0 + $0xbc] sm:$0xf]
    %v2254 = vunpack.c.l.b16 %v2238
    %v2255 = vunpack.c.l.b16 %v2239
    %v2256 = vunpack.c.l.b16 %v2240
    %v2257 = vunpack.c.l.b16 %v2241
    %v2258 = vunpack.c.l.b16 %v2242
    %v2259 = vunpack.c.l.b16 %v2243
    %v2260 = vunpack.c.l.b16 %v2244
    %v2261 = vunpack.c.l.b16 %v2245
    %v2262 = vpack.c.b16 %v2255, %v2254
    %v2263 = vpack.c.b16 %v2257, %v2256
    %v2264 = vpack.c.b16 %v2259, %v2258
    %v2265 = vpack.c.b16 %v2261, %v2260
    %v2271 = vsel %vm615, %v2237, 0
    %2273 = vmatpush.bf16.msra.mxu0 0
    %2274 = vmatpush.bf16.msra.mxu0 0
    %2275 = vmatpush.bf16.msra.mxu0 0
    %2276 = vmatpush.bf16.msra.mxu0 0
    %2277 = vmatpush.bf16.msra.mxu0 %v2265
    %2278 = vmatpush.bf16.msra.mxu0 %v2264
    %2279 = vmatpush.bf16.msra.mxu0 %v2263
    %2280 = vmatpush.bf16.msra.mxu0 %v2262
    %2281 = vmatmul.bf16.gmra.mxu0 %v2271
    %v2282 = vpop.f32.mrf.mxu0
    %v2283 = vadd.f32 0.0, %v2282
    %v2284 = vpop.f32.mrf.mxu0
    %v2285 = vadd.f32 0.0, %v2284
    %2286 = vdwg.mxu0
    %v2287 = vadd.f32 %v2162, %v2283
    %v2288 = vadd.f32 %v2163, %v2285
    %v2289 = vmul.f32 %v2287, %v2287
    %v2290 = vmul.f32 %v2288, %v2288
    %v2291 = vsel %vm58, %v2289, 0.0
    %2292 = vadd.xlane.f32.xlu0 %v2291
    %v2293 = vpop.xlane.xlu0 %2292
    %v2294 = vsel %vm58, %v2290, 0.0
    %2295 = vadd.xlane.f32.xlu0 %v2294
    %v2296 = vpop.xlane.xlu0 %2295
    %v2297 = vmul.f32 %v2293, %v71
    %v2298 = vmul.f32 %v2296, %v71
    %v2299 = vadd.f32 %v2297, 1e-06
    %v2300 = vadd.f32 %v2298, 1e-06
    %v2301 = vrsqrt.pop %v2299
    %v2302 = vmul.f32 %v2301, %v2299
    %v2303 = vmul.f32 %v2302, %v2301
    %v2304 = vmul.f32 0.5, %v2303
    %v2305 = vsub.f32 1.5, %v2304
    %v2306 = vmul.f32 %v2301, %v2305
    %vm2307 = vweird.f32 %v2299
    %vm2308 = vweird.f32 %v2301
    %vm2309 = vmor %vm2307, %vm2308
    %v2310 = vsel %vm2309, %v2301, %v2306
    %v2311 = vrsqrt.pop %v2300
    %v2312 = vmul.f32 %v2311, %v2300
    %v2313 = vmul.f32 %v2312, %v2311
    %v2314 = vmul.f32 0.5, %v2313
    %v2315 = vsub.f32 1.5, %v2314
    %v2316 = vmul.f32 %v2311, %v2315
    %vm2317 = vweird.f32 %v2300
    %vm2318 = vweird.f32 %v2311
    %vm2319 = vmor %vm2317, %vm2318
    %v2320 = vsel %vm2319, %v2311, %v2316
    %v2321 = vmul.f32 %v2287, %v2310
    %v2322 = vmul.f32 %v2288, %v2320
    %v2323 = vperm.slane %v28, 6
    %v2324 = vmul.f32 %v2321, %v2323
    %v2325 = vmul.f32 %v2322, %v2323
    %v2326 = vpack.c.bf16 %v2325, %v2324
    %v2327 = vld [vmem:[%s0 + $0x110] sm:$0xf]
    %v2328 = vld [vmem:[%s0 + $0x114] sm:$0xf]
    %v2329 = vld [vmem:[%s0 + $0x118] sm:$0xf]
    %v2330 = vld [vmem:[%s0 + $0x11c] sm:$0xf]
    %v2335 = vunpack.c.l.b16 %v2327
    %v2336 = vunpack.c.l.b16 %v2328
    %v2337 = vunpack.c.l.b16 %v2329
    %v2338 = vunpack.c.l.b16 %v2330
    %v2339 = vpack.c.b16 %v2336, %v2335
    %v2340 = vpack.c.b16 %v2338, %v2337
    %v2344 = vsel %vm58, %v2326, 0
    %2346 = vmatpush.bf16.msra.mxu0 0
    %2347 = vmatpush.bf16.msra.mxu0 0
    %2348 = vmatpush.bf16.msra.mxu0 0
    %2349 = vmatpush.bf16.msra.mxu0 0
    %2350 = vmatpush.bf16.msra.mxu0 0
    %2351 = vmatpush.bf16.msra.mxu0 0
    %2352 = vmatpush.bf16.msra.mxu0 %v2340
    %2353 = vmatpush.bf16.msra.mxu0 %v2339
    %2354 = vmatmul.bf16.gmra.mxu0 %v2344
    %v2355 = vpop.f32.mrf.mxu0
    %v2356 = vadd.f32 0.0, %v2355
    %v2357 = vpop.f32.mrf.mxu0
    %v2358 = vadd.f32 0.0, %v2357
    %2359 = vdwg.mxu0
    %v2360 = vld [vmem:[%s0 + $0x120] sm:$0xf]
    %v2361 = vld [vmem:[%s0 + $0x124] sm:$0xf]
    %v2362 = vld [vmem:[%s0 + $0x128] sm:$0xf]
    %v2363 = vld [vmem:[%s0 + $0x12c] sm:$0xf]
    %v2364 = vpack.c.bf16 %v2356, %v2356
    %v2365 = vpack.c.bf16 %v2358, %v2358
    %v2368 = vunpack.c.l.b16 %v2364
    %v2369 = vunpack.c.l.b16 %v2365
    %v2370 = vpack.c.b16 %v2369, %v2368
    %2371 = vrot.lane.b32.xlu0 %v2370, 96
    %v2372 = vpop.permute.xlu0 %2371
    %v2374 = vsel %vm148, %v2370, 0
    %v2377 = vsel %vm148, %v2372, 0
    %2379 = vmatpush.bf16.xpose.msra.mxu0 0
    %2380 = vmatpush.bf16.xpose.msra.mxu0 0
    %2381 = vmatpush.bf16.xpose.msra.mxu0 0
    %2382 = vmatpush.bf16.xpose.msra.mxu0 0
    %2383 = vmatpush.bf16.xpose.msra.mxu0 0
    %2384 = vmatpush.bf16.xpose.msra.mxu0 0
    %2385 = vmatpush.bf16.xpose.msra.mxu0 0
    %2386 = vmatpush.bf16.xpose.msra.mxu0 %v2377
    %2387 = vmatmul.bf16.gmra.mxu0 %v2374
    %v2388 = vpop.f32.mrf.mxu0
    %v2389 = vadd.f32 0.0, %v2388
    %v2390 = vpop.f32.mrf.mxu0
    %v2391 = vadd.f32 0.0, %v2390
    %2392 = vdwg.mxu0
    %2393 = vrot.lane.b32.xlu0 %v2370, 120
    %v2394 = vpop.permute.xlu0 %2393
    %2395 = vrot.lane.b32.xlu0 %v2370, 88
    %v2396 = vpop.permute.xlu0 %2395
    %v2398 = vsel %vm148, %v2394, 0
    %v2401 = vsel %vm148, %v2396, 0
    %2403 = vmatpush.bf16.xpose.msra.mxu0 0
    %2404 = vmatpush.bf16.xpose.msra.mxu0 0
    %2405 = vmatpush.bf16.xpose.msra.mxu0 0
    %2406 = vmatpush.bf16.xpose.msra.mxu0 0
    %2407 = vmatpush.bf16.xpose.msra.mxu0 0
    %2408 = vmatpush.bf16.xpose.msra.mxu0 0
    %2409 = vmatpush.bf16.xpose.msra.mxu0 0
    %2410 = vmatpush.bf16.xpose.msra.mxu0 %v2401
    %2411 = vmatmul.bf16.gmra.mxu0 %v2398
    %v2412 = vpop.f32.mrf.mxu0
    %v2413 = vadd.f32 0.0, %v2412
    %v2414 = vpop.f32.mrf.mxu0
    %v2415 = vadd.f32 0.0, %v2414
    %2416 = vdwg.mxu0
    %2417 = vrot.lane.b32.xlu0 %v2370, 112
    %v2418 = vpop.permute.xlu0 %2417
    %2419 = vrot.lane.b32.xlu0 %v2370, 80
    %v2420 = vpop.permute.xlu0 %2419
    %v2422 = vsel %vm148, %v2418, 0
    %v2425 = vsel %vm148, %v2420, 0
    %2427 = vmatpush.bf16.xpose.msra.mxu0 0
    %2428 = vmatpush.bf16.xpose.msra.mxu0 0
    %2429 = vmatpush.bf16.xpose.msra.mxu0 0
    %2430 = vmatpush.bf16.xpose.msra.mxu0 0
    %2431 = vmatpush.bf16.xpose.msra.mxu0 0
    %2432 = vmatpush.bf16.xpose.msra.mxu0 0
    %2433 = vmatpush.bf16.xpose.msra.mxu0 0
    %2434 = vmatpush.bf16.xpose.msra.mxu0 %v2425
    %2435 = vmatmul.bf16.gmra.mxu0 %v2422
    %v2436 = vpop.f32.mrf.mxu0
    %v2437 = vadd.f32 0.0, %v2436
    %v2438 = vpop.f32.mrf.mxu0
    %v2439 = vadd.f32 0.0, %v2438
    %2440 = vdwg.mxu0
    %2441 = vrot.lane.b32.xlu0 %v2370, 104
    %v2442 = vpop.permute.xlu0 %2441
    %2443 = vrot.lane.b32.xlu0 %v2370, 72
    %v2444 = vpop.permute.xlu0 %2443
    %v2446 = vsel %vm148, %v2442, 0
    %v2449 = vsel %vm148, %v2444, 0
    %2451 = vmatpush.bf16.xpose.msra.mxu0 0
    %2452 = vmatpush.bf16.xpose.msra.mxu0 0
    %2453 = vmatpush.bf16.xpose.msra.mxu0 0
    %2454 = vmatpush.bf16.xpose.msra.mxu0 0
    %2455 = vmatpush.bf16.xpose.msra.mxu0 0
    %2456 = vmatpush.bf16.xpose.msra.mxu0 0
    %2457 = vmatpush.bf16.xpose.msra.mxu0 0
    %2458 = vmatpush.bf16.xpose.msra.mxu0 %v2449
    %2459 = vmatmul.bf16.gmra.mxu0 %v2446
    %v2460 = vpop.f32.mrf.mxu0
    %v2461 = vadd.f32 0.0, %v2460
    %v2462 = vpop.f32.mrf.mxu0
    %v2463 = vadd.f32 0.0, %v2462
    %2464 = vdwg.mxu0
    %v2465 = vadd.f32 %v2389, %v38
    %v2466 = vadd.f32 %v2391, %v39
    %v2467 = vadd.f32 %v2413, %v40
    %v2468 = vadd.f32 %v2415, %v41
    %v2469 = vadd.f32 %v2437, %v42
    %v2470 = vadd.f32 %v2439, %v43
    %v2471 = vadd.f32 %v2461, %v44
    %v2472 = vadd.f32 %v2463, %v45
    %v2473 = vsel %vm249, %v2465, -inf
    %2474 = vmax.xlane.f32.xlu0 %v2473
    %v2475 = vpop.xlane.xlu0 %2474
    %v2476 = vsel %vm249, %v2466, -inf
    %2477 = vmax.xlane.f32.xlu0 %v2476
    %v2478 = vpop.xlane.xlu0 %2477
    %v2479 = vsel %vm249, %v2467, -inf
    %2480 = vmax.xlane.f32.xlu0 %v2479
    %v2481 = vpop.xlane.xlu0 %2480
    %v2482 = vsel %vm249, %v2468, -inf
    %2483 = vmax.xlane.f32.xlu0 %v2482
    %v2484 = vpop.xlane.xlu0 %2483
    %v2485 = vsel %vm249, %v2469, -inf
    %2486 = vmax.xlane.f32.xlu0 %v2485
    %v2487 = vpop.xlane.xlu0 %2486
    %v2488 = vsel %vm249, %v2470, -inf
    %2489 = vmax.xlane.f32.xlu0 %v2488
    %v2490 = vpop.xlane.xlu0 %2489
    %v2491 = vsel %vm249, %v2471, -inf
    %2492 = vmax.xlane.f32.xlu0 %v2491
    %v2493 = vpop.xlane.xlu0 %2492
    %v2494 = vsel %vm249, %v2472, -inf
    %2495 = vmax.xlane.f32.xlu0 %v2494
    %v2496 = vpop.xlane.xlu0 %2495
    %v2497 = vsub.f32 %v2465, %v2475
    %v2498 = vsub.f32 %v2466, %v2478
    %v2499 = vsub.f32 %v2467, %v2481
    %v2500 = vsub.f32 %v2468, %v2484
    %v2501 = vsub.f32 %v2469, %v2487
    %v2502 = vsub.f32 %v2470, %v2490
    %v2503 = vsub.f32 %v2471, %v2493
    %v2504 = vsub.f32 %v2472, %v2496
    %v2505 = vmul.f32 %v2497, 1.442695
    %v2506 = vpow.pop %v2505
    %v2507 = vmul.f32 %v2498, 1.442695
    %v2508 = vpow.pop %v2507
    %v2509 = vmul.f32 %v2499, 1.442695
    %v2510 = vpow.pop %v2509
    %v2511 = vmul.f32 %v2500, 1.442695
    %v2512 = vpow.pop %v2511
    %v2513 = vmul.f32 %v2501, 1.442695
    %v2514 = vpow.pop %v2513
    %v2515 = vmul.f32 %v2502, 1.442695
    %v2516 = vpow.pop %v2515
    %v2517 = vmul.f32 %v2503, 1.442695
    %v2518 = vpow.pop %v2517
    %v2519 = vmul.f32 %v2504, 1.442695
    %v2520 = vpow.pop %v2519
    %v2521 = vsel %vm249, %v2506, 0.0
    %2522 = vadd.xlane.f32.xlu0 %v2521
    %v2523 = vpop.xlane.xlu0 %2522
    %v2524 = vsel %vm249, %v2508, 0.0
    %2525 = vadd.xlane.f32.xlu0 %v2524
    %v2526 = vpop.xlane.xlu0 %2525
    %v2527 = vsel %vm249, %v2510, 0.0
    %2528 = vadd.xlane.f32.xlu0 %v2527
    %v2529 = vpop.xlane.xlu0 %2528
    %v2530 = vsel %vm249, %v2512, 0.0
    %2531 = vadd.xlane.f32.xlu0 %v2530
    %v2532 = vpop.xlane.xlu0 %2531
    %v2533 = vsel %vm249, %v2514, 0.0
    %2534 = vadd.xlane.f32.xlu0 %v2533
    %v2535 = vpop.xlane.xlu0 %2534
    %v2536 = vsel %vm249, %v2516, 0.0
    %2537 = vadd.xlane.f32.xlu0 %v2536
    %v2538 = vpop.xlane.xlu0 %2537
    %v2539 = vsel %vm249, %v2518, 0.0
    %2540 = vadd.xlane.f32.xlu0 %v2539
    %v2541 = vpop.xlane.xlu0 %2540
    %v2542 = vsel %vm249, %v2520, 0.0
    %2543 = vadd.xlane.f32.xlu0 %v2542
    %v2544 = vpop.xlane.xlu0 %2543
    %v2545 = vrcp.pop %v2523
    %v2546 = vrcp.pop %v2526
    %v2547 = vrcp.pop %v2529
    %v2548 = vrcp.pop %v2532
    %v2549 = vrcp.pop %v2535
    %v2550 = vrcp.pop %v2538
    %v2551 = vrcp.pop %v2541
    %v2552 = vrcp.pop %v2544
    %v2553 = vmul.f32 %v2506, %v2545
    %v2554 = vmul.f32 %v2508, %v2546
    %v2555 = vmul.f32 %v2510, %v2547
    %v2556 = vmul.f32 %v2512, %v2548
    %v2557 = vmul.f32 %v2514, %v2549
    %v2558 = vmul.f32 %v2516, %v2550
    %v2559 = vmul.f32 %v2518, %v2551
    %v2560 = vmul.f32 %v2520, %v2552
    %v2561 = vpack.c.bf16 %v2553, %v2553
    %v2562 = vpack.c.bf16 %v2554, %v2554
    %v2563 = vpack.c.bf16 %v2555, %v2555
    %v2564 = vpack.c.bf16 %v2556, %v2556
    %v2565 = vpack.c.bf16 %v2557, %v2557
    %v2566 = vpack.c.bf16 %v2558, %v2558
    %v2567 = vpack.c.bf16 %v2559, %v2559
    %v2568 = vpack.c.bf16 %v2560, %v2560
    %v2571 = vunpack.c.l.b16 %v2561
    %v2572 = vunpack.c.l.b16 %v2562
    %v2573 = vpack.c.b16 %v2572, %v2571
    %2574 = vrot.lane.b32.xlu0 %v2370, 64
    %v2575 = vpop.permute.xlu0 %2574
    %v2578 = vsel %vm249, %v2573, 0
    %2580 = vmatpush.bf16.msra.mxu0 0
    %2581 = vmatpush.bf16.msra.mxu0 0
    %2582 = vmatpush.bf16.msra.mxu0 0
    %2583 = vmatpush.bf16.msra.mxu0 0
    %2584 = vmatpush.bf16.msra.mxu0 0
    %2585 = vmatpush.bf16.msra.mxu0 0
    %2586 = vmatpush.bf16.msra.mxu0 0
    %2587 = vmatpush.bf16.msra.mxu0 %v2575
    %2588 = vmatmul.bf16.gmra.mxu0 %v2578
    %v2589 = vpop.f32.mrf.mxu0
    %v2590 = vadd.f32 0.0, %v2589
    %v2591 = vpop.f32.mrf.mxu0
    %v2592 = vadd.f32 0.0, %v2591
    %2593 = vdwg.mxu0
    %v2596 = vunpack.c.l.b16 %v2563
    %v2597 = vunpack.c.l.b16 %v2564
    %v2598 = vpack.c.b16 %v2597, %v2596
    %2599 = vrot.lane.b32.xlu0 %v2370, 56
    %v2600 = vpop.permute.xlu0 %2599
    %v2603 = vsel %vm249, %v2598, 0
    %2605 = vmatpush.bf16.msra.mxu0 0
    %2606 = vmatpush.bf16.msra.mxu0 0
    %2607 = vmatpush.bf16.msra.mxu0 0
    %2608 = vmatpush.bf16.msra.mxu0 0
    %2609 = vmatpush.bf16.msra.mxu0 0
    %2610 = vmatpush.bf16.msra.mxu0 0
    %2611 = vmatpush.bf16.msra.mxu0 0
    %2612 = vmatpush.bf16.msra.mxu0 %v2600
    %2613 = vmatmul.bf16.gmra.mxu0 %v2603
    %v2614 = vpop.f32.mrf.mxu0
    %v2615 = vadd.f32 0.0, %v2614
    %v2616 = vpop.f32.mrf.mxu0
    %v2617 = vadd.f32 0.0, %v2616
    %2618 = vdwg.mxu0
    %v2621 = vunpack.c.l.b16 %v2565
    %v2622 = vunpack.c.l.b16 %v2566
    %v2623 = vpack.c.b16 %v2622, %v2621
    %2624 = vrot.lane.b32.xlu0 %v2370, 48
    %v2625 = vpop.permute.xlu0 %2624
    %v2628 = vsel %vm249, %v2623, 0
    %2630 = vmatpush.bf16.msra.mxu0 0
    %2631 = vmatpush.bf16.msra.mxu0 0
    %2632 = vmatpush.bf16.msra.mxu0 0
    %2633 = vmatpush.bf16.msra.mxu0 0
    %2634 = vmatpush.bf16.msra.mxu0 0
    %2635 = vmatpush.bf16.msra.mxu0 0
    %2636 = vmatpush.bf16.msra.mxu0 0
    %2637 = vmatpush.bf16.msra.mxu0 %v2625
    %2638 = vmatmul.bf16.gmra.mxu0 %v2628
    %v2639 = vpop.f32.mrf.mxu0
    %v2640 = vadd.f32 0.0, %v2639
    %v2641 = vpop.f32.mrf.mxu0
    %v2642 = vadd.f32 0.0, %v2641
    %2643 = vdwg.mxu0
    %v2646 = vunpack.c.l.b16 %v2567
    %v2647 = vunpack.c.l.b16 %v2568
    %v2648 = vpack.c.b16 %v2647, %v2646
    %2649 = vrot.lane.b32.xlu0 %v2370, 40
    %v2650 = vpop.permute.xlu0 %2649
    %v2653 = vsel %vm249, %v2648, 0
    %2655 = vmatpush.bf16.msra.mxu0 0
    %2656 = vmatpush.bf16.msra.mxu0 0
    %2657 = vmatpush.bf16.msra.mxu0 0
    %2658 = vmatpush.bf16.msra.mxu0 0
    %2659 = vmatpush.bf16.msra.mxu0 0
    %2660 = vmatpush.bf16.msra.mxu0 0
    %2661 = vmatpush.bf16.msra.mxu0 0
    %2662 = vmatpush.bf16.msra.mxu0 %v2650
    %2663 = vmatmul.bf16.gmra.mxu0 %v2653
    %v2664 = vpop.f32.mrf.mxu0
    %v2665 = vadd.f32 0.0, %v2664
    %v2666 = vpop.f32.mrf.mxu0
    %v2667 = vadd.f32 0.0, %v2666
    %2668 = vdwg.mxu0
    %2671 = vrot.lane.b32.xlu0 %v2615, 8
    %v2672 = vpop.permute.xlu0 %2671
    %2673 = vrot.lane.b32.xlu0 %v2617, 8
    %v2674 = vpop.permute.xlu0 %2673
    %2679 = vrot.lane.b32.xlu0 %v2640, 16
    %v2680 = vpop.permute.xlu0 %2679
    %2681 = vrot.lane.b32.xlu0 %v2642, 16
    %v2682 = vpop.permute.xlu0 %2681
    %2687 = vrot.lane.b32.xlu0 %v2665, 24
    %v2688 = vpop.permute.xlu0 %2687
    %2689 = vrot.lane.b32.xlu0 %v2667, 24
    %v2690 = vpop.permute.xlu0 %2689
    %v2693 = vsel %vm148, %v2590, %v2672
    %v2694 = vsel %vm148, %v2592, %v2674
    %v2695 = vsel %vm249, %v2693, %v2680
    %v2696 = vsel %vm249, %v2694, %v2682
    %v2697 = vsel %vm474, %v2695, %v2688
    %v2698 = vsel %vm474, %v2696, %v2690
    %v2699 = vpack.c.bf16 %v2698, %v2697
    %v2704 = vunpack.c.l.b16 %v2360
    %v2705 = vunpack.c.l.b16 %v2361
    %v2706 = vunpack.c.l.b16 %v2362
    %v2707 = vunpack.c.l.b16 %v2363
    %v2708 = vpack.c.b16 %v2705, %v2704
    %v2709 = vpack.c.b16 %v2707, %v2706
    %v2713 = vsel %vm58, %v2699, 0
    %2715 = vmatpush.bf16.msra.mxu0 0
    %2716 = vmatpush.bf16.msra.mxu0 0
    %2717 = vmatpush.bf16.msra.mxu0 0
    %2718 = vmatpush.bf16.msra.mxu0 0
    %2719 = vmatpush.bf16.msra.mxu0 0
    %2720 = vmatpush.bf16.msra.mxu0 0
    %2721 = vmatpush.bf16.msra.mxu0 %v2709
    %2722 = vmatpush.bf16.msra.mxu0 %v2708
    %2723 = vmatmul.bf16.gmra.mxu0 %v2713
    %v2724 = vpop.f32.mrf.mxu0
    %v2725 = vadd.f32 0.0, %v2724
    %v2726 = vpop.f32.mrf.mxu0
    %v2727 = vadd.f32 0.0, %v2726
    %2728 = vdwg.mxu0
    %v2729 = vadd.f32 %v2287, %v2725
    %v2730 = vadd.f32 %v2288, %v2727
    %v2731 = vmul.f32 %v2729, %v2729
    %v2732 = vmul.f32 %v2730, %v2730
    %v2733 = vsel %vm58, %v2731, 0.0
    %2734 = vadd.xlane.f32.xlu0 %v2733
    %v2735 = vpop.xlane.xlu0 %2734
    %v2736 = vsel %vm58, %v2732, 0.0
    %2737 = vadd.xlane.f32.xlu0 %v2736
    %v2738 = vpop.xlane.xlu0 %2737
    %v2739 = vmul.f32 %v2735, %v71
    %v2740 = vmul.f32 %v2738, %v71
    %v2741 = vadd.f32 %v2739, 1e-06
    %v2742 = vadd.f32 %v2740, 1e-06
    %v2743 = vrsqrt.pop %v2741
    %v2744 = vmul.f32 %v2743, %v2741
    %v2745 = vmul.f32 %v2744, %v2743
    %v2746 = vmul.f32 0.5, %v2745
    %v2747 = vsub.f32 1.5, %v2746
    %v2748 = vmul.f32 %v2743, %v2747
    %vm2749 = vweird.f32 %v2741
    %vm2750 = vweird.f32 %v2743
    %vm2751 = vmor %vm2749, %vm2750
    %v2752 = vsel %vm2751, %v2743, %v2748
    %v2753 = vrsqrt.pop %v2742
    %v2754 = vmul.f32 %v2753, %v2742
    %v2755 = vmul.f32 %v2754, %v2753
    %v2756 = vmul.f32 0.5, %v2755
    %v2757 = vsub.f32 1.5, %v2756
    %v2758 = vmul.f32 %v2753, %v2757
    %vm2759 = vweird.f32 %v2742
    %vm2760 = vweird.f32 %v2753
    %vm2761 = vmor %vm2759, %vm2760
    %v2762 = vsel %vm2761, %v2753, %v2758
    %v2763 = vmul.f32 %v2729, %v2752
    %v2764 = vmul.f32 %v2730, %v2762
    %v2765 = vperm.slane %v29, 0
    %v2766 = vmul.f32 %v2763, %v2765
    %v2767 = vmul.f32 %v2764, %v2765
    %v2768 = vpack.c.bf16 %v2767, %v2766
    %v2769 = vld [vmem:[%s0 + $0x130] sm:$0xf]
    %v2770 = vld [vmem:[%s0 + $0x134] sm:$0xf]
    %v2771 = vld [vmem:[%s0 + $0x138] sm:$0xf]
    %v2772 = vld [vmem:[%s0 + $0x13c] sm:$0xf]
    %v2777 = vunpack.c.l.b16 %v2769
    %v2778 = vunpack.c.l.b16 %v2770
    %v2779 = vunpack.c.l.b16 %v2771
    %v2780 = vunpack.c.l.b16 %v2772
    %v2781 = vpack.c.b16 %v2778, %v2777
    %v2782 = vpack.c.b16 %v2780, %v2779
    %v2786 = vsel %vm58, %v2768, 0
    %2788 = vmatpush.bf16.msra.mxu0 0
    %2789 = vmatpush.bf16.msra.mxu0 0
    %2790 = vmatpush.bf16.msra.mxu0 0
    %2791 = vmatpush.bf16.msra.mxu0 0
    %2792 = vmatpush.bf16.msra.mxu0 0
    %2793 = vmatpush.bf16.msra.mxu0 0
    %2794 = vmatpush.bf16.msra.mxu0 %v2782
    %2795 = vmatpush.bf16.msra.mxu0 %v2781
    %2796 = vmatmul.bf16.gmra.mxu0 %v2786
    %v2797 = vpop.f32.mrf.mxu0
    %v2798 = vadd.f32 0.0, %v2797
    %v2799 = vpop.f32.mrf.mxu0
    %v2800 = vadd.f32 0.0, %v2799
    %2801 = vdwg.mxu0
    %v2802 = vld [vmem:[%s0 + $0x140] sm:$0xf]
    %v2803 = vld [vmem:[%s0 + $0x144] sm:$0xf]
    %v2804 = vld [vmem:[%s0 + $0x148] sm:$0xf]
    %v2805 = vld [vmem:[%s0 + $0x14c] sm:$0xf]
    %v2806 = vpack.c.bf16 %v2798, %v2798
    %v2807 = vpack.c.bf16 %v2800, %v2800
    %v2810 = vunpack.c.l.b16 %v2806
    %v2811 = vunpack.c.l.b16 %v2807
    %v2812 = vpack.c.b16 %v2811, %v2810
    %2813 = vrot.lane.b32.xlu0 %v1805, 64
    %v2814 = vpop.permute.xlu0 %2813
    %v2816 = vsel %vm148, %v2812, 0
    %v2819 = vsel %vm148, %v2814, 0
    %2821 = vmatpush.bf16.xpose.msra.mxu0 0
    %2822 = vmatpush.bf16.xpose.msra.mxu0 0
    %2823 = vmatpush.bf16.xpose.msra.mxu0 0
    %2824 = vmatpush.bf16.xpose.msra.mxu0 0
    %2825 = vmatpush.bf16.xpose.msra.mxu0 0
    %2826 = vmatpush.bf16.xpose.msra.mxu0 0
    %2827 = vmatpush.bf16.xpose.msra.mxu0 0
    %2828 = vmatpush.bf16.xpose.msra.mxu0 %v2819
    %2829 = vmatmul.bf16.gmra.mxu0 %v2816
    %v2830 = vpop.f32.mrf.mxu0
    %v2831 = vadd.f32 0.0, %v2830
    %v2832 = vpop.f32.mrf.mxu0
    %v2833 = vadd.f32 0.0, %v2832
    %2834 = vdwg.mxu0
    %2835 = vrot.lane.b32.xlu0 %v2812, 120
    %v2836 = vpop.permute.xlu0 %2835
    %2837 = vrot.lane.b32.xlu0 %v1805, 56
    %v2838 = vpop.permute.xlu0 %2837
    %v2840 = vsel %vm148, %v2836, 0
    %v2843 = vsel %vm148, %v2838, 0
    %2845 = vmatpush.bf16.xpose.msra.mxu0 0
    %2846 = vmatpush.bf16.xpose.msra.mxu0 0
    %2847 = vmatpush.bf16.xpose.msra.mxu0 0
    %2848 = vmatpush.bf16.xpose.msra.mxu0 0
    %2849 = vmatpush.bf16.xpose.msra.mxu0 0
    %2850 = vmatpush.bf16.xpose.msra.mxu0 0
    %2851 = vmatpush.bf16.xpose.msra.mxu0 0
    %2852 = vmatpush.bf16.xpose.msra.mxu0 %v2843
    %2853 = vmatmul.bf16.gmra.mxu0 %v2840
    %v2854 = vpop.f32.mrf.mxu0
    %v2855 = vadd.f32 0.0, %v2854
    %v2856 = vpop.f32.mrf.mxu0
    %v2857 = vadd.f32 0.0, %v2856
    %2858 = vdwg.mxu0
    %2859 = vrot.lane.b32.xlu0 %v2812, 112
    %v2860 = vpop.permute.xlu0 %2859
    %2861 = vrot.lane.b32.xlu0 %v1805, 48
    %v2862 = vpop.permute.xlu0 %2861
    %v2864 = vsel %vm148, %v2860, 0
    %v2867 = vsel %vm148, %v2862, 0
    %2869 = vmatpush.bf16.xpose.msra.mxu0 0
    %2870 = vmatpush.bf16.xpose.msra.mxu0 0
    %2871 = vmatpush.bf16.xpose.msra.mxu0 0
    %2872 = vmatpush.bf16.xpose.msra.mxu0 0
    %2873 = vmatpush.bf16.xpose.msra.mxu0 0
    %2874 = vmatpush.bf16.xpose.msra.mxu0 0
    %2875 = vmatpush.bf16.xpose.msra.mxu0 0
    %2876 = vmatpush.bf16.xpose.msra.mxu0 %v2867
    %2877 = vmatmul.bf16.gmra.mxu0 %v2864
    %v2878 = vpop.f32.mrf.mxu0
    %v2879 = vadd.f32 0.0, %v2878
    %v2880 = vpop.f32.mrf.mxu0
    %v2881 = vadd.f32 0.0, %v2880
    %2882 = vdwg.mxu0
    %2883 = vrot.lane.b32.xlu0 %v2812, 104
    %v2884 = vpop.permute.xlu0 %2883
    %2885 = vrot.lane.b32.xlu0 %v1805, 40
    %v2886 = vpop.permute.xlu0 %2885
    %v2888 = vsel %vm148, %v2884, 0
    %v2891 = vsel %vm148, %v2886, 0
    %2893 = vmatpush.bf16.xpose.msra.mxu0 0
    %2894 = vmatpush.bf16.xpose.msra.mxu0 0
    %2895 = vmatpush.bf16.xpose.msra.mxu0 0
    %2896 = vmatpush.bf16.xpose.msra.mxu0 0
    %2897 = vmatpush.bf16.xpose.msra.mxu0 0
    %2898 = vmatpush.bf16.xpose.msra.mxu0 0
    %2899 = vmatpush.bf16.xpose.msra.mxu0 0
    %2900 = vmatpush.bf16.xpose.msra.mxu0 %v2891
    %2901 = vmatmul.bf16.gmra.mxu0 %v2888
    %v2902 = vpop.f32.mrf.mxu0
    %v2903 = vadd.f32 0.0, %v2902
    %v2904 = vpop.f32.mrf.mxu0
    %v2905 = vadd.f32 0.0, %v2904
    %2906 = vdwg.mxu0
    %v2907 = vadd.f32 %v2831, %v46
    %v2908 = vadd.f32 %v2833, %v47
    %v2909 = vadd.f32 %v2855, %v48
    %v2910 = vadd.f32 %v2857, %v49
    %v2911 = vadd.f32 %v2879, %v50
    %v2912 = vadd.f32 %v2881, %v51
    %v2913 = vadd.f32 %v2903, %v52
    %v2914 = vadd.f32 %v2905, %v53
    %v2915 = vsel %vm249, %v2907, -inf
    %2916 = vmax.xlane.f32.xlu0 %v2915
    %v2917 = vpop.xlane.xlu0 %2916
    %v2918 = vsel %vm249, %v2908, -inf
    %2919 = vmax.xlane.f32.xlu0 %v2918
    %v2920 = vpop.xlane.xlu0 %2919
    %v2921 = vsel %vm249, %v2909, -inf
    %2922 = vmax.xlane.f32.xlu0 %v2921
    %v2923 = vpop.xlane.xlu0 %2922
    %v2924 = vsel %vm249, %v2910, -inf
    %2925 = vmax.xlane.f32.xlu0 %v2924
    %v2926 = vpop.xlane.xlu0 %2925
    %v2927 = vsel %vm249, %v2911, -inf
    %2928 = vmax.xlane.f32.xlu0 %v2927
    %v2929 = vpop.xlane.xlu0 %2928
    %v2930 = vsel %vm249, %v2912, -inf
    %2931 = vmax.xlane.f32.xlu0 %v2930
    %v2932 = vpop.xlane.xlu0 %2931
    %v2933 = vsel %vm249, %v2913, -inf
    %2934 = vmax.xlane.f32.xlu0 %v2933
    %v2935 = vpop.xlane.xlu0 %2934
    %v2936 = vsel %vm249, %v2914, -inf
    %2937 = vmax.xlane.f32.xlu0 %v2936
    %v2938 = vpop.xlane.xlu0 %2937
    %v2939 = vsub.f32 %v2907, %v2917
    %v2940 = vsub.f32 %v2908, %v2920
    %v2941 = vsub.f32 %v2909, %v2923
    %v2942 = vsub.f32 %v2910, %v2926
    %v2943 = vsub.f32 %v2911, %v2929
    %v2944 = vsub.f32 %v2912, %v2932
    %v2945 = vsub.f32 %v2913, %v2935
    %v2946 = vsub.f32 %v2914, %v2938
    %v2947 = vmul.f32 %v2939, 1.442695
    %v2948 = vpow.pop %v2947
    %v2949 = vmul.f32 %v2940, 1.442695
    %v2950 = vpow.pop %v2949
    %v2951 = vmul.f32 %v2941, 1.442695
    %v2952 = vpow.pop %v2951
    %v2953 = vmul.f32 %v2942, 1.442695
    %v2954 = vpow.pop %v2953
    %v2955 = vmul.f32 %v2943, 1.442695
    %v2956 = vpow.pop %v2955
    %v2957 = vmul.f32 %v2944, 1.442695
    %v2958 = vpow.pop %v2957
    %v2959 = vmul.f32 %v2945, 1.442695
    %v2960 = vpow.pop %v2959
    %v2961 = vmul.f32 %v2946, 1.442695
    %v2962 = vpow.pop %v2961
    %v2963 = vsel %vm249, %v2948, 0.0
    %2964 = vadd.xlane.f32.xlu0 %v2963
    %v2965 = vpop.xlane.xlu0 %2964
    %v2966 = vsel %vm249, %v2950, 0.0
    %2967 = vadd.xlane.f32.xlu0 %v2966
    %v2968 = vpop.xlane.xlu0 %2967
    %v2969 = vsel %vm249, %v2952, 0.0
    %2970 = vadd.xlane.f32.xlu0 %v2969
    %v2971 = vpop.xlane.xlu0 %2970
    %v2972 = vsel %vm249, %v2954, 0.0
    %2973 = vadd.xlane.f32.xlu0 %v2972
    %v2974 = vpop.xlane.xlu0 %2973
    %v2975 = vsel %vm249, %v2956, 0.0
    %2976 = vadd.xlane.f32.xlu0 %v2975
    %v2977 = vpop.xlane.xlu0 %2976
    %v2978 = vsel %vm249, %v2958, 0.0
    %2979 = vadd.xlane.f32.xlu0 %v2978
    %v2980 = vpop.xlane.xlu0 %2979
    %v2981 = vsel %vm249, %v2960, 0.0
    %2982 = vadd.xlane.f32.xlu0 %v2981
    %v2983 = vpop.xlane.xlu0 %2982
    %v2984 = vsel %vm249, %v2962, 0.0
    %2985 = vadd.xlane.f32.xlu0 %v2984
    %v2986 = vpop.xlane.xlu0 %2985
    %v2987 = vrcp.pop %v2965
    %v2988 = vrcp.pop %v2968
    %v2989 = vrcp.pop %v2971
    %v2990 = vrcp.pop %v2974
    %v2991 = vrcp.pop %v2977
    %v2992 = vrcp.pop %v2980
    %v2993 = vrcp.pop %v2983
    %v2994 = vrcp.pop %v2986
    %v2995 = vmul.f32 %v2948, %v2987
    %v2996 = vmul.f32 %v2950, %v2988
    %v2997 = vmul.f32 %v2952, %v2989
    %v2998 = vmul.f32 %v2954, %v2990
    %v2999 = vmul.f32 %v2956, %v2991
    %v3000 = vmul.f32 %v2958, %v2992
    %v3001 = vmul.f32 %v2960, %v2993
    %v3002 = vmul.f32 %v2962, %v2994
    %v3003 = vpack.c.bf16 %v2995, %v2995
    %v3004 = vpack.c.bf16 %v2996, %v2996
    %v3005 = vpack.c.bf16 %v2997, %v2997
    %v3006 = vpack.c.bf16 %v2998, %v2998
    %v3007 = vpack.c.bf16 %v2999, %v2999
    %v3008 = vpack.c.bf16 %v3000, %v3000
    %v3009 = vpack.c.bf16 %v3001, %v3001
    %v3010 = vpack.c.bf16 %v3002, %v3002
    %v3013 = vunpack.c.l.b16 %v3003
    %v3014 = vunpack.c.l.b16 %v3004
    %v3015 = vpack.c.b16 %v3014, %v3013
    %3016 = vrot.lane.b32.xlu0 %v1805, 32
    %v3017 = vpop.permute.xlu0 %3016
    %v3020 = vsel %vm249, %v3015, 0
    %3022 = vmatpush.bf16.msra.mxu0 0
    %3023 = vmatpush.bf16.msra.mxu0 0
    %3024 = vmatpush.bf16.msra.mxu0 0
    %3025 = vmatpush.bf16.msra.mxu0 0
    %3026 = vmatpush.bf16.msra.mxu0 0
    %3027 = vmatpush.bf16.msra.mxu0 0
    %3028 = vmatpush.bf16.msra.mxu0 0
    %3029 = vmatpush.bf16.msra.mxu0 %v3017
    %3030 = vmatmul.bf16.gmra.mxu0 %v3020
    %v3031 = vpop.f32.mrf.mxu0
    %v3032 = vadd.f32 0.0, %v3031
    %v3033 = vpop.f32.mrf.mxu0
    %v3034 = vadd.f32 0.0, %v3033
    %3035 = vdwg.mxu0
    %v3038 = vunpack.c.l.b16 %v3005
    %v3039 = vunpack.c.l.b16 %v3006
    %v3040 = vpack.c.b16 %v3039, %v3038
    %3041 = vrot.lane.b32.xlu0 %v1805, 24
    %v3042 = vpop.permute.xlu0 %3041
    %v3045 = vsel %vm249, %v3040, 0
    %3047 = vmatpush.bf16.msra.mxu0 0
    %3048 = vmatpush.bf16.msra.mxu0 0
    %3049 = vmatpush.bf16.msra.mxu0 0
    %3050 = vmatpush.bf16.msra.mxu0 0
    %3051 = vmatpush.bf16.msra.mxu0 0
    %3052 = vmatpush.bf16.msra.mxu0 0
    %3053 = vmatpush.bf16.msra.mxu0 0
    %3054 = vmatpush.bf16.msra.mxu0 %v3042
    %3055 = vmatmul.bf16.gmra.mxu0 %v3045
    %v3056 = vpop.f32.mrf.mxu0
    %v3057 = vadd.f32 0.0, %v3056
    %v3058 = vpop.f32.mrf.mxu0
    %v3059 = vadd.f32 0.0, %v3058
    %3060 = vdwg.mxu0
    %v3063 = vunpack.c.l.b16 %v3007
    %v3064 = vunpack.c.l.b16 %v3008
    %v3065 = vpack.c.b16 %v3064, %v3063
    %3066 = vrot.lane.b32.xlu0 %v1805, 16
    %v3067 = vpop.permute.xlu0 %3066
    %v3070 = vsel %vm249, %v3065, 0
    %3072 = vmatpush.bf16.msra.mxu0 0
    %3073 = vmatpush.bf16.msra.mxu0 0
    %3074 = vmatpush.bf16.msra.mxu0 0
    %3075 = vmatpush.bf16.msra.mxu0 0
    %3076 = vmatpush.bf16.msra.mxu0 0
    %3077 = vmatpush.bf16.msra.mxu0 0
    %3078 = vmatpush.bf16.msra.mxu0 0
    %3079 = vmatpush.bf16.msra.mxu0 %v3067
    %3080 = vmatmul.bf16.gmra.mxu0 %v3070
    %v3081 = vpop.f32.mrf.mxu0
    %v3082 = vadd.f32 0.0, %v3081
    %v3083 = vpop.f32.mrf.mxu0
    %v3084 = vadd.f32 0.0, %v3083
    %3085 = vdwg.mxu0
    %v3088 = vunpack.c.l.b16 %v3009
    %v3089 = vunpack.c.l.b16 %v3010
    %v3090 = vpack.c.b16 %v3089, %v3088
    %3091 = vrot.lane.b32.xlu0 %v1805, 8
    %v3092 = vpop.permute.xlu0 %3091
    %v3095 = vsel %vm249, %v3090, 0
    %3097 = vmatpush.bf16.msra.mxu0 0
    %3098 = vmatpush.bf16.msra.mxu0 0
    %3099 = vmatpush.bf16.msra.mxu0 0
    %3100 = vmatpush.bf16.msra.mxu0 0
    %3101 = vmatpush.bf16.msra.mxu0 0
    %3102 = vmatpush.bf16.msra.mxu0 0
    %3103 = vmatpush.bf16.msra.mxu0 0
    %3104 = vmatpush.bf16.msra.mxu0 %v3092
    %3105 = vmatmul.bf16.gmra.mxu0 %v3095
    %v3106 = vpop.f32.mrf.mxu0
    %v3107 = vadd.f32 0.0, %v3106
    %v3108 = vpop.f32.mrf.mxu0
    %v3109 = vadd.f32 0.0, %v3108
    %3110 = vdwg.mxu0
    %3113 = vrot.lane.b32.xlu0 %v3057, 8
    %v3114 = vpop.permute.xlu0 %3113
    %3115 = vrot.lane.b32.xlu0 %v3059, 8
    %v3116 = vpop.permute.xlu0 %3115
    %3121 = vrot.lane.b32.xlu0 %v3082, 16
    %v3122 = vpop.permute.xlu0 %3121
    %3123 = vrot.lane.b32.xlu0 %v3084, 16
    %v3124 = vpop.permute.xlu0 %3123
    %3129 = vrot.lane.b32.xlu0 %v3107, 24
    %v3130 = vpop.permute.xlu0 %3129
    %3131 = vrot.lane.b32.xlu0 %v3109, 24
    %v3132 = vpop.permute.xlu0 %3131
    %v3135 = vsel %vm148, %v3032, %v3114
    %v3136 = vsel %vm148, %v3034, %v3116
    %v3137 = vsel %vm249, %v3135, %v3122
    %v3138 = vsel %vm249, %v3136, %v3124
    %v3139 = vsel %vm474, %v3137, %v3130
    %v3140 = vsel %vm474, %v3138, %v3132
    %v3141 = vpack.c.bf16 %v3140, %v3139
    %v3146 = vunpack.c.l.b16 %v2802
    %v3147 = vunpack.c.l.b16 %v2803
    %v3148 = vunpack.c.l.b16 %v2804
    %v3149 = vunpack.c.l.b16 %v2805
    %v3150 = vpack.c.b16 %v3147, %v3146
    %v3151 = vpack.c.b16 %v3149, %v3148
    %v3155 = vsel %vm58, %v3141, 0
    %3157 = vmatpush.bf16.msra.mxu0 0
    %3158 = vmatpush.bf16.msra.mxu0 0
    %3159 = vmatpush.bf16.msra.mxu0 0
    %3160 = vmatpush.bf16.msra.mxu0 0
    %3161 = vmatpush.bf16.msra.mxu0 0
    %3162 = vmatpush.bf16.msra.mxu0 0
    %3163 = vmatpush.bf16.msra.mxu0 %v3151
    %3164 = vmatpush.bf16.msra.mxu0 %v3150
    %3165 = vmatmul.bf16.gmra.mxu0 %v3155
    %v3166 = vpop.f32.mrf.mxu0
    %v3167 = vadd.f32 0.0, %v3166
    %v3168 = vpop.f32.mrf.mxu0
    %v3169 = vadd.f32 0.0, %v3168
    %3170 = vdwg.mxu0
    %v3171 = vadd.f32 %v2729, %v3167
    %v3172 = vadd.f32 %v2730, %v3169
    %v3173 = vmul.f32 %v3171, %v3171
    %v3174 = vmul.f32 %v3172, %v3172
    %v3175 = vsel %vm58, %v3173, 0.0
    %3176 = vadd.xlane.f32.xlu0 %v3175
    %v3177 = vpop.xlane.xlu0 %3176
    %v3178 = vsel %vm58, %v3174, 0.0
    %3179 = vadd.xlane.f32.xlu0 %v3178
    %v3180 = vpop.xlane.xlu0 %3179
    %v3181 = vmul.f32 %v3177, %v71
    %v3182 = vmul.f32 %v3180, %v71
    %v3183 = vadd.f32 %v3181, 1e-06
    %v3184 = vadd.f32 %v3182, 1e-06
    %v3185 = vrsqrt.pop %v3183
    %v3186 = vmul.f32 %v3185, %v3183
    %v3187 = vmul.f32 %v3186, %v3185
    %v3188 = vmul.f32 0.5, %v3187
    %v3189 = vsub.f32 1.5, %v3188
    %v3190 = vmul.f32 %v3185, %v3189
    %vm3191 = vweird.f32 %v3183
    %vm3192 = vweird.f32 %v3185
    %vm3193 = vmor %vm3191, %vm3192
    %v3194 = vsel %vm3193, %v3185, %v3190
    %v3195 = vrsqrt.pop %v3184
    %v3196 = vmul.f32 %v3195, %v3184
    %v3197 = vmul.f32 %v3196, %v3195
    %v3198 = vmul.f32 0.5, %v3197
    %v3199 = vsub.f32 1.5, %v3198
    %v3200 = vmul.f32 %v3195, %v3199
    %vm3201 = vweird.f32 %v3184
    %vm3202 = vweird.f32 %v3195
    %vm3203 = vmor %vm3201, %vm3202
    %v3204 = vsel %vm3203, %v3195, %v3200
    %v3205 = vmul.f32 %v3171, %v3194
    %v3206 = vmul.f32 %v3172, %v3204
    %v3207 = vperm.slane %v29, 2
    %v3208 = vmul.f32 %v3205, %v3207
    %v3209 = vmul.f32 %v3206, %v3207
    %v3210 = vpack.c.bf16 %v3209, %v3208
    %v3211 = vld [vmem:[%s0 + $0x150] sm:$0xf]
    %v3212 = vld [vmem:[%s0 + $0x154] sm:$0xf]
    %v3213 = vld [vmem:[%s0 + $0x158] sm:$0xf]
    %v3214 = vld [vmem:[%s0 + $0x15c] sm:$0xf]
    %v3219 = vunpack.c.l.b16 %v3211
    %v3220 = vunpack.c.l.b16 %v3212
    %v3221 = vunpack.c.l.b16 %v3213
    %v3222 = vunpack.c.l.b16 %v3214
    %v3223 = vpack.c.b16 %v3220, %v3219
    %v3224 = vpack.c.b16 %v3222, %v3221
    %v3228 = vsel %vm58, %v3210, 0
    %3230 = vmatpush.bf16.msra.mxu0 0
    %3231 = vmatpush.bf16.msra.mxu0 0
    %3232 = vmatpush.bf16.msra.mxu0 0
    %3233 = vmatpush.bf16.msra.mxu0 0
    %3234 = vmatpush.bf16.msra.mxu0 0
    %3235 = vmatpush.bf16.msra.mxu0 0
    %3236 = vmatpush.bf16.msra.mxu0 %v3224
    %3237 = vmatpush.bf16.msra.mxu0 %v3223
    %3238 = vmatmul.bf16.gmra.mxu0 %v3228
    %v3239 = vpop.f32.mrf.mxu0
    %v3240 = vadd.f32 0.0, %v3239
    %v3241 = vpop.f32.mrf.mxu0
    %v3242 = vadd.f32 0.0, %v3241
    %3243 = vdwg.mxu0
    %v3244 = vmax.f32 %v3240, 0.0
    %v3245 = vmax.f32 %v3242, 0.0
    %v3246 = vpack.c.bf16 %v3245, %v3244
    %v3247 = vld [vmem:[%s0 + $0x160] sm:$0xf]
    %v3248 = vld [vmem:[%s0 + $0x164] sm:$0xf]
    %v3249 = vld [vmem:[%s0 + $0x168] sm:$0xf]
    %v3250 = vld [vmem:[%s0 + $0x16c] sm:$0xf]
    %v3251 = vld [vmem:[%s0 + $0x170] sm:$0xf]
    %v3252 = vld [vmem:[%s0 + $0x174] sm:$0xf]
    %v3253 = vld [vmem:[%s0 + $0x178] sm:$0xf]
    %v3254 = vld [vmem:[%s0 + $0x17c] sm:$0xf]
    %v3263 = vunpack.c.l.b16 %v3247
    %v3264 = vunpack.c.l.b16 %v3248
    %v3265 = vunpack.c.l.b16 %v3249
    %v3266 = vunpack.c.l.b16 %v3250
    %v3267 = vunpack.c.l.b16 %v3251
    %v3268 = vunpack.c.l.b16 %v3252
    %v3269 = vunpack.c.l.b16 %v3253
    %v3270 = vunpack.c.l.b16 %v3254
    %v3271 = vpack.c.b16 %v3264, %v3263
    %v3272 = vpack.c.b16 %v3266, %v3265
    %v3273 = vpack.c.b16 %v3268, %v3267
    %v3274 = vpack.c.b16 %v3270, %v3269
    %v3280 = vsel %vm615, %v3246, 0
    %3282 = vmatpush.bf16.msra.mxu0 0
    %3283 = vmatpush.bf16.msra.mxu0 0
    %3284 = vmatpush.bf16.msra.mxu0 0
    %3285 = vmatpush.bf16.msra.mxu0 0
    %3286 = vmatpush.bf16.msra.mxu0 %v3274
    %3287 = vmatpush.bf16.msra.mxu0 %v3273
    %3288 = vmatpush.bf16.msra.mxu0 %v3272
    %3289 = vmatpush.bf16.msra.mxu0 %v3271
    %3290 = vmatmul.bf16.gmra.mxu0 %v3280
    %v3291 = vpop.f32.mrf.mxu0
    %v3292 = vadd.f32 0.0, %v3291
    %v3293 = vpop.f32.mrf.mxu0
    %v3294 = vadd.f32 0.0, %v3293
    %3295 = vdwg.mxu0
    %v3296 = vadd.f32 %v3171, %v3292
    %v3297 = vadd.f32 %v3172, %v3294
    %v3298 = vmul.f32 %v3296, %v3296
    %v3299 = vmul.f32 %v3297, %v3297
    %v3300 = vsel %vm58, %v3298, 0.0
    %3301 = vadd.xlane.f32.xlu0 %v3300
    %v3302 = vpop.xlane.xlu0 %3301
    %v3303 = vsel %vm58, %v3299, 0.0
    %3304 = vadd.xlane.f32.xlu0 %v3303
    %v3305 = vpop.xlane.xlu0 %3304
    %v3306 = vmul.f32 %v3302, %v71
    %v3307 = vmul.f32 %v3305, %v71
    %v3308 = vadd.f32 %v3306, 1e-06
    %v3309 = vadd.f32 %v3307, 1e-06
    %v3310 = vrsqrt.pop %v3308
    %v3311 = vmul.f32 %v3310, %v3308
    %v3312 = vmul.f32 %v3311, %v3310
    %v3313 = vmul.f32 0.5, %v3312
    %v3314 = vsub.f32 1.5, %v3313
    %v3315 = vmul.f32 %v3310, %v3314
    %vm3316 = vweird.f32 %v3308
    %vm3317 = vweird.f32 %v3310
    %vm3318 = vmor %vm3316, %vm3317
    %v3319 = vsel %vm3318, %v3310, %v3315
    %v3320 = vrsqrt.pop %v3309
    %v3321 = vmul.f32 %v3320, %v3309
    %v3322 = vmul.f32 %v3321, %v3320
    %v3323 = vmul.f32 0.5, %v3322
    %v3324 = vsub.f32 1.5, %v3323
    %v3325 = vmul.f32 %v3320, %v3324
    %vm3326 = vweird.f32 %v3309
    %vm3327 = vweird.f32 %v3320
    %vm3328 = vmor %vm3326, %vm3327
    %v3329 = vsel %vm3328, %v3320, %v3325
    %v3330 = vmul.f32 %v3296, %v3319
    %v3331 = vmul.f32 %v3297, %v3329
    %v3332 = vperm.slane %v29, 3
    %v3333 = vmul.f32 %v3330, %v3332
    %v3334 = vmul.f32 %v3331, %v3332
    %v3335 = vmul.f32 %v3333, 0.17677669
    %v3336 = vmul.f32 %v3334, 0.17677669
    %v3337 = vpack.c.bf16 %v3336, %v3335
    %v3338 = vld [vmem:[%s0 + $0x190] sm:$0xf]
    %v3339 = vld [vmem:[%s0 + $0x194] sm:$0xf]
    %v3340 = vld [vmem:[%s0 + $0x198] sm:$0xf]
    %v3341 = vld [vmem:[%s0 + $0x19c] sm:$0xf]
    %v3346 = vunpack.c.l.b16 %v3338
    %v3347 = vunpack.c.l.b16 %v3339
    %v3348 = vunpack.c.l.b16 %v3340
    %v3349 = vunpack.c.l.b16 %v3341
    %v3350 = vpack.c.b16 %v3347, %v3346
    %v3351 = vpack.c.b16 %v3349, %v3348
    %v3355 = vsel %vm58, %v3337, 0
    %3357 = vmatpush.bf16.msra.mxu0 0
    %3358 = vmatpush.bf16.msra.mxu0 0
    %3359 = vmatpush.bf16.msra.mxu0 0
    %3360 = vmatpush.bf16.msra.mxu0 0
    %3361 = vmatpush.bf16.msra.mxu0 0
    %3362 = vmatpush.bf16.msra.mxu0 0
    %3363 = vmatpush.bf16.msra.mxu0 %v3351
    %3364 = vmatpush.bf16.msra.mxu0 %v3350
    %3365 = vmatmul.bf16.gmra.mxu0 %v3355
    %v3366 = vpop.f32.mrf.mxu0
    %v3367 = vadd.f32 0.0, %v3366
    %v3368 = vpop.f32.mrf.mxu0
    %v3369 = vadd.f32 0.0, %v3368
    %3370 = vdwg.mxu0
    %v3371 = vld [vmem:[%s6] sm:$0xff]
    %v3372 = vld [vmem:[%s6 + $0x8] sm:$0xff]
    %v3373 = vsel %vm615, %v3367, -inf
    %3374 = vmax.xlane.f32.xlu0 %v3373
    %v3375 = vpop.xlane.xlu0 %3374
    %v3376 = vsel %vm615, %v3369, -inf
    %3377 = vmax.xlane.f32.xlu0 %v3376
    %v3378 = vpop.xlane.xlu0 %3377
    %v3379 = vsub.f32 %v3367, %v3375
    %v3380 = vsub.f32 %v3369, %v3378
    %v3381 = vmul.f32 %v3379, 1.442695
    %v3382 = vpow.pop %v3381
    %v3383 = vmul.f32 %v3380, 1.442695
    %v3384 = vpow.pop %v3383
    %v3385 = vsel %vm615, %v3382, 0.0
    %3386 = vadd.xlane.f32.xlu0 %v3385
    %v3387 = vpop.xlane.xlu0 %3386
    %v3388 = vsel %vm615, %v3384, 0.0
    %3389 = vadd.xlane.f32.xlu0 %v3388
    %v3390 = vpop.xlane.xlu0 %3389
    %v3391 = vlog2.pop %v3387
    %v3392 = vmul.f32 %v3391, 0.6931472
    %v3393 = vlog2.pop %v3390
    %v3394 = vmul.f32 %v3393, 0.6931472
    %v3395 = vadd.f32 %v3392, %v3375
    %v3396 = vadd.f32 %v3394, %v3378
    %v3397 = vlaneseq
    %v3398 = vand.u32 %v3397, 127
    %3399 = vset.pattern.permute.xlu0 0
    %3400 = vperm.xlu0 %3399, %v3371
    %v3401 = vpop.permute.xlu0 %3400
    %3402 = vset.pattern.permute.xlu0 0
    %3403 = vperm.xlu0 %3402, %v3372
    %v3404 = vpop.permute.xlu0 %3403
    %vm3405 = vcmp.eq.s32.totalorder %v3398, %v3401
    %vm3406 = vcmp.eq.s32.totalorder %v3398, %v3404
    %v3407 = vsel %vm3405, 1, 0
    %v3408 = vsel %vm3406, 1, 0
    %v3409 = vcvt.s32.f32 %v3407
    %v3410 = vcvt.s32.f32 %v3408
    %v3411 = vmul.f32 %v3409, %v3367
    %v3412 = vmul.f32 %v3410, %v3369
    %v3413 = vsel %vm615, %v3411, 0.0
    %3414 = vadd.xlane.f32.xlu0 %v3413
    %v3415 = vpop.xlane.xlu0 %3414
    %v3416 = vsel %vm615, %v3412, 0.0
    %3417 = vadd.xlane.f32.xlu0 %v3416
    %v3418 = vpop.xlane.xlu0 %3417
    %vm3419 = vcmp.ne.s32.totalorder %v3371, 4294967196
    %vm3420 = vcmp.ne.s32.totalorder %v3372, 4294967196
    %v3421 = vsel %vm3419, 1, 0
    %v3422 = vsel %vm3420, 1, 0
    %v3423 = vcvt.s32.f32 %v3421
    %v3424 = vcvt.s32.f32 %v3422
    %v3425 = vsub.f32 %v3395, %v3415
    %v3426 = vsub.f32 %v3396, %v3418
    %v3427 = vmul.f32 %v3425, %v3423
    %v3428 = vmul.f32 %v3426, %v3424
    %vm3429 = vcmask 7168
    %v3430 = vsel %vm3429, %v3427, 0.0
    %v3431 = vsel %vm3429, %v3428, 0.0
    %v3432 = vadd.f32 %v3430, %v3431
    %v3433 = vrot.slane %v3432, 4
    %v3434 = vadd.f32 %v3432, %v3433
    %v3435 = vrot.slane %v3434, 2
    %v3436 = vadd.f32 %v3434, %v3435
    %v3437 = vrot.slane %v3436, 1
    %v3438 = vadd.f32 %v3436, %v3437
    %v3439 = vsel %vm3429, %v3423, 0.0
    %v3440 = vsel %vm3429, %v3424, 0.0
    %v3441 = vadd.f32 %v3439, %v3440
    %v3442 = vrot.slane %v3441, 4
    %v3443 = vadd.f32 %v3441, %v3442
    %v3444 = vrot.slane %v3443, 2
    %v3445 = vadd.f32 %v3443, %v3444
    %v3446 = vrot.slane %v3445, 1
    %v3447 = vadd.f32 %v3445, %v3446
    %v3448 = vmax.f32 %v3447, 1.0
    %v3449 = vrcp.pop %v3448
    %v3450 = vmul.f32 %v3448, %v3449
    %v3451 = vsub.f32 1.0, %v3450
    %v3452 = vmul.f32 %v3449, %v3451
    %v3453 = vadd.f32 %v3449, %v3452
    %vm3454 = vweird.f32 %v3448
    %vm3455 = vweird.f32 %v3449
    %vm3456 = vmor %vm3454, %vm3455
    %v3457 = vsel %vm3456, %v3449, %v3453
    %v3458 = vand.u32 2147483647, %v3448
    %vm3459 = vcmp.eq.f32.partialorder %v3458, 8.507059e+37
    %v3460 = vand.u32 %v3448, 2147483648
    %v3461 = vor.u32 1.1754944e-38, %v3460
    %v3462 = vsel %vm3459, %v3461, %v3457
    %v3463 = vmul.f32 %v3438, %v3462
    %vm3464 = vcmask 0
    %3465 = vst.msk [vmem:[#allocation2] sm:$0x1] %vm3464, %v3463
    // Predicated region
    $region30: #{t5_generation_loss.1} parent=1 // pred_check
      _
    $region31: #{t5_generation_loss.1} parent=1 // pred_check_branch
      %3467 = sbr.rel (0) target = $region33
    $region32: #{t5_generation_loss.1} parent=1 // pred_region
      %3469 = vsyncadd [#allocation3], 0
      %s3471 = sshll.u32 [#allocation2], 4
      %s3472 = int_to_ptr.vmem [resolvable:$true] %s3471
      %s3473 = sshll.u32 %s7, 4
      %s3474 = int_to_ptr.hbm [resolvable:$true] %s3473
      %3476 = dma.vmem_to_hbm [thread:$0]  %s3472, 16, %s3474, [#allocation3]
    $region33: #{t5_generation_loss.1} parent=1 // pred_fallthru
      _
    // Predicated region
    $region34: #{t5_generation_loss.1} parent=1 // pred_check
      _
    $region35: #{t5_generation_loss.1} parent=1 // pred_check_branch
      %3478 = sbr.rel (0) target = $region37
    $region36: #{t5_generation_loss.1} parent=1 // pred_region
      %3480 = dma.done [#allocation3], 16
    $region37: #{t5_generation_loss.1} parent=1 // pred_fallthru
      _
    %3481 = vsyncpa [#allocation3], 1

</llo_original>
